<compile_context>
chip_gen: v7x
topology: tpu7x:2x2x1
jax: 0.10.0
libtpu: 0.0.40
codegen_flags: <defaults>
</compile_context>

<pallas_src>
import math
import functools

import jax
import jax.numpy as jnp
from jax.experimental import pallas as pl
from jax.experimental.pallas import tpu as pltpu

F32 = jnp.float32
BF16 = jnp.bfloat16
BN_SCALE = 1.0 / math.sqrt(1.0 + 1e-5)   # eval-mode BatchNorm with default running stats


# ----------------------------------------------------------------------------------------
# small helpers
# ----------------------------------------------------------------------------------------
def _pair(v):
    return (v, v) if isinstance(v, int) else tuple(v)


def _triple(v):
    return (v, v, v) if isinstance(v, int) else tuple(v)


def _pad_pairs(p, n):
    if isinstance(p, int):
        return tuple((p, p) for _ in range(n))
    p = tuple(p)
    if len(p) == n and all(isinstance(q, (tuple, list)) for q in p):
        return tuple((int(q[0]), int(q[1])) for q in p)
    assert len(p) == n
    return tuple((int(q), int(q)) for q in p)


def _vmem_limit_bytes():
    cap = 64 * 1024 * 1024
    try:  # per-generation VMEM budget (v7x only has 64 MiB per TensorCore)
        info = pltpu.get_tpu_info()
        cap = int(getattr(info, "vmem_capacity_bytes", cap))
    except Exception:
        pass
    return min(int(cap * 0.65), 88 * 1024 * 1024)


VMEM_LIMIT = _vmem_limit_bytes()


def _cp(n_parallel):
    return pltpu.CompilerParams(
        dimension_semantics=("parallel",) * n_parallel,
        vmem_limit_bytes=VMEM_LIMIT)


def _apply_act(x, act):
    if act == "relu":
        return jnp.maximum(x, 0.0)
    if act == "leaky":                       # nn.LeakyReLU() default slope (BasicConv)
        return jnp.where(x >= 0.0, x, 0.01 * x)
    if act == "sigmoid":
        return jax.nn.sigmoid(x)
    return x


def _fold_bn_w(w, bn):
    # TODO(synk): with real pretrained weights the per-channel BN scale/shift must be folded here.
    return (w * BN_SCALE) if bn else w


def _bias_vec(b, out_ch, bn):
    bias = b if b is not None else jnp.zeros((out_ch,), F32)
    if bn:
        bias = bias * BN_SCALE
    return bias.reshape(1, out_ch).astype(F32)


def _pick_div(n, per_unit_bytes, fixed_bytes=0):
    """Largest divisor `t` of n with fixed + t*per_unit <= VMEM budget."""
    budget = max(VMEM_LIMIT - fixed_bytes, 2 * 1024 * 1024)
    best = 1
    for t in range(1, n + 1):
        if n % t == 0 and t * per_unit_bytes <= budget:
            best = t
    return best


def _row_tile_c(H):
    """Row tile for arrays where H is the second-to-last dim: multiple of 8 or full."""
    cands = [t for t in range(8, H + 1, 8) if H % t == 0 and t <= max(8, H // 2)]
    return max(cands) if cands else H


# ----------------------------------------------------------------------------------------
# fused direct convolution kernels (channels-last, stride 1; stride 2 via space-to-depth)
# ----------------------------------------------------------------------------------------
def _acc_taps_2d(x_ref, w_ref, tr, Wo, dil, row0):
    kh, kw = w_ref.shape[0], w_ref.shape[1]
    dh, dw = dil
    C = x_ref.shape[3]
    acc = None
    for i in range(kh):
        for j in range(kw):
            xs = x_ref[0, pl.ds(row0 + i * dh, tr), pl.ds(j * dw, Wo), :]
            xs = xs.reshape(tr * Wo, C)
            part = jnp.dot(xs, w_ref[i, j], preferred_element_type=jnp.float32)
            acc = part if acc is None else acc + part
    return acc


def _dc2_kernel(x_ref, w_ref, b_ref, o_ref, *, dil, act):
    tr, Wo, O = o_ref.shape[1], o_ref.shape[2], o_ref.shape[3]
    acc = _acc_taps_2d(x_ref, w_ref, tr, Wo, dil, pl.program_id(1) * tr)
    acc = _apply_act(acc + b_ref[...], act)
    o_ref[0] = acc.reshape(tr, Wo, O).astype(o_ref.dtype)


def _dc2_gate_kernel(x_ref, w_ref, b_ref, g_ref, o_ref, *, dil, act):
    tr, Wo, O = o_ref.shape[1], o_ref.shape[2], o_ref.shape[3]
    acc = _acc_taps_2d(x_ref, w_ref, tr, Wo, dil, pl.program_id(1) * tr)
    acc = _apply_act(acc + b_ref[...], act).reshape(tr, Wo, O)
    o_ref[0] = (acc * g_ref[0].astype(jnp.float32)).astype(o_ref.dtype)


def _dc2_call(xp, wk, bias, Ho, Wo, dil, act, gate, out_dtype):
    B, Hp, Wp, C = xp.shape
    kh, kw, _, O = wk.shape
    obytes = jnp.dtype(out_dtype).itemsize
    per_row = Wo * O * (2 * obytes + 4 + (4 if gate is not None else 0))
    fixed = 2 * Hp * Wp * C * 2 + 2 * kh * kw * C * O * 2
    tr = _pick_div(Ho, per_row, fixed)
    in_specs = [pl.BlockSpec((1, Hp, Wp, C), lambda b, r: (b, 0, 0, 0)),
                pl.BlockSpec((kh, kw, C, O), lambda b, r: (0, 0, 0, 0)),
                pl.BlockSpec((1, O), lambda b, r: (0, 0))]
    args = [xp, wk, bias]
    if gate is None:
        kern = functools.partial(_dc2_kernel, dil=dil, act=act)
    else:
        in_specs.append(pl.BlockSpec((1, tr, Wo, O), lambda b, r: (b, r, 0, 0)))
        args.append(gate)
        kern = functools.partial(_dc2_gate_kernel, dil=dil, act=act)
    return pl.pallas_call(
        kern, grid=(B, Ho // tr),
        in_specs=in_specs,
        out_specs=pl.BlockSpec((1, tr, Wo, O), lambda b, r: (b, r, 0, 0)),
        out_shape=jax.ShapeDtypeStruct((B, Ho, Wo, O), out_dtype),
        compiler_params=_cp(2))(*args)


def _acc_taps_3d(x_ref, w_ref, Ho, Wo, dil, d0):
    kd, kh, kw = w_ref.shape[0], w_ref.shape[1], w_ref.shape[2]
    dd, dh, dw = dil
    C = x_ref.shape[4]
    acc = None
    for a in range(kd):
        for i in range(kh):
            for j in range(kw):
                xs = x_ref[0, pl.ds(d0 + a * dd, 1), pl.ds(i * dh, Ho),
                           pl.ds(j * dw, Wo), :]
                xs = xs.reshape(Ho * Wo, C)
                part = jnp.dot(xs, w_ref[a, i, j], preferred_element_type=jnp.float32)
                acc = part if acc is None else acc + part
    return acc


def _dc3_kernel(x_ref, w_ref, b_ref, o_ref, *, dil, act):
    Ho, Wo, O = o_ref.shape[2], o_ref.shape[3], o_ref.shape[4]
    acc = _acc_taps_3d(x_ref, w_ref, Ho, Wo, dil, pl.program_id(1))
    acc = _apply_act(acc + b_ref[...], act)
    o_ref[0, 0] = acc.reshape(Ho, Wo, O).astype(o_ref.dtype)


def _dc3_gate_kernel(x_ref, w_ref, b_ref, g_ref, o_ref, *, dil, act):
    Ho, Wo, O = o_ref.shape[2], o_ref.shape[3], o_ref.shape[4]
    acc = _acc_taps_3d(x_ref, w_ref, Ho, Wo, dil, pl.program_id(1))
    acc = _apply_act(acc + b_ref[...], act).reshape(Ho, Wo, O)
    o_ref[0, 0] = (acc * g_ref[0, 0].astype(jnp.float32)).astype(o_ref.dtype)


def _dc3_inner(xp, wk, bias, Do, Ho, Wo, dil, act, gate, out_dtype):
    B, Dp, Hp, Wp, C = xp.shape
    kd, kh, kw, _, O = wk.shape
    in_specs = [pl.BlockSpec((1, Dp, Hp, Wp, C), lambda b, d: (b, 0, 0, 0, 0)),
                pl.BlockSpec((kd, kh, kw, C, O), lambda b, d: (0, 0, 0, 0, 0)),
                pl.BlockSpec((1, O), lambda b, d: (0, 0))]
    args = [xp, wk, bias]
    if gate is None:
        kern = functools.partial(_dc3_kernel, dil=dil, act=act)
    else:
        in_specs.append(pl.BlockSpec((1, 1, Ho, Wo, O), lambda b, d: (b, d, 0, 0, 0)))
        args.append(gate)
        kern = functools.partial(_dc3_gate_kernel, dil=dil, act=act)
    return pl.pallas_call(
        kern, grid=(B, Do),
        in_specs=in_specs,
        out_specs=pl.BlockSpec((1, 1, Ho, Wo, O), lambda b, d: (b, d, 0, 0, 0)),
        out_shape=jax.ShapeDtypeStruct((B, Do, Ho, Wo, O), out_dtype),
        compiler_params=_cp(2))(*args)


def _dc3_call(xp, wk, bias, Do, Ho, Wo, dil, act, gate, out_dtype):
    # Guard against the resident padded 3-D block not fitting VMEM (v7x: 64 MiB): chunk depth.
    B, Dp, Hp, Wp, C = xp.shape
    kd = wk.shape[0]
    halo = dil[0] * (kd - 1)
    in_bytes = 2 * Dp * Hp * Wp * C * 2
    budget = VMEM_LIMIT // 2
    if in_bytes <= budget or Do <= 1:
        return _dc3_inner(xp, wk, bias, Do, Ho, Wo, dil, act, gate, out_dtype)
    per_d = 2 * Hp * Wp * C * 2
    nc = max(1, budget // per_d - halo)
    outs, d0 = [], 0
    while d0 < Do:
        n = min(nc, Do - d0)
        xs = jax.lax.slice_in_dim(xp, d0, d0 + n + halo, axis=1)
        gs = None if gate is None else jax.lax.slice_in_dim(gate, d0, d0 + n, axis=1)
        outs.append(_dc3_inner(xs, wk, bias, n, Ho, Wo, dil, act, gs, out_dtype))
        d0 += n
    return jnp.concatenate(outs, axis=1)


# ----------------------------------------------------------------------------------------
# conv wrappers (channels-last); stride-2 via space-to-depth (no im2col patch matrix)
# ----------------------------------------------------------------------------------------
def conv2d_cl(x, w, b=None, stride=1, padding=0, dilation=1, bn=False, act="none",
              gate=None, out_dtype=BF16):
    O, Cin, kh, kw = w.shape
    sh, sw = _pair(stride)
    dh, dw = _pair(dilation)
    (ph0, ph1), (pw0, pw1) = _pad_pairs(padding, 2)
    B, H, W, C = x.shape
    assert C == Cin
    if (sh, sw) == (1, 1):
        Ho = H + ph0 + ph1 - dh * (kh - 1)
        Wo = W + pw0 + pw1 - dw * (kw - 1)
        # TODO(synk): very large 2-D inputs would need spatial halo tiling instead of a
        # full-spatial resident block.
        xp = jnp.pad(x.astype(BF16), ((0, 0), (ph0, ph1), (pw0, pw1), (0, 0)))
        wk = _fold_bn_w(w, bn).transpose(2, 3, 1, 0).astype(BF16)
        return _dc2_call(xp, wk, _bias_vec(b, O, bn), Ho, Wo, (dh, dw), act, gate, out_dtype)
    assert (sh, sw) == (2, 2) and (dh, dw) == (1, 1) and gate is None
    Ho = (H + ph0 + ph1 - kh) // 2 + 1
    Wo = (W + pw0 + pw1 - kw) // 2 + 1
    kh2, kw2 = (kh + 1) // 2, (kw + 1) // 2
    H2, W2 = Ho + kh2 - 1, Wo + kw2 - 1
    xp = jnp.pad(x.astype(BF16),
                 ((0, 0), (ph0, 2 * H2 - H - ph0), (pw0, 2 * W2 - W - pw0), (0, 0)))
    x2 = xp.reshape(B, H2, 2, W2, 2, C).transpose(0, 1, 3, 2, 4, 5).reshape(B, H2, W2, 4 * C)
    w_cl = _fold_bn_w(w, bn).transpose(2, 3, 1, 0)
    w2 = jnp.zeros((kh2, kw2, 4 * C, O), F32)
    for i in range(kh):
        for j in range(kw):
            phase = (i % 2) * 2 + (j % 2)
            w2 = w2.at[i // 2, j // 2, phase * C:(phase + 1) * C, :].set(w_cl[i, j])
    return _dc2_call(x2, w2.astype(BF16), _bias_vec(b, O, bn), Ho, Wo, (1, 1), act,
                     None, out_dtype)


def conv3d_cl(x, w, b=None, stride=1, padding=0, dilation=1, bn=False, act="none",
              gate=None, out_dtype=BF16):
    O, Cin, kd, kh, kw = w.shape
    st = _triple(stride)
    dl = _triple(dilation)
    (pd0, pd1), (ph0, ph1), (pw0, pw1) = _pad_pairs(padding, 3)
    B, Dd, H, W, C = x.shape
    assert C == Cin
    if st == (1, 1, 1):
        Do = Dd + pd0 + pd1 - dl[0] * (kd - 1)
        Ho = H + ph0 + ph1 - dl[1] * (kh - 1)
        Wo = W + pw0 + pw1 - dl[2] * (kw - 1)
        xp = jnp.pad(x.astype(BF16),
                     ((0, 0), (pd0, pd1), (ph0, ph1), (pw0, pw1), (0, 0)))
        wk = _fold_bn_w(w, bn).transpose(2, 3, 4, 1, 0).astype(BF16)
        return _dc3_call(xp, wk, _bias_vec(b, O, bn), Do, Ho, Wo, dl, act, gate, out_dtype)
    assert st == (2, 2, 2) and dl == (1, 1, 1) and gate is None
    Do = (Dd + pd0 + pd1 - kd) // 2 + 1
    Ho = (H + ph0 + ph1 - kh) // 2 + 1
    Wo = (W + pw0 + pw1 - kw) // 2 + 1
    kd2, kh2, kw2 = (kd + 1) // 2, (kh + 1) // 2, (kw + 1) // 2
    D2, H2, W2 = Do + kd2 - 1, Ho + kh2 - 1, Wo + kw2 - 1
    xp = jnp.pad(x.astype(BF16),
                 ((0, 0), (pd0, 2 * D2 - Dd - pd0), (ph0, 2 * H2 - H - ph0),
                  (pw0, 2 * W2 - W - pw0), (0, 0)))
    x2 = xp.reshape(B, D2, 2, H2, 2, W2, 2, C).transpose(0, 1, 3, 5, 2, 4, 6, 7)
    x2 = x2.reshape(B, D2, H2, W2, 8 * C)
    w_cl = _fold_bn_w(w, bn).transpose(2, 3, 4, 1, 0)
    w2 = jnp.zeros((kd2, kh2, kw2, 8 * C, O), F32)
    for a in range(kd):
        for i in range(kh):
            for j in range(kw):
                phase = (a % 2) * 4 + (i % 2) * 2 + (j % 2)
                w2 = w2.at[a // 2, i // 2, j // 2, phase * C:(phase + 1) * C, :].set(
                    w_cl[a, i, j])
    return _dc3_call(x2, w2.astype(BF16), _bias_vec(b, O, bn), Do, Ho, Wo, (1, 1, 1),
                     act, None, out_dtype)


# ----------------------------------------------------------------------------------------
# fused sub-pixel transposed convolutions (k4 s2 p1): all phases in ONE kernel
# ----------------------------------------------------------------------------------------
def _subpix2_kernel(x_ref, w_ref, b_ref, o_ref, *, act):
    tr2, Wo2, Co = o_ref.shape[1], o_ref.shape[2], o_ref.shape[3]
    tr, Wo = tr2 // 2, Wo2 // 2
    Ci = x_ref.shape[3]
    row0 = pl.program_id(1) * tr
    zs = []
    for rh in range(2):
        ys = []
        for rw in range(2):
            acc = None
            for a in range(2):
                for cc in range(2):
                    xs = x_ref[0, pl.ds(row0 + rh + a, tr), pl.ds(rw + cc, Wo), :]
                    xs = xs.reshape(tr * Wo, Ci)
                    part = jnp.dot(xs, w_ref[2 * a + rh, 2 * cc + rw],
                                   preferred_element_type=jnp.float32)
                    acc = part if acc is None else acc + part
            ys.append(_apply_act(acc + b_ref[...], act).reshape(tr, Wo, Co))
        zs.append(jnp.stack(ys, axis=2).reshape(tr, 2 * Wo, Co))
    out = jnp.stack(zs, axis=1).reshape(2 * tr, 2 * Wo, Co)
    o_ref[0] = out.astype(o_ref.dtype)


def deconv2d_cl(x, w, b=None, bn=False, act="none", out_dtype=BF16):
    Ci, Co, kh, kw = w.shape
    assert (kh, kw) == (4, 4)
    B, H, W, C = x.shape
    assert C == Ci
    wf = w[:, :, ::-1, ::-1].transpose(2, 3, 0, 1)            # [4,4,Ci,Co] flipped
    wk = _fold_bn_w(wf, bn).astype(BF16)
    xp = jnp.pad(x.astype(BF16), ((0, 0), (1, 1), (1, 1), (0, 0)))
    bias = _bias_vec(b, Co, bn)
    per_row = 2 * W * Co * (4 * jnp.dtype(out_dtype).itemsize + 16)
    fixed = 2 * (H + 2) * (W + 2) * Ci * 2 + 2 * 16 * Ci * Co * 2
    tr = _pick_div(H, per_row, fixed)
    return pl.pallas_call(
        functools.partial(_subpix2_kernel, act=act),
        grid=(B, H // tr),
        in_specs=[pl.BlockSpec((1, H + 2, W + 2, Ci), lambda b_, r: (b_, 0, 0, 0)),
                  pl.BlockSpec((4, 4, Ci, Co), lambda b_, r: (0, 0, 0, 0)),
                  pl.BlockSpec((1, Co), lambda b_, r: (0, 0))],
        out_specs=pl.BlockSpec((1, 2 * tr, 2 * W, Co), lambda b_, r: (b_, r, 0, 0)),
        out_shape=jax.ShapeDtypeStruct((B, 2 * H, 2 * W, Co), out_dtype),
        compiler_params=_cp(2))(xp, wk, bias)


def _subpix3_kernel(x_ref, w_ref, b_ref, o_ref, *, act):
    Ho2, Wo2, Co = o_ref.shape[2], o_ref.shape[3], o_ref.shape[4]
    Ho, Wo = Ho2 // 2, Wo2 // 2
    Ci = x_ref.shape[4]
    d0 = pl.program_id(1)
    ds_ = []
    for rd in range(2):
        zs = []
        for rh in range(2):
            ys = []
            for rw in range(2):
                acc = None
                for a in range(2):
                    for i in range(2):
                        for j in range(2):
                            xs = x_ref[0, pl.ds(d0 + rd + a, 1), pl.ds(rh + i, Ho),
                                       pl.ds(rw + j, Wo), :]
                            xs = xs.reshape(Ho * Wo, Ci)
                            part = jnp.dot(xs, w_ref[2 * a + rd, 2 * i + rh, 2 * j + rw],
                                           preferred_element_type=jnp.float32)
                            acc = part if acc is None else acc + part
                ys.append(_apply_act(acc + b_ref[...], act).reshape(Ho, Wo, Co))
            zs.append(jnp.stack(ys, axis=2).reshape(Ho, 2 * Wo, Co))
        ds_.append(jnp.stack(zs, axis=1).reshape(2 * Ho, 2 * Wo, Co))
    o_ref[0] = jnp.stack(ds_, axis=0).astype(o_ref.dtype)


def deconv3d_cl(x, w, b=None, bn=False, act="none", out_dtype=BF16):
    # TODO(synk): depth-chunk this resident block too for extremely large volumes on v7x.
    Ci, Co, kd, kh, kw = w.shape
    assert (kd, kh, kw) == (4, 4, 4)
    B, Dd, H, W, C = x.shape
    assert C == Ci
    wf = w[:, :, ::-1, ::-1, ::-1].transpose(2, 3, 4, 0, 1)   # [4,4,4,Ci,Co] flipped
    wk = _fold_bn_w(wf, bn).astype(BF16)
    xp = jnp.pad(x.astype(BF16), ((0, 0), (1, 1), (1, 1), (1, 1), (0, 0)))
    bias = _bias_vec(b, Co, bn)
    return pl.pallas_call(
        functools.partial(_subpix3_kernel, act=act),
        grid=(B, Dd),
        in_specs=[pl.BlockSpec((1, Dd + 2, H + 2, W + 2, Ci),
                               lambda b_, d: (b_, 0, 0, 0, 0)),
                  pl.BlockSpec((4, 4, 4, Ci, Co), lambda b_, d: (0, 0, 0, 0, 0)),
                  pl.BlockSpec((1, Co), lambda b_, d: (0, 0))],
        out_specs=pl.BlockSpec((1, 2, 2 * H, 2 * W, Co), lambda b_, d: (b_, d, 0, 0, 0)),
        out_shape=jax.ShapeDtypeStruct((B, 2 * Dd, 2 * H, 2 * W, Co), out_dtype),
        compiler_params=_cp(2))(xp, wk, bias)


# ----------------------------------------------------------------------------------------
# stereo-specific Pallas kernels
# ----------------------------------------------------------------------------------------
def _l2norm_kernel(x_ref, o_ref):
    x = x_ref[0].astype(jnp.float32)
    n = jnp.sqrt(jnp.sum(x * x, axis=-1, keepdims=True)) + 1e-5
    o_ref[0] = (x / n).astype(o_ref.dtype)


def l2_normalize_cl(x):
    B, H, W, C = x.shape
    tr = _pick_div(H, W * C * 12)
    return pl.pallas_call(
        _l2norm_kernel, grid=(B, H // tr),
        in_specs=[pl.BlockSpec((1, tr, W, C), lambda b, r: (b, r, 0, 0))],
        out_specs=pl.BlockSpec((1, tr, W, C), lambda b, r: (b, r, 0, 0)),
        out_shape=jax.ShapeDtypeStruct((B, H, W, C), BF16),
        compiler_params=_cp(2))(x)


def _corr_kernel(ln_ref, rnp_ref, o_ref, *, D):
    d = pl.program_id(1)
    W = o_ref.shape[3]
    ln = ln_ref[0].astype(jnp.float32)
    rs = rnp_ref[0, :, pl.ds(D - 1 - d, W), :].astype(jnp.float32)
    o_ref[0, 0] = jnp.sum(ln * rs, axis=-1).astype(o_ref.dtype)


def norm_correlation_volume(ml_cl, mr_cl, D):
    B, H, W, C = ml_cl.shape
    ln = l2_normalize_cl(ml_cl)
    rn = l2_normalize_cl(mr_cl)
    rnp = jnp.pad(rn, ((0, 0), (0, 0), (D - 1, 0), (0, 0)))
    return pl.pallas_call(
        functools.partial(_corr_kernel, D=D), grid=(B, D),
        in_specs=[pl.BlockSpec((1, H, W, C), lambda b, d: (b, 0, 0, 0)),
                  pl.BlockSpec((1, H, W + D - 1, C), lambda b, d: (b, 0, 0, 0))],
        out_specs=pl.BlockSpec((1, 1, H, W), lambda b, d: (b, d, 0, 0)),
        out_shape=jax.ShapeDtypeStruct((B, D, H, W), BF16),
        compiler_params=_cp(2))(ln, rnp)


def _slide_gate_kernel(corr_ref, lsem_ref, rsemp_ref, volr_ref, voll_ref, *, D):
    d = pl.program_id(1)
    W = volr_ref.shape[3]
    c = corr_ref[0, 0].astype(jnp.float32)
    rs = rsemp_ref[0, :, pl.ds(D - 1 - d, W), :].astype(jnp.float32)
    ls = lsem_ref[0].astype(jnp.float32)
    volr_ref[0, 0] = (c * rs).astype(volr_ref.dtype)
    voll_ref[0, 0] = (c * ls).astype(voll_ref.dtype)


def slide_and_gate(corr5, left_sem, right_sem, D):
    B, _, H, W, C = corr5.shape
    rsp = jnp.pad(right_sem, ((0, 0), (0, 0), (D - 1, 0), (0, 0)))
    return pl.pallas_call(
        functools.partial(_slide_gate_kernel, D=D), grid=(B, D),
        in_specs=[pl.BlockSpec((1, 1, H, W, C), lambda b, d: (b, d, 0, 0, 0)),
                  pl.BlockSpec((1, H, W, C), lambda b, d: (b, 0, 0, 0)),
                  pl.BlockSpec((1, H, W + D - 1, C), lambda b, d: (b, 0, 0, 0))],
        out_specs=[pl.BlockSpec((1, 1, H, W, C), lambda b, d: (b, d, 0, 0, 0)),
                   pl.BlockSpec((1, 1, H, W, C), lambda b, d: (b, d, 0, 0, 0))],
        out_shape=[jax.ShapeDtypeStruct((B, D, H, W, C), BF16),
                   jax.ShapeDtypeStruct((B, D, H, W, C), BF16)],
        compiler_params=_cp(2))(corr5, left_sem, rsp)


def _xatt_ln_kernel(k_ref, v_ref, lnw_ref, lnb_ref, o_ref, *, ksize, heads, pad):
    # two-pass softmax cross-attention over the ksize^2 neighborhood, heads packed in lanes,
    # per-head segmentation done with small MXU matmuls; LayerNorm fused in the epilogue.
    H, W, C = o_ref.shape[2], o_ref.shape[3], o_ref.shape[4]
    c = C // heads
    seg = (jax.lax.broadcasted_iota(jnp.int32, (C, heads), 0) // c ==
           jax.lax.broadcasted_iota(jnp.int32, (C, heads), 1)).astype(jnp.float32)
    segT = seg.T
    q = k_ref[0, 0, pad:pad + H, pad:pad + W, :].astype(jnp.float32).reshape(H * W, C)
    logits, mx = [], None
    for i in range(ksize):
        for j in range(ksize):
            kt = k_ref[0, 0, i:i + H, j:j + W, :].astype(jnp.float32).reshape(H * W, C)
            lg = jnp.dot(q * kt, seg, preferred_element_type=jnp.float32)
            logits.append(lg)
            mx = lg if mx is None else jnp.maximum(mx, lg)
    acc, lsum, t = None, None, 0
    for i in range(ksize):
        for j in range(ksize):
            p = jnp.exp(logits[t] - mx)
            t += 1
            lsum = p if lsum is None else lsum + p
            vt = v_ref[0, i:i + H, j:j + W, :].astype(jnp.float32).reshape(H * W, C)
            pc = jnp.dot(p, segT, preferred_element_type=jnp.float32)
            acc = pc * vt if acc is None else acc + pc * vt
    inv = jnp.dot(pl.reciprocal(lsum, approx=True), segT, preferred_element_type=jnp.float32)
    ex = acc * inv
    mu = jnp.mean(ex, axis=-1, keepdims=True)
    var = jnp.mean((ex - mu) ** 2, axis=-1, keepdims=True)
    y = (ex - mu) * jax.lax.rsqrt(var + 1e-5)
    y = y * lnw_ref[...].astype(jnp.float32) + lnb_ref[...].astype(jnp.float32)
    o_ref[0, 0] = y.reshape(H, W, C).astype(o_ref.dtype)


def _topk2_kernel(cost_ref, o_ref):
    # top-2 disparity regression, single pass over D (first-occurrence tie-breaking via '>').
    cost = cost_ref[0].astype(jnp.float32)    # [D, tr, W]
    D = cost.shape[0]
    v1 = cost[0]
    i1 = jnp.zeros_like(v1)
    v2 = jnp.full_like(v1, -1e30)
    i2 = jnp.zeros_like(v1)
    for d in range(1, D):
        cd = cost[d]
        take1 = cd > v1
        take2 = jnp.logical_and(jnp.logical_not(take1), cd > v2)
        v2 = jnp.where(take1, v1, jnp.where(take2, cd, v2))
        i2 = jnp.where(take1, i1, jnp.where(take2, float(d), i2))
        v1 = jnp.where(take1, cd, v1)
        i1 = jnp.where(take1, float(d), i1)
    w2 = jnp.exp(v2 - v1)
    o_ref[0] = (i1 + i2 * w2) / (1.0 + w2)


def topk2_regression(cost_sq):
    B, D, H, W = cost_sq.shape
    tr = _row_tile_c(H)
    return pl.pallas_call(
        _topk2_kernel, grid=(B, H // tr),
        in_specs=[pl.BlockSpec((1, D, tr, W), lambda b, r: (b, 0, r, 0))],
        out_specs=pl.BlockSpec((1, tr, W), lambda b, r: (b, r, 0)),
        out_shape=jax.ShapeDtypeStruct((B, H, W), F32),
        compiler_params=_cp(2))(cost_sq)


def _variance_kernel(cost_ref, pred_ref, gam_ref, bet_ref, o_ref):
    cost = cost_ref[0].astype(jnp.float32)    # [D, tr, W]
    pred = pred_ref[0]                        # [tr, W]
    mx = jnp.max(cost, axis=0, keepdims=True)
    e = jnp.exp(cost - mx)
    p = e / jnp.sum(e, axis=0, keepdims=True)
    dv = jax.lax.broadcasted_iota(jnp.float32, cost.shape, 0)
    var = jnp.sum(p * (dv - pred[None]) ** 2, axis=0)
    o_ref[0] = jax.nn.sigmoid(bet_ref[0, 0] + gam_ref[0, 0] * var)


def disparity_variance_sig(cost_sq, pred, gamma, beta):
    B, D, H, W = cost_sq.shape
    tr = _row_tile_c(H)
    return pl.pallas_call(
        _variance_kernel, grid=(B, H // tr),
        in_specs=[pl.BlockSpec((1, D, tr, W), lambda b, r: (b, 0, r, 0)),
                  pl.BlockSpec((1, tr, W), lambda b, r: (b, r, 0)),
                  pl.BlockSpec((1, 1), lambda b, r: (0, 0)),
                  pl.BlockSpec((1, 1), lambda b, r: (0, 0))],
        out_specs=pl.BlockSpec((1, tr, W), lambda b, r: (b, r, 0)),
        out_shape=jax.ShapeDtypeStruct((B, H, W), F32),
        compiler_params=_cp(2))(cost_sq, pred, gamma.reshape(1, 1), beta.reshape(1, 1))


def _geo_kernel(feat_ref, pred_ref, o_ref, *, D):
    # geo[h, w, :] = feat[h, round(pred[h, w]), :]  via one-hot MXU matmul per row.
    tr, W, C = o_ref.shape[1], o_ref.shape[2], o_ref.shape[3]
    idx = jnp.round(pred_ref[0])                          # [tr, W]
    rows = []
    for r in range(tr):
        fr = feat_ref[0, r].astype(jnp.float32)           # [D, C]
        onehot = (jax.lax.broadcasted_iota(jnp.float32, (W, D), 1) ==
                  idx[r][:, None]).astype(jnp.float32)
        rows.append(jnp.dot(onehot, fr, preferred_element_type=jnp.float32))
    o_ref[0] = jnp.stack(rows, axis=0).astype(o_ref.dtype)


def geo_gather(cost_feat, pred):
    # reproduces the reference gather quirk: geo[b,c,h,w] = cost_feat[b,c, round(pred), 0, h]
    B, D, H, W, C = cost_feat.shape
    assert H <= W, "reference torch.gather indexing requires H4 <= W4"
    feat = cost_feat[:, :, 0, :H, :].transpose(0, 2, 1, 3)       # [B, H, D, C]
    tr = _row_tile_c(H)
    return pl.pallas_call(
        functools.partial(_geo_kernel, D=D), grid=(B, H // tr),
        in_specs=[pl.BlockSpec((1, tr, D, C), lambda b, r: (b, r, 0, 0)),
                  pl.BlockSpec((1, tr, W), lambda b, r: (b, r, 0))],
        out_specs=pl.BlockSpec((1, tr, W, C), lambda b, r: (b, r, 0, 0)),
        out_shape=jax.ShapeDtypeStruct((B, H, W, C), BF16),
        compiler_params=_cp(2))(feat, pred)


def _refine_kernel(w_ref, d_ref, o_ref):
    w = w_ref[0].astype(jnp.float32)          # [tr, W, 34]
    d = d_ref[0]                              # [tr, W]
    mx = jnp.max(w, axis=-1, keepdims=True)
    e = jnp.exp(w - mx)
    p = e / jnp.sum(e, axis=-1, keepdims=True)
    o_ref[0] = jnp.sum(p, axis=-1) * d


def refine_softmax_sum(w_all, pred):
    B, H, W, Cw = w_all.shape
    tr = _row_tile_c(H)
    return pl.pallas_call(
        _refine_kernel, grid=(B, H // tr),
        in_specs=[pl.BlockSpec((1, tr, W, Cw), lambda b, r: (b, r, 0, 0)),
                  pl.BlockSpec((1, tr, W), lambda b, r: (b, r, 0))],
        out_specs=pl.BlockSpec((1, tr, W), lambda b, r: (b, r, 0)),
        out_shape=jax.ShapeDtypeStruct((B, H, W), F32),
        compiler_params=_cp(2))(w_all, pred)


def _ctx_up_kernel(dpu_ref, sp_ref, o_ref):
    i = pl.program_id(1)
    W = o_ref.shape[3]
    d = dpu_ref[0, pl.ds(i, 3)]                           # [3, 3, W]
    sp = sp_ref[0, 0].astype(jnp.float32)                 # [4, W, 9]
    mx = jnp.max(sp, axis=-1, keepdims=True)
    e = jnp.exp(sp - mx)
    p = e / jnp.sum(e, axis=-1, keepdims=True)
    acc = jnp.zeros((4, W), jnp.float32)
    for ti in range(3):
        for tj in range(3):
            acc = acc + d[ti, tj][None, :] * p[:, :, 3 * ti + tj]
    o_ref[0, 0] = acc


def context_upsample(pred_lr, spx_cl):
    # pred_lr [B, h, w] f32; spx_cl [B, 4h, 4w, 9] -> [B, 4h, 4w]
    B, h, w = pred_lr.shape
    W = 4 * w
    dp = jnp.pad(pred_lr, ((0, 0), (1, 1), (1, 1)))
    cols = [jnp.repeat(dp[:, :, tj:tj + w], 4, axis=-1) for tj in range(3)]
    dpu = jnp.stack(cols, axis=2)                          # [B, h+2, 3, W]
    sp = spx_cl.reshape(B, h, 4, W, 9)
    out = pl.pallas_call(
        _ctx_up_kernel, grid=(B, h),
        in_specs=[pl.BlockSpec((1, h + 2, 3, W), lambda b, i: (b, 0, 0, 0)),
                  pl.BlockSpec((1, 1, 4, W, 9), lambda b, i: (b, i, 0, 0, 0))],
        out_specs=pl.BlockSpec((1, 1, 4, W), lambda b, i: (b, i, 0, 0)),
        out_shape=jax.ShapeDtypeStruct((B, h, 4, W), F32),
        compiler_params=_cp(2))(dpu, sp)
    return out.reshape(B, 4 * h, W)


# ----------------------------------------------------------------------------------------
# deterministic parameter construction
# ----------------------------------------------------------------------------------------
class ParamGen:
    def __init__(self, key):
        self.key = key
        self.count = 0

    def _k(self):
        k = jax.random.fold_in(self.key, self.count)
        self.count += 1
        return k

    def c2(self, out_ch, in_ch, k):
        kh, kw = _pair(k)
        std = math.sqrt(2.0 / (kh * kw * out_ch))
        return std * jax.random.normal(self._k(), (out_ch, in_ch, kh, kw), F32)

    def c3(self, out_ch, in_ch, k):
        kd, kh, kw = _triple(k)
        std = math.sqrt(2.0 / (kd * kh * kw * out_ch))
        return std * jax.random.normal(self._k(), (out_ch, in_ch, kd, kh, kw), F32)

    def d2(self, in_ch, out_ch, k):
        kh, kw = _pair(k)
        std = math.sqrt(2.0 / (kh * kw * out_ch))
        return std * jax.random.normal(self._k(), (in_ch, out_ch, kh, kw), F32)

    def d3(self, in_ch, out_ch, k):
        kd, kh, kw = _triple(k)
        std = math.sqrt(2.0 / (kd * kh * kw * out_ch))
        return std * jax.random.normal(self._k(), (in_ch, out_ch, kd, kh, kw), F32)

    def zeros(self, n):
        return jnp.zeros((n,), F32)

    def ones(self, n):
        return jnp.ones((n,), F32)


def make_cross_attention_params(g, cost, fmap):
    return dict(
        ln_w=g.ones(cost), ln_b=g.zeros(cost),
        to_qk0_w=g.c3(cost, cost, (1, 5, 5)),
        to_qk1_w=g.c3(cost, cost, 1), to_qk1_b=g.zeros(cost),
        to_v0_w=g.c2(fmap, fmap, 3),
        to_v1_w=g.c2(fmap // 2, fmap, 1),
        to_v2_w=g.c2(cost, fmap // 2, 1), to_v2_b=g.zeros(cost),
        att0_w=g.c3(cost, cost, 1),
        att1_w=g.c3(cost, cost, 1), att1_b=g.zeros(cost),
        agg0_w=g.c3(cost, cost, 1),
        agg1_w=g.c3(cost, cost, 1), agg1_b=g.zeros(cost),
    )


def make_params(key):
    g = ParamGen(key)
    P = {}
    # TODO(synk): the pretrained ProxylessNAS torch.hub backbone cannot be reproduced in-script;
    # it is replaced by a deterministic strided-conv pyramid with identical output channels/strides.
    P["feat"] = dict(b0=g.c2(16, 3, 3), b1=g.c2(32, 16, 3), b2=g.c2(56, 32, 3),
                     b3=g.c2(128, 56, 3), b4=g.c2(432, 128, 3))
    P["featup"] = dict(
        d32_16_deconv=g.d2(432, 128, 4), d32_16_conv=g.c2(256, 256, 3),
        d16_8_deconv=g.d2(256, 56, 4), d16_8_conv=g.c2(112, 112, 3),
        d8_4_deconv=g.d2(112, 32, 4), d8_4_conv=g.c2(64, 64, 3),
        conv4=g.c2(64, 64, 3))
    P["stem2"] = dict(c0=g.c2(32, 3, 3), c1=g.c2(32, 32, 3))
    P["stem4"] = dict(c0=g.c2(48, 32, 3), c1=g.c2(48, 48, 3))
    P["spx"] = dict(w=g.d2(64, 9, 4), b=g.zeros(9))
    P["spx2"] = dict(deconv=g.d2(32, 32, 4), conv=g.c2(64, 64, 3))
    P["spx4"] = dict(c0=g.c2(32, 112, 3), c1=g.c2(32, 32, 3))
    P["conv"] = g.c2(48, 112, 3)
    P["desc"] = dict(w=g.c2(48, 48, 1), b=g.zeros(48))
    P["semantic"] = dict(c0=g.c2(64, 112, 3), c1=g.c2(32, 64, 3), c2=g.c2(8, 32, 1))
    P["agg_left"] = g.c3(8, 8, (1, 5, 5))
    P["agg_right"] = g.c3(8, 8, (5, 5, 1))
    P["corr_stem"] = g.c3(8, 1, 3)
    P["gamma"] = jnp.zeros((1,), F32)
    P["beta"] = 2.0 * jnp.ones((1,), F32)
    ic = 16
    P["hg"] = dict(
        conv1_0=g.c3(ic * 2, ic, 3), conv1_1=g.c3(ic * 2, ic * 2, 3),
        conv2_0=g.c3(ic * 4, ic * 2, 3), conv2_1=g.c3(ic * 4, ic * 4, 3),
        conv3_0=g.c3(ic * 6, ic * 4, 3), conv3_1=g.c3(ic * 6, ic * 6, 3),
        conv3_up=g.d3(ic * 6, ic * 4, 4), conv2_up=g.d3(ic * 4, ic * 2, 4),
        conv1_up=g.d3(ic * 2, ic, 4),
        out=g.c3(1, ic, 3),
        agg0_0=g.c3(ic * 4, ic * 8, 1), agg0_1=g.c3(ic * 4, ic * 4, 3),
        agg0_2=g.c3(ic * 4, ic * 4, 3),
        agg1_0=g.c3(ic * 2, ic * 4, 1), agg1_1=g.c3(ic * 2, ic * 2, 3),
        agg1_2=g.c3(ic * 2, ic * 2, 3),
        gcc8=make_cross_attention_params(g, ic * 2, 112),
        gcc16=make_cross_attention_params(g, ic * 4, 256),
        gcc32=make_cross_attention_params(g, ic * 6, 432),
        gcc16_up=make_cross_attention_params(g, ic * 4, 256),
        gcc8_up=make_cross_attention_params(g, ic * 2, 112))
    chan = 16 + 32 + 9
    P["ref"] = dict(
        ca0_w=g.c2(chan, chan, 1), ca0_b=g.zeros(chan),
        ca1_w=g.c2(chan // 7, chan, 1), ca1_b=g.zeros(chan // 7),
        ca2_w=g.c2(chan, chan // 7, 1), ca2_b=g.zeros(chan),
        c0_w=g.c2(chan * 2, chan, 3), c0_b=g.zeros(chan * 2),
        c1_w=g.c2(chan * 2, chan * 2, 5), c1_b=g.zeros(chan * 2),
        d1_0_w=g.c2(chan, chan * 2, 3), d1_0_b=g.zeros(chan),
        d1_1_w=g.c2(9, chan, 3), d1_1_b=g.zeros(9),
        d3_0_w=g.c2(chan, chan * 2, 5), d3_0_b=g.zeros(chan),
        d3_1_w=g.c2(25, chan, 5), d3_1_b=g.zeros(25))
    return P


# ----------------------------------------------------------------------------------------
# network pieces (all channels-last)
# ----------------------------------------------------------------------------------------
def backbone(p, x):
    x2 = conv2d_cl(x, p["b0"], None, 2, 1, act="relu")
    x4 = conv2d_cl(x2, p["b1"], None, 2, 1, act="relu")
    x8 = conv2d_cl(x4, p["b2"], None, 2, 1, act="relu")
    x16 = conv2d_cl(x8, p["b3"], None, 2, 1, act="relu")
    x32 = conv2d_cl(x16, p["b4"], None, 2, 1, act="relu")
    return [x4, x8, x16, x32]


def conv2x_deconv(dw, cw, x, rem):
    # TODO(synk): the channel concat could be fused into the following conv (split-K dots).
    x = deconv2d_cl(x, dw, None, bn=True, act="leaky")
    x = jnp.concatenate([x, rem], axis=-1)
    return conv2d_cl(x, cw, None, 1, 1, bn=True, act="leaky")


def feat_up(p, fL, fR):
    x4, x8, x16, x32 = fL
    y4, y8, y16, y32 = fR
    x16 = conv2x_deconv(p["d32_16_deconv"], p["d32_16_conv"], x32, x16)
    y16 = conv2x_deconv(p["d32_16_deconv"], p["d32_16_conv"], y32, y16)
    x8 = conv2x_deconv(p["d16_8_deconv"], p["d16_8_conv"], x16, x8)
    y8 = conv2x_deconv(p["d16_8_deconv"], p["d16_8_conv"], y16, y8)
    x4 = conv2x_deconv(p["d8_4_deconv"], p["d8_4_conv"], x8, x4)
    y4 = conv2x_deconv(p["d8_4_deconv"], p["d8_4_conv"], y8, y4)
    x4 = conv2d_cl(x4, p["conv4"], None, 1, 1, bn=True, act="leaky")
    y4 = conv2d_cl(y4, p["conv4"], None, 1, 1, bn=True, act="leaky")
    return [x4, x8, x16, x32], [y4, y8, y16, y32]


def stem_fwd(p, x):
    x = conv2d_cl(x, p["c0"], None, 2, 1, bn=True, act="leaky")
    return conv2d_cl(x, p["c1"], None, 1, 1, bn=True, act="relu")


def spx4_fwd(p, x):
    x = conv2d_cl(x, p["c0"], None, 1, 1, bn=True, act="leaky")
    return conv2d_cl(x, p["c1"], None, 1, 1, bn=True, act="relu")


def semantic_fwd(p, x):
    x = conv2d_cl(x, p["c0"], None, 1, 1, bn=True, act="leaky")
    x = conv2d_cl(x, p["c1"], None, 1, 1, bn=True, act="leaky")
    return conv2d_cl(x, p["c2"], None, 1, 0)


def cross_attention(p, cost, fmap, ksize, heads):
    qk = conv3d_cl(cost, p["to_qk0_w"], None, 1, (0, 2, 2), bn=True, act="leaky")
    qk = conv3d_cl(qk, p["to_qk1_w"], p["to_qk1_b"])
    v = conv2d_cl(fmap, p["to_v0_w"], None, 1, 1, bn=True, act="leaky")
    v = conv2d_cl(v, p["to_v1_w"], None, 1, 0, bn=True, act="leaky")
    v = conv2d_cl(v, p["to_v2_w"], p["to_v2_b"], 1, 0)
    B, D, H, W, C = qk.shape
    pad = ksize // 2
    k_pad = jnp.pad(qk, ((0, 0), (0, 0), (pad, pad), (pad, pad), (0, 0)))
    v_pad = jnp.pad(v, ((0, 0), (pad, pad), (pad, pad), (0, 0)))
    Hp, Wp = H + 2 * pad, W + 2 * pad
    excite = pl.pallas_call(
        functools.partial(_xatt_ln_kernel, ksize=ksize, heads=heads, pad=pad),
        grid=(B, D),
        in_specs=[pl.BlockSpec((1, 1, Hp, Wp, C), lambda b, d: (b, d, 0, 0, 0)),
                  pl.BlockSpec((1, Hp, Wp, C), lambda b, d: (b, 0, 0, 0)),
                  pl.BlockSpec((1, C), lambda b, d: (0, 0)),
                  pl.BlockSpec((1, C), lambda b, d: (0, 0))],
        out_specs=pl.BlockSpec((1, 1, H, W, C), lambda b, d: (b, d, 0, 0, 0)),
        out_shape=jax.ShapeDtypeStruct((B, D, H, W, C), BF16),
        compiler_params=_cp(2))(k_pad, v_pad, p["ln_w"].reshape(1, C), p["ln_b"].reshape(1, C))
    e = conv3d_cl(excite, p["att0_w"], None, 1, 0, bn=True, act="leaky")
    # sigmoid gate fused into the 1x1x1 conv epilogue: cost = sigmoid(conv(e)) * cost
    cost = conv3d_cl(e, p["att1_w"], p["att1_b"], 1, 0, act="sigmoid", gate=cost)
    cost = conv3d_cl(cost, p["agg0_w"], None, 1, 0, bn=True, act="leaky")
    cost = conv3d_cl(cost, p["agg1_w"], p["agg1_b"], 1, 0)
    return cost


def hourglass_fusion_fwd(p, x, imgs):
    c1 = conv3d_cl(x, p["conv1_0"], None, 2, 1, bn=True, act="leaky")
    c1 = conv3d_cl(c1, p["conv1_1"], None, 1, 1, bn=True, act="leaky")
    c1 = cross_attention(p["gcc8"], c1, imgs[1], 3, 2)
    c2 = conv3d_cl(c1, p["conv2_0"], None, 2, 1, bn=True, act="leaky")
    c2 = conv3d_cl(c2, p["conv2_1"], None, 1, 1, bn=True, act="leaky")
    c2 = cross_attention(p["gcc16"], c2, imgs[2], 5, 8)
    c3 = conv3d_cl(c2, p["conv3_0"], None, 2, 1, bn=True, act="leaky")
    c3 = conv3d_cl(c3, p["conv3_1"], None, 1, 1, bn=True, act="leaky")
    c3 = cross_attention(p["gcc32"], c3, imgs[3], 7, 8)
    c3u = deconv3d_cl(c3, p["conv3_up"], None, bn=True, act="leaky")
    c2 = jnp.concatenate([c3u, c2], axis=-1)
    c2 = conv3d_cl(c2, p["agg0_0"], None, 1, 0, bn=True, act="leaky")
    c2 = conv3d_cl(c2, p["agg0_1"], None, 1, 1, bn=True, act="leaky")
    c2 = conv3d_cl(c2, p["agg0_2"], None, 1, 1, bn=True, act="leaky")
    c2 = cross_attention(p["gcc16_up"], c2, imgs[2], 5, 8)
    c2u = deconv3d_cl(c2, p["conv2_up"], None, bn=True, act="leaky")
    c1 = jnp.concatenate([c2u, c1], axis=-1)
    c1 = conv3d_cl(c1, p["agg1_0"], None, 1, 0, bn=True, act="leaky")
    c1 = conv3d_cl(c1, p["agg1_1"], None, 1, 1, bn=True, act="leaky")
    c1 = conv3d_cl(c1, p["agg1_2"], None, 1, 1, bn=True, act="leaky")
    c1 = cross_attention(p["gcc8_up"], c1, imgs[1], 3, 2)
    conv = deconv3d_cl(c1, p["conv1_up"], None, bn=False, act="none")
    out = conv3d_cl(conv, p["out"], None, 1, 1, bn=True, act="leaky", out_dtype=F32)
    return out, conv


def unfold9_cl(x):
    # 3x3 unfold of a single-channel map [B,H,W] -> [B,H,W,9]
    B, H, W = x.shape
    xp = jnp.pad(x, ((0, 0), (1, 1), (1, 1)))
    slabs = [xp[:, i:i + H, j:j + W] for i in range(3) for j in range(3)]
    return jnp.stack(slabs, axis=-1)


def refinement_fwd(p, pred, geo, context, variance):
    var_unf = unfold9_cl(variance).astype(BF16)
    feats = jnp.concatenate([geo, context, var_unf], axis=-1)
    att = conv2d_cl(feats, p["ca0_w"], p["ca0_b"], act="relu")
    att = conv2d_cl(att, p["ca1_w"], p["ca1_b"], act="relu")
    # channel-attention sigmoid gate fused into the 1x1 conv epilogue
    feats = conv2d_cl(att, p["ca2_w"], p["ca2_b"], act="sigmoid", gate=feats)
    feats = conv2d_cl(feats, p["c0_w"], p["c0_b"], 1, 1, act="relu")
    feats = conv2d_cl(feats, p["c1_w"], p["c1_b"], 1, 2, bn=True, act="relu")
    wd1 = conv2d_cl(feats, p["d1_0_w"], p["d1_0_b"], 1, 1, act="relu")
    wd1 = conv2d_cl(wd1, p["d1_1_w"], p["d1_1_b"], 1, 1)
    wd3 = conv2d_cl(feats, p["d3_0_w"], p["d3_0_b"], 1, 6, dilation=3, act="relu")
    wd3 = conv2d_cl(wd3, p["d3_1_w"], p["d3_1_b"], 1, 6, dilation=3)
    w_all = jnp.concatenate([wd1, wd3], axis=-1)
    # NOTE: the reference builds unfolded disparity maps but immediately overwrites them; the
    # returned value is sum(disparity * softmax(weights, dim=1), dim=1) (reproduced).
    return refine_softmax_sum(w_all, pred)


# ----------------------------------------------------------------------------------------
# CCAStereo forward (inference mode)
# ----------------------------------------------------------------------------------------
def cca_stereo_forward(params, left, right, maxdisp=32):
    D = maxdisp // 4
    left_cl = left.transpose(0, 2, 3, 1)
    right_cl = right.transpose(0, 2, 3, 1)
    fL = backbone(params["feat"], left_cl)
    fR = backbone(params["feat"], right_cl)
    fL, fR = feat_up(params["featup"], fL, fR)
    stem_2x = stem_fwd(params["stem2"], left_cl)
    stem_4x = stem_fwd(params["stem4"], stem_2x)
    stem_2y = stem_fwd(params["stem2"], right_cl)
    stem_4y = stem_fwd(params["stem4"], stem_2y)
    fL0 = jnp.concatenate([fL[0], stem_4x], axis=-1)
    fR0 = jnp.concatenate([fR[0], stem_4y], axis=-1)
    fL = [fL0, fL[1], fL[2], fL[3]]

    match_left = conv2d_cl(conv2d_cl(fL0, params["conv"], None, 1, 1, bn=True, act="leaky"),
                           params["desc"]["w"], params["desc"]["b"])
    match_right = conv2d_cl(conv2d_cl(fR0, params["conv"], None, 1, 1, bn=True, act="leaky"),
                            params["desc"]["w"], params["desc"]["b"])

    B, H4, W4, _ = match_left.shape
    corr = norm_correlation_volume(match_left, match_right, D)             # [B, D, H4, W4]
    corr5 = conv3d_cl(corr[..., None], params["corr_stem"], None, 1, 1, bn=True, act="leaky")

    left_sem = semantic_fwd(params["semantic"], fL0)
    right_sem = semantic_fwd(params["semantic"], fR0)
    vol_r, vol_l = slide_and_gate(corr5, left_sem, right_sem, D)
    vol_r = conv3d_cl(vol_r, params["agg_right"], None, 1, (2, 2, 0), bn=True, act="leaky")
    vol_l = conv3d_cl(vol_l, params["agg_left"], None, 1, (0, 2, 2), bn=True, act="leaky")
    volume = jnp.concatenate([vol_r, vol_l], axis=-1)                      # [B, D, H4, W4, 16]

    cost, cost_feat = hourglass_fusion_fwd(params["hg"], volume, fL)
    cost_sq = cost[..., 0]                                                 # [B, D, H4, W4]

    pred = topk2_regression(cost_sq)                                       # [B, H4, W4]
    geo = geo_gather(cost_feat, pred)                                      # [B, H4, W4, 16]
    variance = disparity_variance_sig(cost_sq, pred, params["gamma"], params["beta"])

    xspx_4 = spx4_fwd(params["spx4"], fL0)
    xspx_2 = deconv2d_cl(xspx_4, params["spx2"]["deconv"], None, bn=True, act="leaky")
    xspx_2 = jnp.concatenate([xspx_2, stem_2x], axis=-1)
    xspx_2 = conv2d_cl(xspx_2, params["spx2"]["conv"], None, 1, 1, bn=True, act="leaky")
    spx_logits = deconv2d_cl(xspx_2, params["spx"]["w"], params["spx"]["b"])   # [B, H, W, 9]

    pred_ref = refinement_fwd(params["ref"], pred, geo, xspx_4, variance)
    pred_up = context_upsample(pred_ref, spx_logits)
    return pred_up * 4.0                                                   # eval-mode output


# ----------------------------------------------------------------------------------------
if __name__ == "__main__":
    key = jax.random.PRNGKey(0)
    params = make_params(key)

    B, H, W = 1, 32, 64
    maxdisp = 32
    kL = jax.random.fold_in(key, 1001)
    kR = jax.random.fold_in(key, 1002)
    left = jax.random.normal(kL, (B, 3, H, W), F32)
    right = jax.random.normal(kR, (B, 3, H, W), F32)

    out = cca_stereo_forward(params, left, right, maxdisp)
    out = jax.block_until_ready(out)
    assert out.shape == (B, H, W), out.shape
    assert bool(jnp.all(jnp.isfinite(out)))
    print("KERNEL_OK")
</pallas_src>

<mosaic_0001>
module attributes {stable_mosaic.version = 11 : i64} {
  func.func @_dc2_kernel(%arg0: i32, %arg1: i32, %arg2: memref<1x17x33x12xbf16, #tpu.memory_space<vmem>>, %arg3: memref<2x2x12x16xbf16, #tpu.memory_space<vmem>>, %arg4: memref<1x16xf32, #tpu.memory_space<vmem>>, %arg5: memref<1x16x32x16xbf16, #tpu.memory_space<vmem>>) attributes {dimension_semantics = [#tpu.dimension_semantics<parallel>, #tpu.dimension_semantics<parallel>], iteration_bounds = array<i64: 1, 1>, scalar_prefetch = 0 : i64, scratch_operands = 0 : i64, tpu.core_type = #tpu.core_type<tc>, window_params = [{transform_indices = @transform_0, window_bounds = array<i64: 1, 17, 33, 12>}, {pipeline_mode = #tpu.pipeline_mode<synchronous>, transform_indices = @transform_1, window_bounds = array<i64: 2, 2, 12, 16>}, {pipeline_mode = #tpu.pipeline_mode<synchronous>, transform_indices = @transform_2, window_bounds = array<i64: 1, 16>}, {transform_indices = @transform_3, window_bounds = array<i64: 1, 16, 32, 16>}]} {
    %c16_i32 = arith.constant 16 : i32
    %0 = arith.muli %arg1, %c16_i32 : i32
    %c0_i32 = arith.constant 0 : i32
    %1 = arith.addi %0, %c0_i32 : i32
    %c0 = arith.constant 0 : index
    %2 = arith.index_cast %1 : i32 to index
    %c0_0 = arith.constant 0 : index
    %c0_1 = arith.constant 0 : index
    %3 = vector.load %arg2[%c0, %2, %c0_0, %c0_1] : memref<1x17x33x12xbf16, #tpu.memory_space<vmem>>, vector<1x16x32x12xbf16>
    %4 = vector.shape_cast %3 : vector<1x16x32x12xbf16> to vector<16x32x12xbf16>
    %5 = vector.shape_cast %4 : vector<16x32x12xbf16> to vector<512x12xbf16>
    %c0_2 = arith.constant 0 : index
    %c0_3 = arith.constant 0 : index
    %c0_4 = arith.constant 0 : index
    %c0_5 = arith.constant 0 : index
    %6 = vector.load %arg3[%c0_2, %c0_3, %c0_4, %c0_5] : memref<2x2x12x16xbf16, #tpu.memory_space<vmem>>, vector<1x1x12x16xbf16>
    %7 = vector.shape_cast %6 : vector<1x1x12x16xbf16> to vector<12x16xbf16>
    %cst = arith.constant dense<0.000000e+00> : vector<512x16xf32>
    %8 = tpu.matmul %5, %7, %cst {dimension_numbers = #tpu.dot_dimension_numbers<[1], [0], [0], [1], [0, 0, 1, 1], [], []>} : vector<512x12xbf16>, vector<12x16xbf16>, vector<512x16xf32> -> vector<512x16xf32>
    %c0_i32_6 = arith.constant 0 : i32
    %9 = arith.addi %0, %c0_i32_6 : i32
    %c0_7 = arith.constant 0 : index
    %10 = arith.index_cast %9 : i32 to index
    %c1 = arith.constant 1 : index
    %c0_8 = arith.constant 0 : index
    %11 = vector.load %arg2[%c0_7, %10, %c1, %c0_8] : memref<1x17x33x12xbf16, #tpu.memory_space<vmem>>, vector<1x16x32x12xbf16>
    %12 = vector.shape_cast %11 : vector<1x16x32x12xbf16> to vector<16x32x12xbf16>
    %13 = vector.shape_cast %12 : vector<16x32x12xbf16> to vector<512x12xbf16>
    %c0_9 = arith.constant 0 : index
    %c1_10 = arith.constant 1 : index
    %c0_11 = arith.constant 0 : index
    %c0_12 = arith.constant 0 : index
    %14 = vector.load %arg3[%c0_9, %c1_10, %c0_11, %c0_12] : memref<2x2x12x16xbf16, #tpu.memory_space<vmem>>, vector<1x1x12x16xbf16>
    %15 = vector.shape_cast %14 : vector<1x1x12x16xbf16> to vector<12x16xbf16>
    %cst_13 = arith.constant dense<0.000000e+00> : vector<512x16xf32>
    %16 = tpu.matmul %13, %15, %cst_13 {dimension_numbers = #tpu.dot_dimension_numbers<[1], [0], [0], [1], [0, 0, 1, 1], [], []>} : vector<512x12xbf16>, vector<12x16xbf16>, vector<512x16xf32> -> vector<512x16xf32>
    %17 = arith.addf %8, %16 : vector<512x16xf32>
    %c1_i32 = arith.constant 1 : i32
    %18 = arith.addi %0, %c1_i32 : i32
    %c0_14 = arith.constant 0 : index
    %19 = arith.index_cast %18 : i32 to index
    %c0_15 = arith.constant 0 : index
    %c0_16 = arith.constant 0 : index
    %20 = vector.load %arg2[%c0_14, %19, %c0_15, %c0_16] : memref<1x17x33x12xbf16, #tpu.memory_space<vmem>>, vector<1x16x32x12xbf16>
    %21 = vector.shape_cast %20 : vector<1x16x32x12xbf16> to vector<16x32x12xbf16>
    %22 = vector.shape_cast %21 : vector<16x32x12xbf16> to vector<512x12xbf16>
    %c1_17 = arith.constant 1 : index
    %c0_18 = arith.constant 0 : index
    %c0_19 = arith.constant 0 : index
    %c0_20 = arith.constant 0 : index
    %23 = vector.load %arg3[%c1_17, %c0_18, %c0_19, %c0_20] : memref<2x2x12x16xbf16, #tpu.memory_space<vmem>>, vector<1x1x12x16xbf16>
    %24 = vector.shape_cast %23 : vector<1x1x12x16xbf16> to vector<12x16xbf16>
    %cst_21 = arith.constant dense<0.000000e+00> : vector<512x16xf32>
    %25 = tpu.matmul %22, %24, %cst_21 {dimension_numbers = #tpu.dot_dimension_numbers<[1], [0], [0], [1], [0, 0, 1, 1], [], []>} : vector<512x12xbf16>, vector<12x16xbf16>, vector<512x16xf32> -> vector<512x16xf32>
    %26 = arith.addf %17, %25 : vector<512x16xf32>
    %c1_i32_22 = arith.constant 1 : i32
    %27 = arith.addi %0, %c1_i32_22 : i32
    %c0_23 = arith.constant 0 : index
    %28 = arith.index_cast %27 : i32 to index
    %c1_24 = arith.constant 1 : index
    %c0_25 = arith.constant 0 : index
    %29 = vector.load %arg2[%c0_23, %28, %c1_24, %c0_25] : memref<1x17x33x12xbf16, #tpu.memory_space<vmem>>, vector<1x16x32x12xbf16>
    %30 = vector.shape_cast %29 : vector<1x16x32x12xbf16> to vector<16x32x12xbf16>
    %31 = vector.shape_cast %30 : vector<16x32x12xbf16> to vector<512x12xbf16>
    %c1_26 = arith.constant 1 : index
    %c1_27 = arith.constant 1 : index
    %c0_28 = arith.constant 0 : index
    %c0_29 = arith.constant 0 : index
    %32 = vector.load %arg3[%c1_26, %c1_27, %c0_28, %c0_29] : memref<2x2x12x16xbf16, #tpu.memory_space<vmem>>, vector<1x1x12x16xbf16>
    %33 = vector.shape_cast %32 : vector<1x1x12x16xbf16> to vector<12x16xbf16>
    %cst_30 = arith.constant dense<0.000000e+00> : vector<512x16xf32>
    %34 = tpu.matmul %31, %33, %cst_30 {dimension_numbers = #tpu.dot_dimension_numbers<[1], [0], [0], [1], [0, 0, 1, 1], [], []>} : vector<512x12xbf16>, vector<12x16xbf16>, vector<512x16xf32> -> vector<512x16xf32>
    %35 = arith.addf %26, %34 : vector<512x16xf32>
    %c0_31 = arith.constant 0 : index
    %c0_32 = arith.constant 0 : index
    %36 = vector.load %arg4[%c0_31, %c0_32] : memref<1x16xf32, #tpu.memory_space<vmem>>, vector<1x16xf32>
    %37 = vector.broadcast %36 : vector<1x16xf32> to vector<512x16xf32>
    %38 = arith.addf %35, %37 : vector<512x16xf32>
    %cst_33 = arith.constant 0.000000e+00 : f32
    %39 = vector.broadcast %cst_33 : f32 to vector<512x16xf32>
    %40 = arith.maximumf %38, %39 : vector<512x16xf32>
    %41 = vector.shape_cast %40 : vector<512x16xf32> to vector<16x32x16xf32>
    %42 = arith.truncf %41 : vector<16x32x16xf32> to vector<16x32x16xbf16>
    %c0_34 = arith.constant 0 : index
    %c0_35 = arith.constant 0 : index
    %c0_36 = arith.constant 0 : index
    %c0_37 = arith.constant 0 : index
    %43 = vector.load %arg5[%c0_34, %c0_35, %c0_36, %c0_37] : memref<1x16x32x16xbf16, #tpu.memory_space<vmem>>, vector<1x16x32x16xbf16>
    %44 = vector.shape_cast %43 : vector<1x16x32x16xbf16> to vector<16x32x16xbf16>
    %45 = vector.shape_cast %42 : vector<16x32x16xbf16> to vector<1x16x32x16xbf16>
    tpu.vector_store %arg5[%c0_34, %c0_35, %c0_36, %c0_37], %45 {strides = array<i32>} : memref<1x16x32x16xbf16, #tpu.memory_space<vmem>>, vector<1x16x32x16xbf16>,
    return
  }
  func.func @transform_0(%arg0: i32, %arg1: i32) -> (i32, i32, i32, i32) {
    %c0_i32 = arith.constant 0 : i32
    %c0_i32_0 = arith.constant 0 : i32
    %c0_i32_1 = arith.constant 0 : i32
    %c0_i32_2 = arith.constant 0 : i32
    return %arg0, %c0_i32, %c0_i32_0, %c0_i32_1 : i32, i32, i32, i32
  }
  func.func @transform_1(%arg0: i32, %arg1: i32) -> (i32, i32, i32, i32) {
    %c0_i32 = arith.constant 0 : i32
    %c0_i32_0 = arith.constant 0 : i32
    %c0_i32_1 = arith.constant 0 : i32
    %c0_i32_2 = arith.constant 0 : i32
    %c0_i32_3 = arith.constant 0 : i32
    return %c0_i32, %c0_i32_0, %c0_i32_1, %c0_i32_2 : i32, i32, i32, i32
  }
  func.func @transform_2(%arg0: i32, %arg1: i32) -> (i32, i32) {
    %c0_i32 = arith.constant 0 : i32
    %c0_i32_0 = arith.constant 0 : i32
    %c0_i32_1 = arith.constant 0 : i32
    return %c0_i32, %c0_i32_0 : i32, i32
  }
  func.func @transform_3(%arg0: i32, %arg1: i32) -> (i32, i32, i32, i32) {
    %c0_i32 = arith.constant 0 : i32
    %c0_i32_0 = arith.constant 0 : i32
    %c0_i32_1 = arith.constant 0 : i32
    return %arg0, %arg1, %c0_i32, %c0_i32_0 : i32, i32, i32, i32
  }
}

</mosaic_0001>

<llo_original>
// kernel: tpu_custom_call.1
$region0: #{tpu_custom_call.1}
  #allocation0 [shape = 'u32[]', space=smem, size = 0x4, offset = 0x4, fixed_abs, tag = 'smem constant byte address 0x4 - core index']
  #allocation1 [shape = 'u32[144,128]{1,0:T(1,128)}', space=vmem, size = 0x12000, scoped, tag = 'internal scratch']
  %s0 = inlined_call_operand.vmem [shape: bf16[1,17,33,12], index: 0, kind: input, shape index: {}]
  %s1 = inlined_call_operand.vmem [shape: bf16[2,2,12,16], index: 1, kind: input, shape index: {}]
  %s2 = inlined_call_operand.vmem [shape: f32[1,16], index: 2, kind: input, shape index: {}]
  %s3 = inlined_call_operand.vmem [shape: bf16[1,16,32,16], index: 3, kind: output, shape index: {}]
  %s4 = sld [smem:[#allocation0]]
  $region22: #{tpu_custom_call.1} parent=0
    _
  %s6 = ssub.s32 1, %s4
  %s7 = scalar_select 0, %s6, %s4
  // Predicated region
  $region2: #{tpu_custom_call.1} parent=0 // pred_check
    _
  $region3: #{tpu_custom_call.1} parent=0 // pred_check_branch
    %9 = sbr.rel (0) target = $region5
  $region4: #{tpu_custom_call.1} parent=0 // pred_region
    _
  $region5: #{tpu_custom_call.1} parent=0 // pred_fallthru
    _
  // Predicated region
  $region6: #{tpu_custom_call.1} parent=0 // pred_check
    _
  $region7: #{tpu_custom_call.1} parent=0 // pred_check_branch
    %11 = sbr.rel (0) target = $region9
  $region8: #{tpu_custom_call.1} parent=0 // pred_region
    _
  $region9: #{tpu_custom_call.1} parent=0 // pred_fallthru
    _
  // Predicated region
  $region10: #{tpu_custom_call.1} parent=0 // pred_check
    _
  $region11: #{tpu_custom_call.1} parent=0 // pred_check_branch
    %13 = sbr.rel (0) target = $region13
  $region12: #{tpu_custom_call.1} parent=0 // pred_region
    _
  $region13: #{tpu_custom_call.1} parent=0 // pred_fallthru
    _
  %s15 = smul.u32 0, 16
  %s16 = smul.u32 %s15, 5
  %s17 = smul.addr %s16, 4
  %s18 = scalar_lea.vmem %s0, %s17
  %v19 = vld [vmem:[%s18] sm:$0xf]
  %v20 = vld [vmem:[%s18 + $0x4] sm:$0xf]
  %v21 = vld [vmem:[%s18 + $0x8] sm:$0xf]
  %v22 = vld [vmem:[%s18 + $0xc] sm:$0xf]
  %v23 = vld [vmem:[%s18 + $0x14] sm:$0xf]
  %v24 = vld [vmem:[%s18 + $0x18] sm:$0xf]
  %v25 = vld [vmem:[%s18 + $0x1c] sm:$0xf]
  %v26 = vld [vmem:[%s18 + $0x20] sm:$0xf]
  %v27 = vld [vmem:[%s18 + $0x28] sm:$0xf]
  %v28 = vld [vmem:[%s18 + $0x2c] sm:$0xf]
  %v29 = vld [vmem:[%s18 + $0x30] sm:$0xf]
  %v30 = vld [vmem:[%s18 + $0x34] sm:$0xf]
  %v31 = vld [vmem:[%s18 + $0x3c] sm:$0xf]
  %v32 = vld [vmem:[%s18 + $0x40] sm:$0xf]
  %v33 = vld [vmem:[%s18 + $0x44] sm:$0xf]
  %v34 = vld [vmem:[%s18 + $0x48] sm:$0xf]
  %v35 = vld [vmem:[%s18 + $0x50] sm:$0xf]
  %v36 = vld [vmem:[%s18 + $0x54] sm:$0xf]
  %v37 = vld [vmem:[%s18 + $0x58] sm:$0xf]
  %v38 = vld [vmem:[%s18 + $0x5c] sm:$0xf]
  %v39 = vld [vmem:[%s18 + $0x64] sm:$0xf]
  %v40 = vld [vmem:[%s18 + $0x68] sm:$0xf]
  %v41 = vld [vmem:[%s18 + $0x6c] sm:$0xf]
  %v42 = vld [vmem:[%s18 + $0x70] sm:$0xf]
  %v43 = vld [vmem:[%s18 + $0x78] sm:$0xf]
  %v44 = vld [vmem:[%s18 + $0x7c] sm:$0xf]
  %v45 = vld [vmem:[%s18 + $0x80] sm:$0xf]
  %v46 = vld [vmem:[%s18 + $0x84] sm:$0xf]
  %v47 = vld [vmem:[%s18 + $0x8c] sm:$0xf]
  %v48 = vld [vmem:[%s18 + $0x90] sm:$0xf]
  %v49 = vld [vmem:[%s18 + $0x94] sm:$0xf]
  %v50 = vld [vmem:[%s18 + $0x98] sm:$0xf]
  %v51 = vld [vmem:[%s18 + $0xa0] sm:$0xf]
  %v52 = vld [vmem:[%s18 + $0xa4] sm:$0xf]
  %v53 = vld [vmem:[%s18 + $0xa8] sm:$0xf]
  %v54 = vld [vmem:[%s18 + $0xac] sm:$0xf]
  %v55 = vld [vmem:[%s18 + $0xb4] sm:$0xf]
  %v56 = vld [vmem:[%s18 + $0xb8] sm:$0xf]
  %v57 = vld [vmem:[%s18 + $0xbc] sm:$0xf]
  %v58 = vld [vmem:[%s18 + $0xc0] sm:$0xf]
  %v59 = vld [vmem:[%s18 + $0xc8] sm:$0xf]
  %v60 = vld [vmem:[%s18 + $0xcc] sm:$0xf]
  %v61 = vld [vmem:[%s18 + $0xd0] sm:$0xf]
  %v62 = vld [vmem:[%s18 + $0xd4] sm:$0xf]
  %v63 = vld [vmem:[%s18 + $0xdc] sm:$0xf]
  %v64 = vld [vmem:[%s18 + $0xe0] sm:$0xf]
  %v65 = vld [vmem:[%s18 + $0xe4] sm:$0xf]
  %v66 = vld [vmem:[%s18 + $0xe8] sm:$0xf]
  %v67 = vld [vmem:[%s18 + $0xf0] sm:$0xf]
  %v68 = vld [vmem:[%s18 + $0xf4] sm:$0xf]
  %v69 = vld [vmem:[%s18 + $0xf8] sm:$0xf]
  %v70 = vld [vmem:[%s18 + $0xfc] sm:$0xf]
  %v71 = vld [vmem:[%s18 + $0x104] sm:$0xf]
  %v72 = vld [vmem:[%s18 + $0x108] sm:$0xf]
  %v73 = vld [vmem:[%s18 + $0x10c] sm:$0xf]
  %v74 = vld [vmem:[%s18 + $0x110] sm:$0xf]
  %v75 = vld [vmem:[%s18 + $0x118] sm:$0xf]
  %v76 = vld [vmem:[%s18 + $0x11c] sm:$0xf]
  %v77 = vld [vmem:[%s18 + $0x120] sm:$0xf]
  %v78 = vld [vmem:[%s18 + $0x124] sm:$0xf]
  %v79 = vld [vmem:[%s18 + $0x12c] sm:$0xf]
  %v80 = vld [vmem:[%s18 + $0x130] sm:$0xf]
  %v81 = vld [vmem:[%s18 + $0x134] sm:$0xf]
  %v82 = vld [vmem:[%s18 + $0x138] sm:$0xf]
  %v83 = vld [vmem:[%s1] sm:$0xf]
  %v84 = vld [vmem:[%s1 + $0x4] sm:$0x3]
  %v85 = vld [vmem:[%s18 + $0x10] sm:$0x1]
  %v86 = vld [vmem:[%s18 + $0x24] sm:$0x1]
  %v87 = vld [vmem:[%s18 + $0x38] sm:$0x1]
  %v88 = vld [vmem:[%s18 + $0x4c] sm:$0x1]
  %v89 = vld [vmem:[%s18 + $0x60] sm:$0x1]
  %v90 = vld [vmem:[%s18 + $0x74] sm:$0x1]
  %v91 = vld [vmem:[%s18 + $0x88] sm:$0x1]
  %v92 = vld [vmem:[%s18 + $0x9c] sm:$0x1]
  %v93 = vld [vmem:[%s18 + $0xb0] sm:$0x1]
  %v94 = vld [vmem:[%s18 + $0xc4] sm:$0x1]
  %v95 = vld [vmem:[%s18 + $0xd8] sm:$0x1]
  %v96 = vld [vmem:[%s18 + $0xec] sm:$0x1]
  %v97 = vld [vmem:[%s18 + $0x100] sm:$0x1]
  %v98 = vld [vmem:[%s18 + $0x114] sm:$0x1]
  %v99 = vld [vmem:[%s18 + $0x128] sm:$0x1]
  %v100 = vld [vmem:[%s18 + $0x13c] sm:$0x1]
  %vm101 = vsmask.f32 3328
  %vm102 = vsmask.f32 7440
  %vm103 = vmor %vm101, %vm102
  %v105 = vshrl.u32 %v19, 16
  %v107 = vrot.slane %v105, 4
  %v108 = vshll.u32 %v19, 16
  %v110 = vrot.slane %v108, 5
  %v111 = vor.u32 %v107, %v110
  %v112 = vrot.slane %v111, 4
  %v114 = vshll.u32 %v20, 16
  %v116 = vrot.slane %v114, 5
  %v117 = vsel %vm103, %v112, %v116
  %v118 = vshrl.u32 %v20, 16
  %v120 = vrot.slane %v118, 4
  %v121 = vor.u32 %v120, %v116
  %v122 = vrot.slane %v121, 4
  %v124 = vshll.u32 %v21, 16
  %v126 = vrot.slane %v124, 5
  %v127 = vsel %vm103, %v122, %v126
  %v128 = vshrl.u32 %v21, 16
  %v130 = vrot.slane %v128, 4
  %v131 = vor.u32 %v130, %v126
  %v132 = vrot.slane %v131, 4
  %v134 = vshll.u32 %v22, 16
  %v136 = vrot.slane %v134, 5
  %v137 = vsel %vm103, %v132, %v136
  %v138 = vshrl.u32 %v22, 16
  %v140 = vrot.slane %v138, 4
  %v141 = vor.u32 %v140, %v136
  %v142 = vrot.slane %v141, 4
  %v144 = vshll.u32 %v85, 16
  %v146 = vrot.slane %v144, 5
  %v147 = vsel %vm103, %v142, %v146
  %v149 = vshrl.u32 %v23, 16
  %v151 = vrot.slane %v149, 4
  %v152 = vshll.u32 %v23, 16
  %v154 = vrot.slane %v152, 5
  %v155 = vor.u32 %v151, %v154
  %v156 = vrot.slane %v155, 4
  %v158 = vshll.u32 %v24, 16
  %v160 = vrot.slane %v158, 5
  %v161 = vsel %vm103, %v156, %v160
  %v162 = vshrl.u32 %v24, 16
  %v164 = vrot.slane %v162, 4
  %v165 = vor.u32 %v164, %v160
  %v166 = vrot.slane %v165, 4
  %v168 = vshll.u32 %v25, 16
  %v170 = vrot.slane %v168, 5
  %v171 = vsel %vm103, %v166, %v170
  %v172 = vshrl.u32 %v25, 16
  %v174 = vrot.slane %v172, 4
  %v175 = vor.u32 %v174, %v170
  %v176 = vrot.slane %v175, 4
  %v178 = vshll.u32 %v26, 16
  %v180 = vrot.slane %v178, 5
  %v181 = vsel %vm103, %v176, %v180
  %v182 = vshrl.u32 %v26, 16
  %v184 = vrot.slane %v182, 4
  %v185 = vor.u32 %v184, %v180
  %v186 = vrot.slane %v185, 4
  %v188 = vshll.u32 %v86, 16
  %v190 = vrot.slane %v188, 5
  %v191 = vsel %vm103, %v186, %v190
  %v193 = vshrl.u32 %v27, 16
  %v195 = vrot.slane %v193, 4
  %v196 = vshll.u32 %v27, 16
  %v198 = vrot.slane %v196, 5
  %v199 = vor.u32 %v195, %v198
  %v200 = vrot.slane %v199, 4
  %v202 = vshll.u32 %v28, 16
  %v204 = vrot.slane %v202, 5
  %v205 = vsel %vm103, %v200, %v204
  %v206 = vshrl.u32 %v28, 16
  %v208 = vrot.slane %v206, 4
  %v209 = vor.u32 %v208, %v204
  %v210 = vrot.slane %v209, 4
  %v212 = vshll.u32 %v29, 16
  %v214 = vrot.slane %v212, 5
  %v215 = vsel %vm103, %v210, %v214
  %v216 = vshrl.u32 %v29, 16
  %v218 = vrot.slane %v216, 4
  %v219 = vor.u32 %v218, %v214
  %v220 = vrot.slane %v219, 4
  %v222 = vshll.u32 %v30, 16
  %v224 = vrot.slane %v222, 5
  %v225 = vsel %vm103, %v220, %v224
  %v226 = vshrl.u32 %v30, 16
  %v228 = vrot.slane %v226, 4
  %v229 = vor.u32 %v228, %v224
  %v230 = vrot.slane %v229, 4
  %v232 = vshll.u32 %v87, 16
  %v234 = vrot.slane %v232, 5
  %v235 = vsel %vm103, %v230, %v234
  %v237 = vshrl.u32 %v31, 16
  %v239 = vrot.slane %v237, 4
  %v240 = vshll.u32 %v31, 16
  %v242 = vrot.slane %v240, 5
  %v243 = vor.u32 %v239, %v242
  %v244 = vrot.slane %v243, 4
  %v246 = vshll.u32 %v32, 16
  %v248 = vrot.slane %v246, 5
  %v249 = vsel %vm103, %v244, %v248
  %v250 = vshrl.u32 %v32, 16
  %v252 = vrot.slane %v250, 4
  %v253 = vor.u32 %v252, %v248
  %v254 = vrot.slane %v253, 4
  %v256 = vshll.u32 %v33, 16
  %v258 = vrot.slane %v256, 5
  %v259 = vsel %vm103, %v254, %v258
  %v260 = vshrl.u32 %v33, 16
  %v262 = vrot.slane %v260, 4
  %v263 = vor.u32 %v262, %v258
  %v264 = vrot.slane %v263, 4
  %v266 = vshll.u32 %v34, 16
  %v268 = vrot.slane %v266, 5
  %v269 = vsel %vm103, %v264, %v268
  %v270 = vshrl.u32 %v34, 16
  %v272 = vrot.slane %v270, 4
  %v273 = vor.u32 %v272, %v268
  %v274 = vrot.slane %v273, 4
  %v276 = vshll.u32 %v88, 16
  %v278 = vrot.slane %v276, 5
  %v279 = vsel %vm103, %v274, %v278
  %v281 = vshrl.u32 %v35, 16
  %v283 = vrot.slane %v281, 4
  %v284 = vshll.u32 %v35, 16
  %v286 = vrot.slane %v284, 5
  %v287 = vor.u32 %v283, %v286
  %v288 = vrot.slane %v287, 4
  %v290 = vshll.u32 %v36, 16
  %v292 = vrot.slane %v290, 5
  %v293 = vsel %vm103, %v288, %v292
  %v294 = vshrl.u32 %v36, 16
  %v296 = vrot.slane %v294, 4
  %v297 = vor.u32 %v296, %v292
  %v298 = vrot.slane %v297, 4
  %v300 = vshll.u32 %v37, 16
  %v302 = vrot.slane %v300, 5
  %v303 = vsel %vm103, %v298, %v302
  %v304 = vshrl.u32 %v37, 16
  %v306 = vrot.slane %v304, 4
  %v307 = vor.u32 %v306, %v302
  %v308 = vrot.slane %v307, 4
  %v310 = vshll.u32 %v38, 16
  %v312 = vrot.slane %v310, 5
  %v313 = vsel %vm103, %v308, %v312
  %v314 = vshrl.u32 %v38, 16
  %v316 = vrot.slane %v314, 4
  %v317 = vor.u32 %v316, %v312
  %v318 = vrot.slane %v317, 4
  %v320 = vshll.u32 %v89, 16
  %v322 = vrot.slane %v320, 5
  %v323 = vsel %vm103, %v318, %v322
  %v325 = vshrl.u32 %v39, 16
  %v327 = vrot.slane %v325, 4
  %v328 = vshll.u32 %v39, 16
  %v330 = vrot.slane %v328, 5
  %v331 = vor.u32 %v327, %v330
  %v332 = vrot.slane %v331, 4
  %v334 = vshll.u32 %v40, 16
  %v336 = vrot.slane %v334, 5
  %v337 = vsel %vm103, %v332, %v336
  %v338 = vshrl.u32 %v40, 16
  %v340 = vrot.slane %v338, 4
  %v341 = vor.u32 %v340, %v336
  %v342 = vrot.slane %v341, 4
  %v344 = vshll.u32 %v41, 16
  %v346 = vrot.slane %v344, 5
  %v347 = vsel %vm103, %v342, %v346
  %v348 = vshrl.u32 %v41, 16
  %v350 = vrot.slane %v348, 4
  %v351 = vor.u32 %v350, %v346
  %v352 = vrot.slane %v351, 4
  %v354 = vshll.u32 %v42, 16
  %v356 = vrot.slane %v354, 5
  %v357 = vsel %vm103, %v352, %v356
  %v358 = vshrl.u32 %v42, 16
  %v360 = vrot.slane %v358, 4
  %v361 = vor.u32 %v360, %v356
  %v362 = vrot.slane %v361, 4
  %v364 = vshll.u32 %v90, 16
  %v366 = vrot.slane %v364, 5
  %v367 = vsel %vm103, %v362, %v366
  %v369 = vshrl.u32 %v43, 16
  %v371 = vrot.slane %v369, 4
  %v372 = vshll.u32 %v43, 16
  %v374 = vrot.slane %v372, 5
  %v375 = vor.u32 %v371, %v374
  %v376 = vrot.slane %v375, 4
  %v378 = vshll.u32 %v44, 16
  %v380 = vrot.slane %v378, 5
  %v381 = vsel %vm103, %v376, %v380
  %v382 = vshrl.u32 %v44, 16
  %v384 = vrot.slane %v382, 4
  %v385 = vor.u32 %v384, %v380
  %v386 = vrot.slane %v385, 4
  %v388 = vshll.u32 %v45, 16
  %v390 = vrot.slane %v388, 5
  %v391 = vsel %vm103, %v386, %v390
  %v392 = vshrl.u32 %v45, 16
  %v394 = vrot.slane %v392, 4
  %v395 = vor.u32 %v394, %v390
  %v396 = vrot.slane %v395, 4
  %v398 = vshll.u32 %v46, 16
  %v400 = vrot.slane %v398, 5
  %v401 = vsel %vm103, %v396, %v400
  %v402 = vshrl.u32 %v46, 16
  %v404 = vrot.slane %v402, 4
  %v405 = vor.u32 %v404, %v400
  %v406 = vrot.slane %v405, 4
  %v408 = vshll.u32 %v91, 16
  %v410 = vrot.slane %v408, 5
  %v411 = vsel %vm103, %v406, %v410
  %v413 = vshrl.u32 %v47, 16
  %v415 = vrot.slane %v413, 4
  %v416 = vshll.u32 %v47, 16
  %v418 = vrot.slane %v416, 5
  %v419 = vor.u32 %v415, %v418
  %v420 = vrot.slane %v419, 4
  %v422 = vshll.u32 %v48, 16
  %v424 = vrot.slane %v422, 5
  %v425 = vsel %vm103, %v420, %v424
  %v426 = vshrl.u32 %v48, 16
  %v428 = vrot.slane %v426, 4
  %v429 = vor.u32 %v428, %v424
  %v430 = vrot.slane %v429, 4
  %v432 = vshll.u32 %v49, 16
  %v434 = vrot.slane %v432, 5
  %v435 = vsel %vm103, %v430, %v434
  %v436 = vshrl.u32 %v49, 16
  %v438 = vrot.slane %v436, 4
  %v439 = vor.u32 %v438, %v434
  %v440 = vrot.slane %v439, 4
  %v442 = vshll.u32 %v50, 16
  %v444 = vrot.slane %v442, 5
  %v445 = vsel %vm103, %v440, %v444
  %v446 = vshrl.u32 %v50, 16
  %v448 = vrot.slane %v446, 4
  %v449 = vor.u32 %v448, %v444
  %v450 = vrot.slane %v449, 4
  %v452 = vshll.u32 %v92, 16
  %v454 = vrot.slane %v452, 5
  %v455 = vsel %vm103, %v450, %v454
  %v457 = vshrl.u32 %v51, 16
  %v459 = vrot.slane %v457, 4
  %v460 = vshll.u32 %v51, 16
  %v462 = vrot.slane %v460, 5
  %v463 = vor.u32 %v459, %v462
  %v464 = vrot.slane %v463, 4
  %v466 = vshll.u32 %v52, 16
  %v468 = vrot.slane %v466, 5
  %v469 = vsel %vm103, %v464, %v468
  %v470 = vshrl.u32 %v52, 16
  %v472 = vrot.slane %v470, 4
  %v473 = vor.u32 %v472, %v468
  %v474 = vrot.slane %v473, 4
  %v476 = vshll.u32 %v53, 16
  %v478 = vrot.slane %v476, 5
  %v479 = vsel %vm103, %v474, %v478
  %v480 = vshrl.u32 %v53, 16
  %v482 = vrot.slane %v480, 4
  %v483 = vor.u32 %v482, %v478
  %v484 = vrot.slane %v483, 4
  %v486 = vshll.u32 %v54, 16
  %v488 = vrot.slane %v486, 5
  %v489 = vsel %vm103, %v484, %v488
  %v490 = vshrl.u32 %v54, 16
  %v492 = vrot.slane %v490, 4
  %v493 = vor.u32 %v492, %v488
  %v494 = vrot.slane %v493, 4
  %v496 = vshll.u32 %v93, 16
  %v498 = vrot.slane %v496, 5
  %v499 = vsel %vm103, %v494, %v498
  %v501 = vshrl.u32 %v55, 16
  %v503 = vrot.slane %v501, 4
  %v504 = vshll.u32 %v55, 16
  %v506 = vrot.slane %v504, 5
  %v507 = vor.u32 %v503, %v506
  %v508 = vrot.slane %v507, 4
  %v510 = vshll.u32 %v56, 16
  %v512 = vrot.slane %v510, 5
  %v513 = vsel %vm103, %v508, %v512
  %v514 = vshrl.u32 %v56, 16
  %v516 = vrot.slane %v514, 4
  %v517 = vor.u32 %v516, %v512
  %v518 = vrot.slane %v517, 4
  %v520 = vshll.u32 %v57, 16
  %v522 = vrot.slane %v520, 5
  %v523 = vsel %vm103, %v518, %v522
  %v524 = vshrl.u32 %v57, 16
  %v526 = vrot.slane %v524, 4
  %v527 = vor.u32 %v526, %v522
  %v528 = vrot.slane %v527, 4
  %v530 = vshll.u32 %v58, 16
  %v532 = vrot.slane %v530, 5
  %v533 = vsel %vm103, %v528, %v532
  %v534 = vshrl.u32 %v58, 16
  %v536 = vrot.slane %v534, 4
  %v537 = vor.u32 %v536, %v532
  %v538 = vrot.slane %v537, 4
  %v540 = vshll.u32 %v94, 16
  %v542 = vrot.slane %v540, 5
  %v543 = vsel %vm103, %v538, %v542
  %v545 = vshrl.u32 %v59, 16
  %v547 = vrot.slane %v545, 4
  %v548 = vshll.u32 %v59, 16
  %v550 = vrot.slane %v548, 5
  %v551 = vor.u32 %v547, %v550
  %v552 = vrot.slane %v551, 4
  %v554 = vshll.u32 %v60, 16
  %v556 = vrot.slane %v554, 5
  %v557 = vsel %vm103, %v552, %v556
  %v558 = vshrl.u32 %v60, 16
  %v560 = vrot.slane %v558, 4
  %v561 = vor.u32 %v560, %v556
  %v562 = vrot.slane %v561, 4
  %v564 = vshll.u32 %v61, 16
  %v566 = vrot.slane %v564, 5
  %v567 = vsel %vm103, %v562, %v566
  %v568 = vshrl.u32 %v61, 16
  %v570 = vrot.slane %v568, 4
  %v571 = vor.u32 %v570, %v566
  %v572 = vrot.slane %v571, 4
  %v574 = vshll.u32 %v62, 16
  %v576 = vrot.slane %v574, 5
  %v577 = vsel %vm103, %v572, %v576
  %v578 = vshrl.u32 %v62, 16
  %v580 = vrot.slane %v578, 4
  %v581 = vor.u32 %v580, %v576
  %v582 = vrot.slane %v581, 4
  %v584 = vshll.u32 %v95, 16
  %v586 = vrot.slane %v584, 5
  %v587 = vsel %vm103, %v582, %v586
  %v589 = vshrl.u32 %v63, 16
  %v591 = vrot.slane %v589, 4
  %v592 = vshll.u32 %v63, 16
  %v594 = vrot.slane %v592, 5
  %v595 = vor.u32 %v591, %v594
  %v596 = vrot.slane %v595, 4
  %v598 = vshll.u32 %v64, 16
  %v600 = vrot.slane %v598, 5
  %v601 = vsel %vm103, %v596, %v600
  %v602 = vshrl.u32 %v64, 16
  %v604 = vrot.slane %v602, 4
  %v605 = vor.u32 %v604, %v600
  %v606 = vrot.slane %v605, 4
  %v608 = vshll.u32 %v65, 16
  %v610 = vrot.slane %v608, 5
  %v611 = vsel %vm103, %v606, %v610
  %v612 = vshrl.u32 %v65, 16
  %v614 = vrot.slane %v612, 4
  %v615 = vor.u32 %v614, %v610
  %v616 = vrot.slane %v615, 4
  %v618 = vshll.u32 %v66, 16
  %v620 = vrot.slane %v618, 5
  %v621 = vsel %vm103, %v616, %v620
  %v622 = vshrl.u32 %v66, 16
  %v624 = vrot.slane %v622, 4
  %v625 = vor.u32 %v624, %v620
  %v626 = vrot.slane %v625, 4
  %v628 = vshll.u32 %v96, 16
  %v630 = vrot.slane %v628, 5
  %v631 = vsel %vm103, %v626, %v630
  %v633 = vshrl.u32 %v67, 16
  %v635 = vrot.slane %v633, 4
  %v636 = vshll.u32 %v67, 16
  %v638 = vrot.slane %v636, 5
  %v639 = vor.u32 %v635, %v638
  %v640 = vrot.slane %v639, 4
  %v642 = vshll.u32 %v68, 16
  %v644 = vrot.slane %v642, 5
  %v645 = vsel %vm103, %v640, %v644
  %v646 = vshrl.u32 %v68, 16
  %v648 = vrot.slane %v646, 4
  %v649 = vor.u32 %v648, %v644
  %v650 = vrot.slane %v649, 4
  %v652 = vshll.u32 %v69, 16
  %v654 = vrot.slane %v652, 5
  %v655 = vsel %vm103, %v650, %v654
  %v656 = vshrl.u32 %v69, 16
  %v658 = vrot.slane %v656, 4
  %v659 = vor.u32 %v658, %v654
  %v660 = vrot.slane %v659, 4
  %v662 = vshll.u32 %v70, 16
  %v664 = vrot.slane %v662, 5
  %v665 = vsel %vm103, %v660, %v664
  %v666 = vshrl.u32 %v70, 16
  %v668 = vrot.slane %v666, 4
  %v669 = vor.u32 %v668, %v664
  %v670 = vrot.slane %v669, 4
  %v672 = vshll.u32 %v97, 16
  %v674 = vrot.slane %v672, 5
  %v675 = vsel %vm103, %v670, %v674
  %v677 = vshrl.u32 %v71, 16
  %v679 = vrot.slane %v677, 4
  %v680 = vshll.u32 %v71, 16
  %v682 = vrot.slane %v680, 5
  %v683 = vor.u32 %v679, %v682
  %v684 = vrot.slane %v683, 4
  %v686 = vshll.u32 %v72, 16
  %v688 = vrot.slane %v686, 5
  %v689 = vsel %vm103, %v684, %v688
  %v690 = vshrl.u32 %v72, 16
  %v692 = vrot.slane %v690, 4
  %v693 = vor.u32 %v692, %v688
  %v694 = vrot.slane %v693, 4
  %v696 = vshll.u32 %v73, 16
  %v698 = vrot.slane %v696, 5
  %v699 = vsel %vm103, %v694, %v698
  %v700 = vshrl.u32 %v73, 16
  %v702 = vrot.slane %v700, 4
  %v703 = vor.u32 %v702, %v698
  %v704 = vrot.slane %v703, 4
  %v706 = vshll.u32 %v74, 16
  %v708 = vrot.slane %v706, 5
  %v709 = vsel %vm103, %v704, %v708
  %v710 = vshrl.u32 %v74, 16
  %v712 = vrot.slane %v710, 4
  %v713 = vor.u32 %v712, %v708
  %v714 = vrot.slane %v713, 4
  %v716 = vshll.u32 %v98, 16
  %v718 = vrot.slane %v716, 5
  %v719 = vsel %vm103, %v714, %v718
  %v721 = vshrl.u32 %v75, 16
  %v723 = vrot.slane %v721, 4
  %v724 = vshll.u32 %v75, 16
  %v726 = vrot.slane %v724, 5
  %v727 = vor.u32 %v723, %v726
  %v728 = vrot.slane %v727, 4
  %v730 = vshll.u32 %v76, 16
  %v732 = vrot.slane %v730, 5
  %v733 = vsel %vm103, %v728, %v732
  %v734 = vshrl.u32 %v76, 16
  %v736 = vrot.slane %v734, 4
  %v737 = vor.u32 %v736, %v732
  %v738 = vrot.slane %v737, 4
  %v740 = vshll.u32 %v77, 16
  %v742 = vrot.slane %v740, 5
  %v743 = vsel %vm103, %v738, %v742
  %v744 = vshrl.u32 %v77, 16
  %v746 = vrot.slane %v744, 4
  %v747 = vor.u32 %v746, %v742
  %v748 = vrot.slane %v747, 4
  %v750 = vshll.u32 %v78, 16
  %v752 = vrot.slane %v750, 5
  %v753 = vsel %vm103, %v748, %v752
  %v754 = vshrl.u32 %v78, 16
  %v756 = vrot.slane %v754, 4
  %v757 = vor.u32 %v756, %v752
  %v758 = vrot.slane %v757, 4
  %v760 = vshll.u32 %v99, 16
  %v762 = vrot.slane %v760, 5
  %v763 = vsel %vm103, %v758, %v762
  %v765 = vshrl.u32 %v79, 16
  %v767 = vrot.slane %v765, 4
  %v768 = vshll.u32 %v79, 16
  %v770 = vrot.slane %v768, 5
  %v771 = vor.u32 %v767, %v770
  %v772 = vrot.slane %v771, 4
  %v774 = vshll.u32 %v80, 16
  %v776 = vrot.slane %v774, 5
  %v777 = vsel %vm103, %v772, %v776
  %v778 = vshrl.u32 %v80, 16
  %v780 = vrot.slane %v778, 4
  %v781 = vor.u32 %v780, %v776
  %v782 = vrot.slane %v781, 4
  %v784 = vshll.u32 %v81, 16
  %v786 = vrot.slane %v784, 5
  %v787 = vsel %vm103, %v782, %v786
  %v788 = vshrl.u32 %v81, 16
  %v790 = vrot.slane %v788, 4
  %v791 = vor.u32 %v790, %v786
  %v792 = vrot.slane %v791, 4
  %v794 = vshll.u32 %v82, 16
  %v796 = vrot.slane %v794, 5
  %v797 = vsel %vm103, %v792, %v796
  %v798 = vshrl.u32 %v82, 16
  %v800 = vrot.slane %v798, 4
  %v801 = vor.u32 %v800, %v796
  %v802 = vrot.slane %v801, 4
  %v804 = vshll.u32 %v100, 16
  %v806 = vrot.slane %v804, 5
  %v807 = vsel %vm103, %v802, %v806
  %s808 = scalar_lea.vmem %s1, 8
  %v809 = vld [vmem:[%s808] sm:$0xf]
  %v810 = vld [vmem:[%s808 + $0x4] sm:$0x3]
  %v811 = vunpack.c.l.b16 %v117
  %v812 = vunpack.c.l.b16 %v127
  %v813 = vunpack.c.l.b16 %v137
  %v814 = vunpack.c.l.b16 %v147
  %v815 = vunpack.c.l.b16 %v161
  %v816 = vunpack.c.l.b16 %v171
  %v817 = vunpack.c.l.b16 %v181
  %v818 = vunpack.c.l.b16 %v191
  %v819 = vunpack.c.l.b16 %v205
  %v820 = vunpack.c.l.b16 %v215
  %v821 = vunpack.c.l.b16 %v225
  %v822 = vunpack.c.l.b16 %v235
  %v823 = vunpack.c.l.b16 %v249
  %v824 = vunpack.c.l.b16 %v259
  %v825 = vunpack.c.l.b16 %v269
  %v826 = vunpack.c.l.b16 %v279
  %v827 = vunpack.c.l.b16 %v293
  %v828 = vunpack.c.l.b16 %v303
  %v829 = vunpack.c.l.b16 %v313
  %v830 = vunpack.c.l.b16 %v323
  %v831 = vunpack.c.l.b16 %v337
  %v832 = vunpack.c.l.b16 %v347
  %v833 = vunpack.c.l.b16 %v357
  %v834 = vunpack.c.l.b16 %v367
  %v835 = vunpack.c.l.b16 %v381
  %v836 = vunpack.c.l.b16 %v391
  %v837 = vunpack.c.l.b16 %v401
  %v838 = vunpack.c.l.b16 %v411
  %v839 = vunpack.c.l.b16 %v425
  %v840 = vunpack.c.l.b16 %v435
  %v841 = vunpack.c.l.b16 %v445
  %v842 = vunpack.c.l.b16 %v455
  %v843 = vunpack.c.l.b16 %v469
  %v844 = vunpack.c.l.b16 %v479
  %v845 = vunpack.c.l.b16 %v489
  %v846 = vunpack.c.l.b16 %v499
  %v847 = vunpack.c.l.b16 %v513
  %v848 = vunpack.c.l.b16 %v523
  %v849 = vunpack.c.l.b16 %v533
  %v850 = vunpack.c.l.b16 %v543
  %v851 = vunpack.c.l.b16 %v557
  %v852 = vunpack.c.l.b16 %v567
  %v853 = vunpack.c.l.b16 %v577
  %v854 = vunpack.c.l.b16 %v587
  %v855 = vunpack.c.l.b16 %v601
  %v856 = vunpack.c.l.b16 %v611
  %v857 = vunpack.c.l.b16 %v621
  %v858 = vunpack.c.l.b16 %v631
  %v859 = vunpack.c.l.b16 %v645
  %v860 = vunpack.c.l.b16 %v655
  %v861 = vunpack.c.l.b16 %v665
  %v862 = vunpack.c.l.b16 %v675
  %v863 = vunpack.c.l.b16 %v689
  %v864 = vunpack.c.l.b16 %v699
  %v865 = vunpack.c.l.b16 %v709
  %v866 = vunpack.c.l.b16 %v719
  %v867 = vunpack.c.l.b16 %v733
  %v868 = vunpack.c.l.b16 %v743
  %v869 = vunpack.c.l.b16 %v753
  %v870 = vunpack.c.l.b16 %v763
  %v871 = vunpack.c.l.b16 %v777
  %v872 = vunpack.c.l.b16 %v787
  %v873 = vunpack.c.l.b16 %v797
  %v874 = vunpack.c.l.b16 %v807
  %v875 = vpack.c.b16 %v812, %v811
  %v876 = vpack.c.b16 %v814, %v813
  %v877 = vpack.c.b16 %v816, %v815
  %v878 = vpack.c.b16 %v818, %v817
  %v879 = vpack.c.b16 %v820, %v819
  %v880 = vpack.c.b16 %v822, %v821
  %v881 = vpack.c.b16 %v824, %v823
  %v882 = vpack.c.b16 %v826, %v825
  %v883 = vpack.c.b16 %v828, %v827
  %v884 = vpack.c.b16 %v830, %v829
  %v885 = vpack.c.b16 %v832, %v831
  %v886 = vpack.c.b16 %v834, %v833
  %v887 = vpack.c.b16 %v836, %v835
  %v888 = vpack.c.b16 %v838, %v837
  %v889 = vpack.c.b16 %v840, %v839
  %v890 = vpack.c.b16 %v842, %v841
  %v891 = vpack.c.b16 %v844, %v843
  %v892 = vpack.c.b16 %v846, %v845
  %v893 = vpack.c.b16 %v848, %v847
  %v894 = vpack.c.b16 %v850, %v849
  %v895 = vpack.c.b16 %v852, %v851
  %v896 = vpack.c.b16 %v854, %v853
  %v897 = vpack.c.b16 %v856, %v855
  %v898 = vpack.c.b16 %v858, %v857
  %v899 = vpack.c.b16 %v860, %v859
  %v900 = vpack.c.b16 %v862, %v861
  %v901 = vpack.c.b16 %v864, %v863
  %v902 = vpack.c.b16 %v866, %v865
  %v903 = vpack.c.b16 %v868, %v867
  %v904 = vpack.c.b16 %v870, %v869
  %v905 = vpack.c.b16 %v872, %v871
  %v906 = vpack.c.b16 %v874, %v873
  %v909 = vunpack.c.l.b16 %v809
  %v910 = vunpack.c.l.b16 %v810
  %v911 = vpack.c.b16 %v910, %v909
  %vm912 = vcmask 97280
  %v914 = vsel %vm912, %v875, 0
  %v917 = vsel %vm912, %v876, 0
  %v920 = vsel %vm912, %v877, 0
  %v923 = vsel %vm912, %v878, 0
  %v926 = vsel %vm912, %v879, 0
  %v929 = vsel %vm912, %v880, 0
  %v932 = vsel %vm912, %v881, 0
  %v935 = vsel %vm912, %v882, 0
  %v938 = vsel %vm912, %v883, 0
  %v941 = vsel %vm912, %v884, 0
  %v944 = vsel %vm912, %v885, 0
  %v947 = vsel %vm912, %v886, 0
  %v950 = vsel %vm912, %v887, 0
  %v953 = vsel %vm912, %v888, 0
  %v956 = vsel %vm912, %v889, 0
  %v959 = vsel %vm912, %v890, 0
  %v962 = vsel %vm912, %v891, 0
  %v965 = vsel %vm912, %v892, 0
  %v968 = vsel %vm912, %v893, 0
  %v971 = vsel %vm912, %v894, 0
  %v974 = vsel %vm912, %v895, 0
  %v977 = vsel %vm912, %v896, 0
  %v980 = vsel %vm912, %v897, 0
  %v983 = vsel %vm912, %v898, 0
  %v986 = vsel %vm912, %v899, 0
  %v989 = vsel %vm912, %v900, 0
  %v992 = vsel %vm912, %v901, 0
  %v995 = vsel %vm912, %v902, 0
  %v998 = vsel %vm912, %v903, 0
  %v1001 = vsel %vm912, %v904, 0
  %v1004 = vsel %vm912, %v905, 0
  %v1007 = vsel %vm912, %v906, 0
  %vm1009 = vcmask 1045504
  %v1011 = vsel %vm1009, %v911, 0
  %1013 = vmatprep.subr.bf16.mxu0 0
  %1014 = vmatpush1.bf16.msra.mxu0 %v1011
  %1015 = vmatprep.subr.bf16.mxu0 0
  %1016 = vmatpush1.bf16.msra.mxu0 0
  %1017 = vmatprep.subr.bf16.mxu0 0
  %1018 = vmatpush1.bf16.msra.mxu0 0
  %1019 = vmatprep.subr.bf16.mxu0 0
  %1020 = vmatpush1.bf16.msra.mxu0 0
  %1021 = vmatprep.subr.bf16.mxu0 0
  %1022 = vmatpush1.bf16.msra.mxu0 0
  %1023 = vmatprep.subr.bf16.mxu0 0
  %1024 = vmatpush1.bf16.msra.mxu0 0
  %1025 = vmatprep.subr.bf16.mxu0 0
  %1026 = vmatpush1.bf16.msra.mxu0 0
  %1027 = vmatprep.subr.bf16.mxu0 0
  %1028 = vmatpush1.bf16.msra.mxu0 0
  %1029 = vmatprep.subr.bf16.mxu0 0
  %1030 = vmatpush1.bf16.msra.mxu0 0
  %1031 = vmatprep.subr.bf16.mxu0 0
  %1032 = vmatpush1.bf16.msra.mxu0 0
  %1033 = vmatprep.subr.bf16.mxu0 0
  %1034 = vmatpush1.bf16.msra.mxu0 0
  %1035 = vmatprep.subr.bf16.mxu0 0
  %1036 = vmatpush1.bf16.msra.mxu0 0
  %1037 = vmatprep.subr.bf16.mxu0 0
  %1038 = vmatpush1.bf16.msra.mxu0 0
  %1039 = vmatprep.subr.bf16.mxu0 0
  %1040 = vmatpush1.bf16.msra.mxu0 0
  %1041 = vmatprep.subr.bf16.mxu0 0
  %1042 = vmatpush1.bf16.msra.mxu0 0
  %1043 = vmatprep.subr.bf16.mxu0 0
  %1044 = vmatpush1.bf16.msra.mxu0 0
  %1045 = vmatprep.mubr.bf16.mxu0 0
  %1046 = vmatmul.mubr.bf16.gmra.mrb[0].mxu0 %v914
  %v1047 = vpop.f32.mrb[0].mxu0
  %v1048 = vadd.f32 0.0, %v1047
  %v1049 = vpop.f32.mrb[0].mxu0
  %v1050 = vpop.f32.mrb[0].mxu0
  %v1051 = vadd.f32 0.0, %v1050
  %v1052 = vpop.f32.mrb[0].mxu0
  %1053 = vmatprep.mubr.bf16.mxu0 0
  %1054 = vmatmul.mubr.bf16.gmra.mrb[0].mxu0 %v917
  %v1055 = vpop.f32.mrb[0].mxu0
  %v1056 = vadd.f32 0.0, %v1055
  %v1057 = vpop.f32.mrb[0].mxu0
  %v1058 = vpop.f32.mrb[0].mxu0
  %v1059 = vadd.f32 0.0, %v1058
  %v1060 = vpop.f32.mrb[0].mxu0
  %1061 = vmatprep.mubr.bf16.mxu0 0
  %1062 = vmatmul.mubr.bf16.gmra.mrb[0].mxu0 %v920
  %v1063 = vpop.f32.mrb[0].mxu0
  %v1064 = vadd.f32 0.0, %v1063
  %v1065 = vpop.f32.mrb[0].mxu0
  %v1066 = vpop.f32.mrb[0].mxu0
  %v1067 = vadd.f32 0.0, %v1066
  %v1068 = vpop.f32.mrb[0].mxu0
  %1069 = vmatprep.mubr.bf16.mxu0 0
  %1070 = vmatmul.mubr.bf16.gmra.mrb[0].mxu0 %v923
  %v1071 = vpop.f32.mrb[0].mxu0
  %v1072 = vadd.f32 0.0, %v1071
  %v1073 = vpop.f32.mrb[0].mxu0
  %v1074 = vpop.f32.mrb[0].mxu0
  %v1075 = vadd.f32 0.0, %v1074
  %v1076 = vpop.f32.mrb[0].mxu0
  %1077 = vmatprep.mubr.bf16.mxu0 0
  %1078 = vmatmul.mubr.bf16.gmra.mrb[0].mxu0 %v926
  %v1079 = vpop.f32.mrb[0].mxu0
  %v1080 = vadd.f32 0.0, %v1079
  %v1081 = vpop.f32.mrb[0].mxu0
  %v1082 = vpop.f32.mrb[0].mxu0
  %v1083 = vadd.f32 0.0, %v1082
  %v1084 = vpop.f32.mrb[0].mxu0
  %1085 = vmatprep.mubr.bf16.mxu0 0
  %1086 = vmatmul.mubr.bf16.gmra.mrb[0].mxu0 %v929
  %v1087 = vpop.f32.mrb[0].mxu0
  %v1088 = vadd.f32 0.0, %v1087
  %v1089 = vpop.f32.mrb[0].mxu0
  %v1090 = vpop.f32.mrb[0].mxu0
  %v1091 = vadd.f32 0.0, %v1090
  %v1092 = vpop.f32.mrb[0].mxu0
  %1093 = vmatprep.mubr.bf16.mxu0 0
  %1094 = vmatmul.mubr.bf16.gmra.mrb[0].mxu0 %v932
  %v1095 = vpop.f32.mrb[0].mxu0
  %v1096 = vadd.f32 0.0, %v1095
  %v1097 = vpop.f32.mrb[0].mxu0
  %v1098 = vpop.f32.mrb[0].mxu0
  %v1099 = vadd.f32 0.0, %v1098
  %v1100 = vpop.f32.mrb[0].mxu0
  %1101 = vmatprep.mubr.bf16.mxu0 0
  %1102 = vmatmul.mubr.bf16.gmra.mrb[0].mxu0 %v935
  %v1103 = vpop.f32.mrb[0].mxu0
  %v1104 = vadd.f32 0.0, %v1103
  %v1105 = vpop.f32.mrb[0].mxu0
  %v1106 = vpop.f32.mrb[0].mxu0
  %v1107 = vadd.f32 0.0, %v1106
  %v1108 = vpop.f32.mrb[0].mxu0
  %1109 = vmatprep.mubr.bf16.mxu0 0
  %1110 = vmatmul.mubr.bf16.gmra.mrb[0].mxu0 %v938
  %v1111 = vpop.f32.mrb[0].mxu0
  %v1112 = vadd.f32 0.0, %v1111
  %v1113 = vpop.f32.mrb[0].mxu0
  %v1114 = vpop.f32.mrb[0].mxu0
  %v1115 = vadd.f32 0.0, %v1114
  %v1116 = vpop.f32.mrb[0].mxu0
  %1117 = vmatprep.mubr.bf16.mxu0 0
  %1118 = vmatmul.mubr.bf16.gmra.mrb[0].mxu0 %v941
  %v1119 = vpop.f32.mrb[0].mxu0
  %v1120 = vadd.f32 0.0, %v1119
  %v1121 = vpop.f32.mrb[0].mxu0
  %v1122 = vpop.f32.mrb[0].mxu0
  %v1123 = vadd.f32 0.0, %v1122
  %v1124 = vpop.f32.mrb[0].mxu0
  %1125 = vmatprep.mubr.bf16.mxu0 0
  %1126 = vmatmul.mubr.bf16.gmra.mrb[0].mxu0 %v944
  %v1127 = vpop.f32.mrb[0].mxu0
  %v1128 = vadd.f32 0.0, %v1127
  %v1129 = vpop.f32.mrb[0].mxu0
  %v1130 = vpop.f32.mrb[0].mxu0
  %v1131 = vadd.f32 0.0, %v1130
  %v1132 = vpop.f32.mrb[0].mxu0
  %1133 = vmatprep.mubr.bf16.mxu0 0
  %1134 = vmatmul.mubr.bf16.gmra.mrb[0].mxu0 %v947
  %v1135 = vpop.f32.mrb[0].mxu0
  %v1136 = vadd.f32 0.0, %v1135
  %v1137 = vpop.f32.mrb[0].mxu0
  %v1138 = vpop.f32.mrb[0].mxu0
  %v1139 = vadd.f32 0.0, %v1138
  %v1140 = vpop.f32.mrb[0].mxu0
  %1141 = vmatprep.mubr.bf16.mxu0 0
  %1142 = vmatmul.mubr.bf16.gmra.mrb[0].mxu0 %v950
  %v1143 = vpop.f32.mrb[0].mxu0
  %v1144 = vadd.f32 0.0, %v1143
  %v1145 = vpop.f32.mrb[0].mxu0
  %v1146 = vpop.f32.mrb[0].mxu0
  %v1147 = vadd.f32 0.0, %v1146
  %v1148 = vpop.f32.mrb[0].mxu0
  %1149 = vmatprep.mubr.bf16.mxu0 0
  %1150 = vmatmul.mubr.bf16.gmra.mrb[0].mxu0 %v953
  %v1151 = vpop.f32.mrb[0].mxu0
  %v1152 = vadd.f32 0.0, %v1151
  %v1153 = vpop.f32.mrb[0].mxu0
  %v1154 = vpop.f32.mrb[0].mxu0
  %v1155 = vadd.f32 0.0, %v1154
  %v1156 = vpop.f32.mrb[0].mxu0
  %1157 = vmatprep.mubr.bf16.mxu0 0
  %1158 = vmatmul.mubr.bf16.gmra.mrb[0].mxu0 %v956
  %v1159 = vpop.f32.mrb[0].mxu0
  %v1160 = vadd.f32 0.0, %v1159
  %v1161 = vpop.f32.mrb[0].mxu0
  %v1162 = vpop.f32.mrb[0].mxu0
  %v1163 = vadd.f32 0.0, %v1162
  %v1164 = vpop.f32.mrb[0].mxu0
  %1165 = vmatprep.mubr.bf16.mxu0 0
  %1166 = vmatmul.mubr.bf16.gmra.mrb[0].mxu0 %v959
  %v1167 = vpop.f32.mrb[0].mxu0
  %v1168 = vadd.f32 0.0, %v1167
  %v1169 = vpop.f32.mrb[0].mxu0
  %v1170 = vpop.f32.mrb[0].mxu0
  %v1171 = vadd.f32 0.0, %v1170
  %v1172 = vpop.f32.mrb[0].mxu0
  %1173 = vmatprep.mubr.bf16.mxu0 0
  %1174 = vmatmul.mubr.bf16.gmra.mrb[0].mxu0 %v962
  %v1175 = vpop.f32.mrb[0].mxu0
  %v1176 = vadd.f32 0.0, %v1175
  %v1177 = vpop.f32.mrb[0].mxu0
  %v1178 = vpop.f32.mrb[0].mxu0
  %v1179 = vadd.f32 0.0, %v1178
  %v1180 = vpop.f32.mrb[0].mxu0
  %1181 = vmatprep.mubr.bf16.mxu0 0
  %1182 = vmatmul.mubr.bf16.gmra.mrb[0].mxu0 %v965
  %v1183 = vpop.f32.mrb[0].mxu0
  %v1184 = vadd.f32 0.0, %v1183
  %v1185 = vpop.f32.mrb[0].mxu0
  %v1186 = vpop.f32.mrb[0].mxu0
  %v1187 = vadd.f32 0.0, %v1186
  %v1188 = vpop.f32.mrb[0].mxu0
  %1189 = vmatprep.mubr.bf16.mxu0 0
  %1190 = vmatmul.mubr.bf16.gmra.mrb[0].mxu0 %v968
  %v1191 = vpop.f32.mrb[0].mxu0
  %v1192 = vadd.f32 0.0, %v1191
  %v1193 = vpop.f32.mrb[0].mxu0
  %v1194 = vpop.f32.mrb[0].mxu0
  %v1195 = vadd.f32 0.0, %v1194
  %v1196 = vpop.f32.mrb[0].mxu0
  %1197 = vmatprep.mubr.bf16.mxu0 0
  %1198 = vmatmul.mubr.bf16.gmra.mrb[0].mxu0 %v971
  %v1199 = vpop.f32.mrb[0].mxu0
  %v1200 = vadd.f32 0.0, %v1199
  %v1201 = vpop.f32.mrb[0].mxu0
  %v1202 = vpop.f32.mrb[0].mxu0
  %v1203 = vadd.f32 0.0, %v1202
  %v1204 = vpop.f32.mrb[0].mxu0
  %1205 = vmatprep.mubr.bf16.mxu0 0
  %1206 = vmatmul.mubr.bf16.gmra.mrb[0].mxu0 %v974
  %v1207 = vpop.f32.mrb[0].mxu0
  %v1208 = vadd.f32 0.0, %v1207
  %v1209 = vpop.f32.mrb[0].mxu0
  %v1210 = vpop.f32.mrb[0].mxu0
  %v1211 = vadd.f32 0.0, %v1210
  %v1212 = vpop.f32.mrb[0].mxu0
  %1213 = vmatprep.mubr.bf16.mxu0 0
  %1214 = vmatmul.mubr.bf16.gmra.mrb[0].mxu0 %v977
  %v1215 = vpop.f32.mrb[0].mxu0
  %v1216 = vadd.f32 0.0, %v1215
  %v1217 = vpop.f32.mrb[0].mxu0
  %v1218 = vpop.f32.mrb[0].mxu0
  %v1219 = vadd.f32 0.0, %v1218
  %v1220 = vpop.f32.mrb[0].mxu0
  %1221 = vmatprep.mubr.bf16.mxu0 0
  %1222 = vmatmul.mubr.bf16.gmra.mrb[0].mxu0 %v980
  %v1223 = vpop.f32.mrb[0].mxu0
  %v1224 = vadd.f32 0.0, %v1223
  %v1225 = vpop.f32.mrb[0].mxu0
  %v1226 = vpop.f32.mrb[0].mxu0
  %v1227 = vadd.f32 0.0, %v1226
  %v1228 = vpop.f32.mrb[0].mxu0
  %1229 = vmatprep.mubr.bf16.mxu0 0
  %1230 = vmatmul.mubr.bf16.gmra.mrb[0].mxu0 %v983
  %v1231 = vpop.f32.mrb[0].mxu0
  %v1232 = vadd.f32 0.0, %v1231
  %v1233 = vpop.f32.mrb[0].mxu0
  %v1234 = vpop.f32.mrb[0].mxu0
  %v1235 = vadd.f32 0.0, %v1234
  %v1236 = vpop.f32.mrb[0].mxu0
  %1237 = vmatprep.mubr.bf16.mxu0 0
  %1238 = vmatmul.mubr.bf16.gmra.mrb[0].mxu0 %v986
  %v1239 = vpop.f32.mrb[0].mxu0
  %v1240 = vadd.f32 0.0, %v1239
  %v1241 = vpop.f32.mrb[0].mxu0
  %v1242 = vpop.f32.mrb[0].mxu0
  %v1243 = vadd.f32 0.0, %v1242
  %v1244 = vpop.f32.mrb[0].mxu0
  %1245 = vmatprep.mubr.bf16.mxu0 0
  %1246 = vmatmul.mubr.bf16.gmra.mrb[0].mxu0 %v989
  %v1247 = vpop.f32.mrb[0].mxu0
  %v1248 = vadd.f32 0.0, %v1247
  %v1249 = vpop.f32.mrb[0].mxu0
  %v1250 = vpop.f32.mrb[0].mxu0
  %v1251 = vadd.f32 0.0, %v1250
  %v1252 = vpop.f32.mrb[0].mxu0
  %1253 = vmatprep.mubr.bf16.mxu0 0
  %1254 = vmatmul.mubr.bf16.gmra.mrb[0].mxu0 %v992
  %v1255 = vpop.f32.mrb[0].mxu0
  %v1256 = vadd.f32 0.0, %v1255
  %v1257 = vpop.f32.mrb[0].mxu0
  %v1258 = vpop.f32.mrb[0].mxu0
  %v1259 = vadd.f32 0.0, %v1258
  %v1260 = vpop.f32.mrb[0].mxu0
  %1261 = vmatprep.mubr.bf16.mxu0 0
  %1262 = vmatmul.mubr.bf16.gmra.mrb[0].mxu0 %v995
  %v1263 = vpop.f32.mrb[0].mxu0
  %v1264 = vadd.f32 0.0, %v1263
  %v1265 = vpop.f32.mrb[0].mxu0
  %v1266 = vpop.f32.mrb[0].mxu0
  %v1267 = vadd.f32 0.0, %v1266
  %v1268 = vpop.f32.mrb[0].mxu0
  %1269 = vmatprep.mubr.bf16.mxu0 0
  %1270 = vmatmul.mubr.bf16.gmra.mrb[0].mxu0 %v998
  %v1271 = vpop.f32.mrb[0].mxu0
  %v1272 = vadd.f32 0.0, %v1271
  %v1273 = vpop.f32.mrb[0].mxu0
  %v1274 = vpop.f32.mrb[0].mxu0
  %v1275 = vadd.f32 0.0, %v1274
  %v1276 = vpop.f32.mrb[0].mxu0
  %1277 = vmatprep.mubr.bf16.mxu0 0
  %1278 = vmatmul.mubr.bf16.gmra.mrb[0].mxu0 %v1001
  %v1279 = vpop.f32.mrb[0].mxu0
  %v1280 = vadd.f32 0.0, %v1279
  %v1281 = vpop.f32.mrb[0].mxu0
  %v1282 = vpop.f32.mrb[0].mxu0
  %v1283 = vadd.f32 0.0, %v1282
  %v1284 = vpop.f32.mrb[0].mxu0
  %1285 = vmatprep.mubr.bf16.mxu0 0
  %1286 = vmatmul.mubr.bf16.gmra.mrb[0].mxu0 %v1004
  %v1287 = vpop.f32.mrb[0].mxu0
  %v1288 = vadd.f32 0.0, %v1287
  %v1289 = vpop.f32.mrb[0].mxu0
  %v1290 = vpop.f32.mrb[0].mxu0
  %v1291 = vadd.f32 0.0, %v1290
  %v1292 = vpop.f32.mrb[0].mxu0
  %1293 = vmatprep.mubr.bf16.mxu0 0
  %1294 = vmatmul.mubr.bf16.gmra.mrb[0].mxu0 %v1007
  %v1295 = vpop.f32.mrb[0].mxu0
  %v1296 = vadd.f32 0.0, %v1295
  %v1297 = vpop.f32.mrb[0].mxu0
  %v1298 = vpop.f32.mrb[0].mxu0
  %v1299 = vadd.f32 0.0, %v1298
  %v1300 = vpop.f32.mrb[0].mxu0
  %1301 = vdwg.mxu0
  %v1366 = vunpack.c.l.b16 %v19
  %v1367 = vunpack.c.l.b16 %v20
  %v1368 = vunpack.c.l.b16 %v21
  %v1369 = vunpack.c.l.b16 %v22
  %v1370 = vunpack.c.l.b16 %v23
  %v1371 = vunpack.c.l.b16 %v24
  %v1372 = vunpack.c.l.b16 %v25
  %v1373 = vunpack.c.l.b16 %v26
  %v1374 = vunpack.c.l.b16 %v27
  %v1375 = vunpack.c.l.b16 %v28
  %v1376 = vunpack.c.l.b16 %v29
  %v1377 = vunpack.c.l.b16 %v30
  %v1378 = vunpack.c.l.b16 %v31
  %v1379 = vunpack.c.l.b16 %v32
  %v1380 = vunpack.c.l.b16 %v33
  %v1381 = vunpack.c.l.b16 %v34
  %v1382 = vunpack.c.l.b16 %v35
  %v1383 = vunpack.c.l.b16 %v36
  %v1384 = vunpack.c.l.b16 %v37
  %v1385 = vunpack.c.l.b16 %v38
  %v1386 = vunpack.c.l.b16 %v39
  %v1387 = vunpack.c.l.b16 %v40
  %v1388 = vunpack.c.l.b16 %v41
  %v1389 = vunpack.c.l.b16 %v42
  %v1390 = vunpack.c.l.b16 %v43
  %v1391 = vunpack.c.l.b16 %v44
  %v1392 = vunpack.c.l.b16 %v45
  %v1393 = vunpack.c.l.b16 %v46
  %v1394 = vunpack.c.l.b16 %v47
  %v1395 = vunpack.c.l.b16 %v48
  %v1396 = vunpack.c.l.b16 %v49
  %v1397 = vunpack.c.l.b16 %v50
  %v1398 = vunpack.c.l.b16 %v51
  %v1399 = vunpack.c.l.b16 %v52
  %v1400 = vunpack.c.l.b16 %v53
  %v1401 = vunpack.c.l.b16 %v54
  %v1402 = vunpack.c.l.b16 %v55
  %v1403 = vunpack.c.l.b16 %v56
  %v1404 = vunpack.c.l.b16 %v57
  %v1405 = vunpack.c.l.b16 %v58
  %v1406 = vunpack.c.l.b16 %v59
  %v1407 = vunpack.c.l.b16 %v60
  %v1408 = vunpack.c.l.b16 %v61
  %v1409 = vunpack.c.l.b16 %v62
  %v1410 = vunpack.c.l.b16 %v63
  %v1411 = vunpack.c.l.b16 %v64
  %v1412 = vunpack.c.l.b16 %v65
  %v1413 = vunpack.c.l.b16 %v66
  %v1414 = vunpack.c.l.b16 %v67
  %v1415 = vunpack.c.l.b16 %v68
  %v1416 = vunpack.c.l.b16 %v69
  %v1417 = vunpack.c.l.b16 %v70
  %v1418 = vunpack.c.l.b16 %v71
  %v1419 = vunpack.c.l.b16 %v72
  %v1420 = vunpack.c.l.b16 %v73
  %v1421 = vunpack.c.l.b16 %v74
  %v1422 = vunpack.c.l.b16 %v75
  %v1423 = vunpack.c.l.b16 %v76
  %v1424 = vunpack.c.l.b16 %v77
  %v1425 = vunpack.c.l.b16 %v78
  %v1426 = vunpack.c.l.b16 %v79
  %v1427 = vunpack.c.l.b16 %v80
  %v1428 = vunpack.c.l.b16 %v81
  %v1429 = vunpack.c.l.b16 %v82
  %v1430 = vpack.c.b16 %v1367, %v1366
  %v1431 = vpack.c.b16 %v1369, %v1368
  %v1432 = vpack.c.b16 %v1371, %v1370
  %v1433 = vpack.c.b16 %v1373, %v1372
  %v1434 = vpack.c.b16 %v1375, %v1374
  %v1435 = vpack.c.b16 %v1377, %v1376
  %v1436 = vpack.c.b16 %v1379, %v1378
  %v1437 = vpack.c.b16 %v1381, %v1380
  %v1438 = vpack.c.b16 %v1383, %v1382
  %v1439 = vpack.c.b16 %v1385, %v1384
  %v1440 = vpack.c.b16 %v1387, %v1386
  %v1441 = vpack.c.b16 %v1389, %v1388
  %v1442 = vpack.c.b16 %v1391, %v1390
  %v1443 = vpack.c.b16 %v1393, %v1392
  %v1444 = vpack.c.b16 %v1395, %v1394
  %v1445 = vpack.c.b16 %v1397, %v1396
  %v1446 = vpack.c.b16 %v1399, %v1398
  %v1447 = vpack.c.b16 %v1401, %v1400
  %v1448 = vpack.c.b16 %v1403, %v1402
  %v1449 = vpack.c.b16 %v1405, %v1404
  %v1450 = vpack.c.b16 %v1407, %v1406
  %v1451 = vpack.c.b16 %v1409, %v1408
  %v1452 = vpack.c.b16 %v1411, %v1410
  %v1453 = vpack.c.b16 %v1413, %v1412
  %v1454 = vpack.c.b16 %v1415, %v1414
  %v1455 = vpack.c.b16 %v1417, %v1416
  %v1456 = vpack.c.b16 %v1419, %v1418
  %v1457 = vpack.c.b16 %v1421, %v1420
  %v1458 = vpack.c.b16 %v1423, %v1422
  %v1459 = vpack.c.b16 %v1425, %v1424
  %v1460 = vpack.c.b16 %v1427, %v1426
  %v1461 = vpack.c.b16 %v1429, %v1428
  %v1464 = vunpack.c.l.b16 %v83
  %v1465 = vunpack.c.l.b16 %v84
  %v1466 = vpack.c.b16 %v1465, %v1464
  %v1468 = vsel %vm912, %v1430, 0
  %v1471 = vsel %vm912, %v1431, 0
  %v1474 = vsel %vm912, %v1432, 0
  %v1477 = vsel %vm912, %v1433, 0
  %v1480 = vsel %vm912, %v1434, 0
  %v1483 = vsel %vm912, %v1435, 0
  %v1486 = vsel %vm912, %v1436, 0
  %v1489 = vsel %vm912, %v1437, 0
  %v1492 = vsel %vm912, %v1438, 0
  %v1495 = vsel %vm912, %v1439, 0
  %v1498 = vsel %vm912, %v1440, 0
  %v1501 = vsel %vm912, %v1441, 0
  %v1504 = vsel %vm912, %v1442, 0
  %v1507 = vsel %vm912, %v1443, 0
  %v1510 = vsel %vm912, %v1444, 0
  %v1513 = vsel %vm912, %v1445, 0
  %v1516 = vsel %vm912, %v1446, 0
  %v1519 = vsel %vm912, %v1447, 0
  %v1522 = vsel %vm912, %v1448, 0
  %v1525 = vsel %vm912, %v1449, 0
  %v1528 = vsel %vm912, %v1450, 0
  %v1531 = vsel %vm912, %v1451, 0
  %v1534 = vsel %vm912, %v1452, 0
  %v1537 = vsel %vm912, %v1453, 0
  %v1540 = vsel %vm912, %v1454, 0
  %v1543 = vsel %vm912, %v1455, 0
  %v1546 = vsel %vm912, %v1456, 0
  %v1549 = vsel %vm912, %v1457, 0
  %v1552 = vsel %vm912, %v1458, 0
  %v1555 = vsel %vm912, %v1459, 0
  %v1558 = vsel %vm912, %v1460, 0
  %v1561 = vsel %vm912, %v1461, 0
  %v1564 = vsel %vm1009, %v1466, 0
  %1566 = vmatprep.subr.bf16.mxu0 0
  %1567 = vmatpush1.bf16.msra.mxu0 %v1564
  %1568 = vmatprep.subr.bf16.mxu0 0
  %1569 = vmatpush1.bf16.msra.mxu0 0
  %1570 = vmatprep.subr.bf16.mxu0 0
  %1571 = vmatpush1.bf16.msra.mxu0 0
  %1572 = vmatprep.subr.bf16.mxu0 0
  %1573 = vmatpush1.bf16.msra.mxu0 0
  %1574 = vmatprep.subr.bf16.mxu0 0
  %1575 = vmatpush1.bf16.msra.mxu0 0
  %1576 = vmatprep.subr.bf16.mxu0 0
  %1577 = vmatpush1.bf16.msra.mxu0 0
  %1578 = vmatprep.subr.bf16.mxu0 0
  %1579 = vmatpush1.bf16.msra.mxu0 0
  %1580 = vmatprep.subr.bf16.mxu0 0
  %1581 = vmatpush1.bf16.msra.mxu0 0
  %1582 = vmatprep.subr.bf16.mxu0 0
  %1583 = vmatpush1.bf16.msra.mxu0 0
  %1584 = vmatprep.subr.bf16.mxu0 0
  %1585 = vmatpush1.bf16.msra.mxu0 0
  %1586 = vmatprep.subr.bf16.mxu0 0
  %1587 = vmatpush1.bf16.msra.mxu0 0
  %1588 = vmatprep.subr.bf16.mxu0 0
  %1589 = vmatpush1.bf16.msra.mxu0 0
  %1590 = vmatprep.subr.bf16.mxu0 0
  %1591 = vmatpush1.bf16.msra.mxu0 0
  %1592 = vmatprep.subr.bf16.mxu0 0
  %1593 = vmatpush1.bf16.msra.mxu0 0
  %1594 = vmatprep.subr.bf16.mxu0 0
  %1595 = vmatpush1.bf16.msra.mxu0 0
  %1596 = vmatprep.subr.bf16.mxu0 0
  %1597 = vmatpush1.bf16.msra.mxu0 0
  %1598 = vmatprep.mubr.bf16.mxu0 0
  %1599 = vmatmul.mubr.bf16.gmra.mrb[0].mxu0 %v1468
  %v1600 = vpop.f32.mrb[0].mxu0
  %v1601 = vadd.f32 %v1048, %v1600
  %v1602 = vpop.f32.mrb[0].mxu0
  %v1603 = vpop.f32.mrb[0].mxu0
  %v1604 = vadd.f32 %v1051, %v1603
  %v1605 = vpop.f32.mrb[0].mxu0
  %1606 = vmatprep.mubr.bf16.mxu0 0
  %1607 = vmatmul.mubr.bf16.gmra.mrb[0].mxu0 %v1471
  %v1608 = vpop.f32.mrb[0].mxu0
  %v1609 = vadd.f32 %v1056, %v1608
  %v1610 = vpop.f32.mrb[0].mxu0
  %v1611 = vpop.f32.mrb[0].mxu0
  %v1612 = vadd.f32 %v1059, %v1611
  %v1613 = vpop.f32.mrb[0].mxu0
  %1614 = vmatprep.mubr.bf16.mxu0 0
  %1615 = vmatmul.mubr.bf16.gmra.mrb[0].mxu0 %v1474
  %v1616 = vpop.f32.mrb[0].mxu0
  %v1617 = vadd.f32 %v1064, %v1616
  %v1618 = vpop.f32.mrb[0].mxu0
  %v1619 = vpop.f32.mrb[0].mxu0
  %v1620 = vadd.f32 %v1067, %v1619
  %v1621 = vpop.f32.mrb[0].mxu0
  %1622 = vmatprep.mubr.bf16.mxu0 0
  %1623 = vmatmul.mubr.bf16.gmra.mrb[0].mxu0 %v1477
  %v1624 = vpop.f32.mrb[0].mxu0
  %v1625 = vadd.f32 %v1072, %v1624
  %v1626 = vpop.f32.mrb[0].mxu0
  %v1627 = vpop.f32.mrb[0].mxu0
  %v1628 = vadd.f32 %v1075, %v1627
  %v1629 = vpop.f32.mrb[0].mxu0
  %1630 = vmatprep.mubr.bf16.mxu0 0
  %1631 = vmatmul.mubr.bf16.gmra.mrb[0].mxu0 %v1480
  %v1632 = vpop.f32.mrb[0].mxu0
  %v1633 = vadd.f32 %v1080, %v1632
  %v1634 = vpop.f32.mrb[0].mxu0
  %v1635 = vpop.f32.mrb[0].mxu0
  %v1636 = vadd.f32 %v1083, %v1635
  %v1637 = vpop.f32.mrb[0].mxu0
  %1638 = vmatprep.mubr.bf16.mxu0 0
  %1639 = vmatmul.mubr.bf16.gmra.mrb[0].mxu0 %v1483
  %v1640 = vpop.f32.mrb[0].mxu0
  %v1641 = vadd.f32 %v1088, %v1640
  %v1642 = vpop.f32.mrb[0].mxu0
  %v1643 = vpop.f32.mrb[0].mxu0
  %v1644 = vadd.f32 %v1091, %v1643
  %v1645 = vpop.f32.mrb[0].mxu0
  %1646 = vmatprep.mubr.bf16.mxu0 0
  %1647 = vmatmul.mubr.bf16.gmra.mrb[0].mxu0 %v1486
  %v1648 = vpop.f32.mrb[0].mxu0
  %v1649 = vadd.f32 %v1096, %v1648
  %v1650 = vpop.f32.mrb[0].mxu0
  %v1651 = vpop.f32.mrb[0].mxu0
  %v1652 = vadd.f32 %v1099, %v1651
  %v1653 = vpop.f32.mrb[0].mxu0
  %1654 = vmatprep.mubr.bf16.mxu0 0
  %1655 = vmatmul.mubr.bf16.gmra.mrb[0].mxu0 %v1489
  %v1656 = vpop.f32.mrb[0].mxu0
  %v1657 = vadd.f32 %v1104, %v1656
  %v1658 = vpop.f32.mrb[0].mxu0
  %v1659 = vpop.f32.mrb[0].mxu0
  %v1660 = vadd.f32 %v1107, %v1659
  %v1661 = vpop.f32.mrb[0].mxu0
  %1662 = vmatprep.mubr.bf16.mxu0 0
  %1663 = vmatmul.mubr.bf16.gmra.mrb[0].mxu0 %v1492
  %v1664 = vpop.f32.mrb[0].mxu0
  %v1665 = vadd.f32 %v1112, %v1664
  %v1666 = vpop.f32.mrb[0].mxu0
  %v1667 = vpop.f32.mrb[0].mxu0
  %v1668 = vadd.f32 %v1115, %v1667
  %v1669 = vpop.f32.mrb[0].mxu0
  %1670 = vmatprep.mubr.bf16.mxu0 0
  %1671 = vmatmul.mubr.bf16.gmra.mrb[0].mxu0 %v1495
  %v1672 = vpop.f32.mrb[0].mxu0
  %v1673 = vadd.f32 %v1120, %v1672
  %v1674 = vpop.f32.mrb[0].mxu0
  %v1675 = vpop.f32.mrb[0].mxu0
  %v1676 = vadd.f32 %v1123, %v1675
  %v1677 = vpop.f32.mrb[0].mxu0
  %1678 = vmatprep.mubr.bf16.mxu0 0
  %1679 = vmatmul.mubr.bf16.gmra.mrb[0].mxu0 %v1498
  %v1680 = vpop.f32.mrb[0].mxu0
  %v1681 = vadd.f32 %v1128, %v1680
  %v1682 = vpop.f32.mrb[0].mxu0
  %v1683 = vpop.f32.mrb[0].mxu0
  %v1684 = vadd.f32 %v1131, %v1683
  %v1685 = vpop.f32.mrb[0].mxu0
  %1686 = vmatprep.mubr.bf16.mxu0 0
  %1687 = vmatmul.mubr.bf16.gmra.mrb[0].mxu0 %v1501
  %v1688 = vpop.f32.mrb[0].mxu0
  %v1689 = vadd.f32 %v1136, %v1688
  %v1690 = vpop.f32.mrb[0].mxu0
  %v1691 = vpop.f32.mrb[0].mxu0
  %v1692 = vadd.f32 %v1139, %v1691
  %v1693 = vpop.f32.mrb[0].mxu0
  %1694 = vmatprep.mubr.bf16.mxu0 0
  %1695 = vmatmul.mubr.bf16.gmra.mrb[0].mxu0 %v1504
  %v1696 = vpop.f32.mrb[0].mxu0
  %v1697 = vadd.f32 %v1144, %v1696
  %v1698 = vpop.f32.mrb[0].mxu0
  %v1699 = vpop.f32.mrb[0].mxu0
  %v1700 = vadd.f32 %v1147, %v1699
  %v1701 = vpop.f32.mrb[0].mxu0
  %1702 = vmatprep.mubr.bf16.mxu0 0
  %1703 = vmatmul.mubr.bf16.gmra.mrb[0].mxu0 %v1507
  %v1704 = vpop.f32.mrb[0].mxu0
  %v1705 = vadd.f32 %v1152, %v1704
  %v1706 = vpop.f32.mrb[0].mxu0
  %v1707 = vpop.f32.mrb[0].mxu0
  %v1708 = vadd.f32 %v1155, %v1707
  %v1709 = vpop.f32.mrb[0].mxu0
  %1710 = vmatprep.mubr.bf16.mxu0 0
  %1711 = vmatmul.mubr.bf16.gmra.mrb[0].mxu0 %v1510
  %v1712 = vpop.f32.mrb[0].mxu0
  %v1713 = vadd.f32 %v1160, %v1712
  %v1714 = vpop.f32.mrb[0].mxu0
  %v1715 = vpop.f32.mrb[0].mxu0
  %v1716 = vadd.f32 %v1163, %v1715
  %v1717 = vpop.f32.mrb[0].mxu0
  %1718 = vmatprep.mubr.bf16.mxu0 0
  %1719 = vmatmul.mubr.bf16.gmra.mrb[0].mxu0 %v1513
  %v1720 = vpop.f32.mrb[0].mxu0
  %v1721 = vadd.f32 %v1168, %v1720
  %v1722 = vpop.f32.mrb[0].mxu0
  %v1723 = vpop.f32.mrb[0].mxu0
  %v1724 = vadd.f32 %v1171, %v1723
  %v1725 = vpop.f32.mrb[0].mxu0
  %1726 = vmatprep.mubr.bf16.mxu0 0
  %1727 = vmatmul.mubr.bf16.gmra.mrb[0].mxu0 %v1516
  %v1728 = vpop.f32.mrb[0].mxu0
  %v1729 = vadd.f32 %v1176, %v1728
  %v1730 = vpop.f32.mrb[0].mxu0
  %v1731 = vpop.f32.mrb[0].mxu0
  %v1732 = vadd.f32 %v1179, %v1731
  %v1733 = vpop.f32.mrb[0].mxu0
  %1734 = vmatprep.mubr.bf16.mxu0 0
  %1735 = vmatmul.mubr.bf16.gmra.mrb[0].mxu0 %v1519
  %v1736 = vpop.f32.mrb[0].mxu0
  %v1737 = vadd.f32 %v1184, %v1736
  %v1738 = vpop.f32.mrb[0].mxu0
  %v1739 = vpop.f32.mrb[0].mxu0
  %v1740 = vadd.f32 %v1187, %v1739
  %v1741 = vpop.f32.mrb[0].mxu0
  %1742 = vmatprep.mubr.bf16.mxu0 0
  %1743 = vmatmul.mubr.bf16.gmra.mrb[0].mxu0 %v1522
  %v1744 = vpop.f32.mrb[0].mxu0
  %v1745 = vadd.f32 %v1192, %v1744
  %v1746 = vpop.f32.mrb[0].mxu0
  %v1747 = vpop.f32.mrb[0].mxu0
  %v1748 = vadd.f32 %v1195, %v1747
  %v1749 = vpop.f32.mrb[0].mxu0
  %1750 = vmatprep.mubr.bf16.mxu0 0
  %1751 = vmatmul.mubr.bf16.gmra.mrb[0].mxu0 %v1525
  %v1752 = vpop.f32.mrb[0].mxu0
  %v1753 = vadd.f32 %v1200, %v1752
  %v1754 = vpop.f32.mrb[0].mxu0
  %v1755 = vpop.f32.mrb[0].mxu0
  %v1756 = vadd.f32 %v1203, %v1755
  %v1757 = vpop.f32.mrb[0].mxu0
  %1758 = vmatprep.mubr.bf16.mxu0 0
  %1759 = vmatmul.mubr.bf16.gmra.mrb[0].mxu0 %v1528
  %v1760 = vpop.f32.mrb[0].mxu0
  %v1761 = vadd.f32 %v1208, %v1760
  %v1762 = vpop.f32.mrb[0].mxu0
  %v1763 = vpop.f32.mrb[0].mxu0
  %v1764 = vadd.f32 %v1211, %v1763
  %v1765 = vpop.f32.mrb[0].mxu0
  %1766 = vmatprep.mubr.bf16.mxu0 0
  %1767 = vmatmul.mubr.bf16.gmra.mrb[0].mxu0 %v1531
  %v1768 = vpop.f32.mrb[0].mxu0
  %v1769 = vadd.f32 %v1216, %v1768
  %v1770 = vpop.f32.mrb[0].mxu0
  %v1771 = vpop.f32.mrb[0].mxu0
  %v1772 = vadd.f32 %v1219, %v1771
  %v1773 = vpop.f32.mrb[0].mxu0
  %1774 = vmatprep.mubr.bf16.mxu0 0
  %1775 = vmatmul.mubr.bf16.gmra.mrb[0].mxu0 %v1534
  %v1776 = vpop.f32.mrb[0].mxu0
  %v1777 = vadd.f32 %v1224, %v1776
  %v1778 = vpop.f32.mrb[0].mxu0
  %v1779 = vpop.f32.mrb[0].mxu0
  %v1780 = vadd.f32 %v1227, %v1779
  %v1781 = vpop.f32.mrb[0].mxu0
  %1782 = vmatprep.mubr.bf16.mxu0 0
  %1783 = vmatmul.mubr.bf16.gmra.mrb[0].mxu0 %v1537
  %v1784 = vpop.f32.mrb[0].mxu0
  %v1785 = vadd.f32 %v1232, %v1784
  %v1786 = vpop.f32.mrb[0].mxu0
  %v1787 = vpop.f32.mrb[0].mxu0
  %v1788 = vadd.f32 %v1235, %v1787
  %v1789 = vpop.f32.mrb[0].mxu0
  %1790 = vmatprep.mubr.bf16.mxu0 0
  %1791 = vmatmul.mubr.bf16.gmra.mrb[0].mxu0 %v1540
  %v1792 = vpop.f32.mrb[0].mxu0
  %v1793 = vadd.f32 %v1240, %v1792
  %v1794 = vpop.f32.mrb[0].mxu0
  %v1795 = vpop.f32.mrb[0].mxu0
  %v1796 = vadd.f32 %v1243, %v1795
  %v1797 = vpop.f32.mrb[0].mxu0
  %1798 = vmatprep.mubr.bf16.mxu0 0
  %1799 = vmatmul.mubr.bf16.gmra.mrb[0].mxu0 %v1543
  %v1800 = vpop.f32.mrb[0].mxu0
  %v1801 = vadd.f32 %v1248, %v1800
  %v1802 = vpop.f32.mrb[0].mxu0
  %v1803 = vpop.f32.mrb[0].mxu0
  %v1804 = vadd.f32 %v1251, %v1803
  %v1805 = vpop.f32.mrb[0].mxu0
  %1806 = vmatprep.mubr.bf16.mxu0 0
  %1807 = vmatmul.mubr.bf16.gmra.mrb[0].mxu0 %v1546
  %v1808 = vpop.f32.mrb[0].mxu0
  %v1809 = vadd.f32 %v1256, %v1808
  %v1810 = vpop.f32.mrb[0].mxu0
  %v1811 = vpop.f32.mrb[0].mxu0
  %v1812 = vadd.f32 %v1259, %v1811
  %v1813 = vpop.f32.mrb[0].mxu0
  %1814 = vmatprep.mubr.bf16.mxu0 0
  %1815 = vmatmul.mubr.bf16.gmra.mrb[0].mxu0 %v1549
  %v1816 = vpop.f32.mrb[0].mxu0
  %v1817 = vadd.f32 %v1264, %v1816
  %v1818 = vpop.f32.mrb[0].mxu0
  %v1819 = vpop.f32.mrb[0].mxu0
  %v1820 = vadd.f32 %v1267, %v1819
  %v1821 = vpop.f32.mrb[0].mxu0
  %1822 = vmatprep.mubr.bf16.mxu0 0
  %1823 = vmatmul.mubr.bf16.gmra.mrb[0].mxu0 %v1552
  %v1824 = vpop.f32.mrb[0].mxu0
  %v1825 = vadd.f32 %v1272, %v1824
  %v1826 = vpop.f32.mrb[0].mxu0
  %v1827 = vpop.f32.mrb[0].mxu0
  %v1828 = vadd.f32 %v1275, %v1827
  %v1829 = vpop.f32.mrb[0].mxu0
  %1830 = vmatprep.mubr.bf16.mxu0 0
  %1831 = vmatmul.mubr.bf16.gmra.mrb[0].mxu0 %v1555
  %v1832 = vpop.f32.mrb[0].mxu0
  %v1833 = vadd.f32 %v1280, %v1832
  %v1834 = vpop.f32.mrb[0].mxu0
  %v1835 = vpop.f32.mrb[0].mxu0
  %v1836 = vadd.f32 %v1283, %v1835
  %v1837 = vpop.f32.mrb[0].mxu0
  %1838 = vmatprep.mubr.bf16.mxu0 0
  %1839 = vmatmul.mubr.bf16.gmra.mrb[0].mxu0 %v1558
  %v1840 = vpop.f32.mrb[0].mxu0
  %v1841 = vadd.f32 %v1288, %v1840
  %v1842 = vpop.f32.mrb[0].mxu0
  %v1843 = vpop.f32.mrb[0].mxu0
  %v1844 = vadd.f32 %v1291, %v1843
  %v1845 = vpop.f32.mrb[0].mxu0
  %1846 = vmatprep.mubr.bf16.mxu0 0
  %1847 = vmatmul.mubr.bf16.gmra.mrb[0].mxu0 %v1561
  %v1848 = vpop.f32.mrb[0].mxu0
  %v1849 = vadd.f32 %v1296, %v1848
  %v1850 = vpop.f32.mrb[0].mxu0
  %v1851 = vpop.f32.mrb[0].mxu0
  %v1852 = vadd.f32 %v1299, %v1851
  %v1853 = vpop.f32.mrb[0].mxu0
  %1854 = vdwg.mxu0
  %s1855 = sadd.s32 %s15, 1
  %s1856 = smul.u32 %s1855, 5
  %s1857 = smul.addr %s1856, 4
  %s1858 = scalar_lea.vmem %s0, %s1857
  %v1859 = vld [vmem:[%s1858] sm:$0xf]
  %v1860 = vld [vmem:[%s1858 + $0x4] sm:$0xf]
  %v1861 = vld [vmem:[%s1858 + $0x8] sm:$0xf]
  %v1862 = vld [vmem:[%s1858 + $0xc] sm:$0xf]
  %v1863 = vld [vmem:[%s1858 + $0x14] sm:$0xf]
  %v1864 = vld [vmem:[%s1858 + $0x18] sm:$0xf]
  %v1865 = vld [vmem:[%s1858 + $0x1c] sm:$0xf]
  %v1866 = vld [vmem:[%s1858 + $0x20] sm:$0xf]
  %v1867 = vld [vmem:[%s1858 + $0x28] sm:$0xf]
  %v1868 = vld [vmem:[%s1858 + $0x2c] sm:$0xf]
  %v1869 = vld [vmem:[%s1858 + $0x30] sm:$0xf]
  %v1870 = vld [vmem:[%s1858 + $0x34] sm:$0xf]
  %v1871 = vld [vmem:[%s1858 + $0x3c] sm:$0xf]
  %v1872 = vld [vmem:[%s1858 + $0x40] sm:$0xf]
  %v1873 = vld [vmem:[%s1858 + $0x44] sm:$0xf]
  %v1874 = vld [vmem:[%s1858 + $0x48] sm:$0xf]
  %v1875 = vld [vmem:[%s1858 + $0x50] sm:$0xf]
  %v1876 = vld [vmem:[%s1858 + $0x54] sm:$0xf]
  %v1877 = vld [vmem:[%s1858 + $0x58] sm:$0xf]
  %v1878 = vld [vmem:[%s1858 + $0x5c] sm:$0xf]
  %v1879 = vld [vmem:[%s1858 + $0x64] sm:$0xf]
  %v1880 = vld [vmem:[%s1858 + $0x68] sm:$0xf]
  %v1881 = vld [vmem:[%s1858 + $0x6c] sm:$0xf]
  %v1882 = vld [vmem:[%s1858 + $0x70] sm:$0xf]
  %v1883 = vld [vmem:[%s1858 + $0x78] sm:$0xf]
  %v1884 = vld [vmem:[%s1858 + $0x7c] sm:$0xf]
  %v1885 = vld [vmem:[%s1858 + $0x80] sm:$0xf]
  %v1886 = vld [vmem:[%s1858 + $0x84] sm:$0xf]
  %v1887 = vld [vmem:[%s1858 + $0x8c] sm:$0xf]
  %v1888 = vld [vmem:[%s1858 + $0x90] sm:$0xf]
  %v1889 = vld [vmem:[%s1858 + $0x94] sm:$0xf]
  %v1890 = vld [vmem:[%s1858 + $0x98] sm:$0xf]
  %v1891 = vld [vmem:[%s1858 + $0xa0] sm:$0xf]
  %v1892 = vld [vmem:[%s1858 + $0xa4] sm:$0xf]
  %v1893 = vld [vmem:[%s1858 + $0xa8] sm:$0xf]
  %v1894 = vld [vmem:[%s1858 + $0xac] sm:$0xf]
  %v1895 = vld [vmem:[%s1858 + $0xb4] sm:$0xf]
  %v1896 = vld [vmem:[%s1858 + $0xb8] sm:$0xf]
  %v1897 = vld [vmem:[%s1858 + $0xbc] sm:$0xf]
  %v1898 = vld [vmem:[%s1858 + $0xc0] sm:$0xf]
  %v1899 = vld [vmem:[%s1858 + $0xc8] sm:$0xf]
  %v1900 = vld [vmem:[%s1858 + $0xcc] sm:$0xf]
  %v1901 = vld [vmem:[%s1858 + $0xd0] sm:$0xf]
  %v1902 = vld [vmem:[%s1858 + $0xd4] sm:$0xf]
  %v1903 = vld [vmem:[%s1858 + $0xdc] sm:$0xf]
  %v1904 = vld [vmem:[%s1858 + $0xe0] sm:$0xf]
  %v1905 = vld [vmem:[%s1858 + $0xe4] sm:$0xf]
  %v1906 = vld [vmem:[%s1858 + $0xe8] sm:$0xf]
  %v1907 = vld [vmem:[%s1858 + $0xf0] sm:$0xf]
  %v1908 = vld [vmem:[%s1858 + $0xf4] sm:$0xf]
  %v1909 = vld [vmem:[%s1858 + $0xf8] sm:$0xf]
  %v1910 = vld [vmem:[%s1858 + $0xfc] sm:$0xf]
  %v1911 = vld [vmem:[%s1858 + $0x104] sm:$0xf]
  %v1912 = vld [vmem:[%s1858 + $0x108] sm:$0xf]
  %v1913 = vld [vmem:[%s1858 + $0x10c] sm:$0xf]
  %v1914 = vld [vmem:[%s1858 + $0x110] sm:$0xf]
  %v1915 = vld [vmem:[%s1858 + $0x118] sm:$0xf]
  %v1916 = vld [vmem:[%s1858 + $0x11c] sm:$0xf]
  %v1917 = vld [vmem:[%s1858 + $0x120] sm:$0xf]
  %v1918 = vld [vmem:[%s1858 + $0x124] sm:$0xf]
  %v1919 = vld [vmem:[%s1858 + $0x12c] sm:$0xf]
  %v1920 = vld [vmem:[%s1858 + $0x130] sm:$0xf]
  %v1921 = vld [vmem:[%s1858 + $0x134] sm:$0xf]
  %v1922 = vld [vmem:[%s1858 + $0x138] sm:$0xf]
  %s1923 = scalar_lea.vmem %s1, 16
  %v1924 = vld [vmem:[%s1923] sm:$0xf]
  %v1925 = vld [vmem:[%s1923 + $0x4] sm:$0x3]
  %v1990 = vunpack.c.l.b16 %v1859
  %v1991 = vunpack.c.l.b16 %v1860
  %v1992 = vunpack.c.l.b16 %v1861
  %v1993 = vunpack.c.l.b16 %v1862
  %v1994 = vunpack.c.l.b16 %v1863
  %v1995 = vunpack.c.l.b16 %v1864
  %v1996 = vunpack.c.l.b16 %v1865
  %v1997 = vunpack.c.l.b16 %v1866
  %v1998 = vunpack.c.l.b16 %v1867
  %v1999 = vunpack.c.l.b16 %v1868
  %v2000 = vunpack.c.l.b16 %v1869
  %v2001 = vunpack.c.l.b16 %v1870
  %v2002 = vunpack.c.l.b16 %v1871
  %v2003 = vunpack.c.l.b16 %v1872
  %v2004 = vunpack.c.l.b16 %v1873
  %v2005 = vunpack.c.l.b16 %v1874
  %v2006 = vunpack.c.l.b16 %v1875
  %v2007 = vunpack.c.l.b16 %v1876
  %v2008 = vunpack.c.l.b16 %v1877
  %v2009 = vunpack.c.l.b16 %v1878
  %v2010 = vunpack.c.l.b16 %v1879
  %v2011 = vunpack.c.l.b16 %v1880
  %v2012 = vunpack.c.l.b16 %v1881
  %v2013 = vunpack.c.l.b16 %v1882
  %v2014 = vunpack.c.l.b16 %v1883
  %v2015 = vunpack.c.l.b16 %v1884
  %v2016 = vunpack.c.l.b16 %v1885
  %v2017 = vunpack.c.l.b16 %v1886
  %v2018 = vunpack.c.l.b16 %v1887
  %v2019 = vunpack.c.l.b16 %v1888
  %v2020 = vunpack.c.l.b16 %v1889
  %v2021 = vunpack.c.l.b16 %v1890
  %v2022 = vunpack.c.l.b16 %v1891
  %v2023 = vunpack.c.l.b16 %v1892
  %v2024 = vunpack.c.l.b16 %v1893
  %v2025 = vunpack.c.l.b16 %v1894
  %v2026 = vunpack.c.l.b16 %v1895
  %v2027 = vunpack.c.l.b16 %v1896
  %v2028 = vunpack.c.l.b16 %v1897
  %v2029 = vunpack.c.l.b16 %v1898
  %v2030 = vunpack.c.l.b16 %v1899
  %v2031 = vunpack.c.l.b16 %v1900
  %v2032 = vunpack.c.l.b16 %v1901
  %v2033 = vunpack.c.l.b16 %v1902
  %v2034 = vunpack.c.l.b16 %v1903
  %v2035 = vunpack.c.l.b16 %v1904
  %v2036 = vunpack.c.l.b16 %v1905
  %v2037 = vunpack.c.l.b16 %v1906
  %v2038 = vunpack.c.l.b16 %v1907
  %v2039 = vunpack.c.l.b16 %v1908
  %v2040 = vunpack.c.l.b16 %v1909
  %v2041 = vunpack.c.l.b16 %v1910
  %v2042 = vunpack.c.l.b16 %v1911
  %v2043 = vunpack.c.l.b16 %v1912
  %v2044 = vunpack.c.l.b16 %v1913
  %v2045 = vunpack.c.l.b16 %v1914
  %v2046 = vunpack.c.l.b16 %v1915
  %v2047 = vunpack.c.l.b16 %v1916
  %v2048 = vunpack.c.l.b16 %v1917
  %v2049 = vunpack.c.l.b16 %v1918
  %v2050 = vunpack.c.l.b16 %v1919
  %v2051 = vunpack.c.l.b16 %v1920
  %v2052 = vunpack.c.l.b16 %v1921
  %v2053 = vunpack.c.l.b16 %v1922
  %v2054 = vpack.c.b16 %v1991, %v1990
  %v2055 = vpack.c.b16 %v1993, %v1992
  %v2056 = vpack.c.b16 %v1995, %v1994
  %v2057 = vpack.c.b16 %v1997, %v1996
  %v2058 = vpack.c.b16 %v1999, %v1998
  %v2059 = vpack.c.b16 %v2001, %v2000
  %v2060 = vpack.c.b16 %v2003, %v2002
  %v2061 = vpack.c.b16 %v2005, %v2004
  %v2062 = vpack.c.b16 %v2007, %v2006
  %v2063 = vpack.c.b16 %v2009, %v2008
  %v2064 = vpack.c.b16 %v2011, %v2010
  %v2065 = vpack.c.b16 %v2013, %v2012
  %v2066 = vpack.c.b16 %v2015, %v2014
  %v2067 = vpack.c.b16 %v2017, %v2016
  %v2068 = vpack.c.b16 %v2019, %v2018
  %v2069 = vpack.c.b16 %v2021, %v2020
  %v2070 = vpack.c.b16 %v2023, %v2022
  %v2071 = vpack.c.b16 %v2025, %v2024
  %v2072 = vpack.c.b16 %v2027, %v2026
  %v2073 = vpack.c.b16 %v2029, %v2028
  %v2074 = vpack.c.b16 %v2031, %v2030
  %v2075 = vpack.c.b16 %v2033, %v2032
  %v2076 = vpack.c.b16 %v2035, %v2034
  %v2077 = vpack.c.b16 %v2037, %v2036
  %v2078 = vpack.c.b16 %v2039, %v2038
  %v2079 = vpack.c.b16 %v2041, %v2040
  %v2080 = vpack.c.b16 %v2043, %v2042
  %v2081 = vpack.c.b16 %v2045, %v2044
  %v2082 = vpack.c.b16 %v2047, %v2046
  %v2083 = vpack.c.b16 %v2049, %v2048
  %v2084 = vpack.c.b16 %v2051, %v2050
  %v2085 = vpack.c.b16 %v2053, %v2052
  %v2088 = vunpack.c.l.b16 %v1924
  %v2089 = vunpack.c.l.b16 %v1925
  %v2090 = vpack.c.b16 %v2089, %v2088
  %v2092 = vsel %vm912, %v2054, 0
  %v2095 = vsel %vm912, %v2055, 0
  %v2098 = vsel %vm912, %v2056, 0
  %v2101 = vsel %vm912, %v2057, 0
  %v2104 = vsel %vm912, %v2058, 0
  %v2107 = vsel %vm912, %v2059, 0
  %v2110 = vsel %vm912, %v2060, 0
  %v2113 = vsel %vm912, %v2061, 0
  %v2116 = vsel %vm912, %v2062, 0
  %v2119 = vsel %vm912, %v2063, 0
  %v2122 = vsel %vm912, %v2064, 0
  %v2125 = vsel %vm912, %v2065, 0
  %v2128 = vsel %vm912, %v2066, 0
  %v2131 = vsel %vm912, %v2067, 0
  %v2134 = vsel %vm912, %v2068, 0
  %v2137 = vsel %vm912, %v2069, 0
  %v2140 = vsel %vm912, %v2070, 0
  %v2143 = vsel %vm912, %v2071, 0
  %v2146 = vsel %vm912, %v2072, 0
  %v2149 = vsel %vm912, %v2073, 0
  %v2152 = vsel %vm912, %v2074, 0
  %v2155 = vsel %vm912, %v2075, 0
  %v2158 = vsel %vm912, %v2076, 0
  %v2161 = vsel %vm912, %v2077, 0
  %v2164 = vsel %vm912, %v2078, 0
  %v2167 = vsel %vm912, %v2079, 0
  %v2170 = vsel %vm912, %v2080, 0
  %v2173 = vsel %vm912, %v2081, 0
  %v2176 = vsel %vm912, %v2082, 0
  %v2179 = vsel %vm912, %v2083, 0
  %v2182 = vsel %vm912, %v2084, 0
  %v2185 = vsel %vm912, %v2085, 0
  %v2188 = vsel %vm1009, %v2090, 0
  %2190 = vmatprep.subr.bf16.mxu0 0
  %2191 = vmatpush1.bf16.msra.mxu0 %v2188
  %2192 = vmatprep.subr.bf16.mxu0 0
  %2193 = vmatpush1.bf16.msra.mxu0 0
  %2194 = vmatprep.subr.bf16.mxu0 0
  %2195 = vmatpush1.bf16.msra.mxu0 0
  %2196 = vmatprep.subr.bf16.mxu0 0
  %2197 = vmatpush1.bf16.msra.mxu0 0
  %2198 = vmatprep.subr.bf16.mxu0 0
  %2199 = vmatpush1.bf16.msra.mxu0 0
  %2200 = vmatprep.subr.bf16.mxu0 0
  %2201 = vmatpush1.bf16.msra.mxu0 0
  %2202 = vmatprep.subr.bf16.mxu0 0
  %2203 = vmatpush1.bf16.msra.mxu0 0
  %2204 = vmatprep.subr.bf16.mxu0 0
  %2205 = vmatpush1.bf16.msra.mxu0 0
  %2206 = vmatprep.subr.bf16.mxu0 0
  %2207 = vmatpush1.bf16.msra.mxu0 0
  %2208 = vmatprep.subr.bf16.mxu0 0
  %2209 = vmatpush1.bf16.msra.mxu0 0
  %2210 = vmatprep.subr.bf16.mxu0 0
  %2211 = vmatpush1.bf16.msra.mxu0 0
  %2212 = vmatprep.subr.bf16.mxu0 0
  %2213 = vmatpush1.bf16.msra.mxu0 0
  %2214 = vmatprep.subr.bf16.mxu0 0
  %2215 = vmatpush1.bf16.msra.mxu0 0
  %2216 = vmatprep.subr.bf16.mxu0 0
  %2217 = vmatpush1.bf16.msra.mxu0 0
  %2218 = vmatprep.subr.bf16.mxu0 0
  %2219 = vmatpush1.bf16.msra.mxu0 0
  %2220 = vmatprep.subr.bf16.mxu0 0
  %2221 = vmatpush1.bf16.msra.mxu0 0
  %2222 = vmatprep.mubr.bf16.mxu0 0
  %2223 = vmatmul.mubr.bf16.gmra.mrb[0].mxu0 %v2092
  %v2224 = vpop.f32.mrb[0].mxu0
  %v2225 = vadd.f32 0.0, %v2224
  %v2226 = vpop.f32.mrb[0].mxu0
  %v2227 = vpop.f32.mrb[0].mxu0
  %v2228 = vadd.f32 0.0, %v2227
  %v2229 = vpop.f32.mrb[0].mxu0
  %2230 = vmatprep.mubr.bf16.mxu0 0
  %2231 = vmatmul.mubr.bf16.gmra.mrb[0].mxu0 %v2095
  %v2232 = vpop.f32.mrb[0].mxu0
  %v2233 = vadd.f32 0.0, %v2232
  %v2234 = vpop.f32.mrb[0].mxu0
  %v2235 = vpop.f32.mrb[0].mxu0
  %v2236 = vadd.f32 0.0, %v2235
  %v2237 = vpop.f32.mrb[0].mxu0
  %2238 = vmatprep.mubr.bf16.mxu0 0
  %2239 = vmatmul.mubr.bf16.gmra.mrb[0].mxu0 %v2098
  %v2240 = vpop.f32.mrb[0].mxu0
  %v2241 = vadd.f32 0.0, %v2240
  %v2242 = vpop.f32.mrb[0].mxu0
  %v2243 = vpop.f32.mrb[0].mxu0
  %v2244 = vadd.f32 0.0, %v2243
  %v2245 = vpop.f32.mrb[0].mxu0
  %2246 = vmatprep.mubr.bf16.mxu0 0
  %2247 = vmatmul.mubr.bf16.gmra.mrb[0].mxu0 %v2101
  %v2248 = vpop.f32.mrb[0].mxu0
  %v2249 = vadd.f32 0.0, %v2248
  %v2250 = vpop.f32.mrb[0].mxu0
  %v2251 = vpop.f32.mrb[0].mxu0
  %v2252 = vadd.f32 0.0, %v2251
  %v2253 = vpop.f32.mrb[0].mxu0
  %2254 = vmatprep.mubr.bf16.mxu0 0
  %2255 = vmatmul.mubr.bf16.gmra.mrb[0].mxu0 %v2104
  %v2256 = vpop.f32.mrb[0].mxu0
  %v2257 = vadd.f32 0.0, %v2256
  %v2258 = vpop.f32.mrb[0].mxu0
  %v2259 = vpop.f32.mrb[0].mxu0
  %v2260 = vadd.f32 0.0, %v2259
  %v2261 = vpop.f32.mrb[0].mxu0
  %2262 = vmatprep.mubr.bf16.mxu0 0
  %2263 = vmatmul.mubr.bf16.gmra.mrb[0].mxu0 %v2107
  %v2264 = vpop.f32.mrb[0].mxu0
  %v2265 = vadd.f32 0.0, %v2264
  %v2266 = vpop.f32.mrb[0].mxu0
  %v2267 = vpop.f32.mrb[0].mxu0
  %v2268 = vadd.f32 0.0, %v2267
  %v2269 = vpop.f32.mrb[0].mxu0
  %2270 = vmatprep.mubr.bf16.mxu0 0
  %2271 = vmatmul.mubr.bf16.gmra.mrb[0].mxu0 %v2110
  %v2272 = vpop.f32.mrb[0].mxu0
  %v2273 = vadd.f32 0.0, %v2272
  %v2274 = vpop.f32.mrb[0].mxu0
  %v2275 = vpop.f32.mrb[0].mxu0
  %v2276 = vadd.f32 0.0, %v2275
  %v2277 = vpop.f32.mrb[0].mxu0
  %2278 = vmatprep.mubr.bf16.mxu0 0
  %2279 = vmatmul.mubr.bf16.gmra.mrb[0].mxu0 %v2113
  %v2280 = vpop.f32.mrb[0].mxu0
  %v2281 = vadd.f32 0.0, %v2280
  %v2282 = vpop.f32.mrb[0].mxu0
  %v2283 = vpop.f32.mrb[0].mxu0
  %v2284 = vadd.f32 0.0, %v2283
  %v2285 = vpop.f32.mrb[0].mxu0
  %2286 = vmatprep.mubr.bf16.mxu0 0
  %2287 = vmatmul.mubr.bf16.gmra.mrb[0].mxu0 %v2116
  %v2288 = vpop.f32.mrb[0].mxu0
  %v2289 = vadd.f32 0.0, %v2288
  %v2290 = vpop.f32.mrb[0].mxu0
  %v2291 = vpop.f32.mrb[0].mxu0
  %v2292 = vadd.f32 0.0, %v2291
  %v2293 = vpop.f32.mrb[0].mxu0
  %2294 = vmatprep.mubr.bf16.mxu0 0
  %2295 = vmatmul.mubr.bf16.gmra.mrb[0].mxu0 %v2119
  %v2296 = vpop.f32.mrb[0].mxu0
  %v2297 = vadd.f32 0.0, %v2296
  %v2298 = vpop.f32.mrb[0].mxu0
  %v2299 = vpop.f32.mrb[0].mxu0
  %v2300 = vadd.f32 0.0, %v2299
  %v2301 = vpop.f32.mrb[0].mxu0
  %2302 = vmatprep.mubr.bf16.mxu0 0
  %2303 = vmatmul.mubr.bf16.gmra.mrb[0].mxu0 %v2122
  %v2304 = vpop.f32.mrb[0].mxu0
  %v2305 = vadd.f32 0.0, %v2304
  %v2306 = vpop.f32.mrb[0].mxu0
  %v2307 = vpop.f32.mrb[0].mxu0
  %v2308 = vadd.f32 0.0, %v2307
  %v2309 = vpop.f32.mrb[0].mxu0
  %2310 = vmatprep.mubr.bf16.mxu0 0
  %2311 = vmatmul.mubr.bf16.gmra.mrb[0].mxu0 %v2125
  %v2312 = vpop.f32.mrb[0].mxu0
  %v2313 = vadd.f32 0.0, %v2312
  %v2314 = vpop.f32.mrb[0].mxu0
  %v2315 = vpop.f32.mrb[0].mxu0
  %v2316 = vadd.f32 0.0, %v2315
  %v2317 = vpop.f32.mrb[0].mxu0
  %2318 = vmatprep.mubr.bf16.mxu0 0
  %2319 = vmatmul.mubr.bf16.gmra.mrb[0].mxu0 %v2128
  %v2320 = vpop.f32.mrb[0].mxu0
  %v2321 = vadd.f32 0.0, %v2320
  %v2322 = vpop.f32.mrb[0].mxu0
  %v2323 = vpop.f32.mrb[0].mxu0
  %v2324 = vadd.f32 0.0, %v2323
  %v2325 = vpop.f32.mrb[0].mxu0
  %2326 = vmatprep.mubr.bf16.mxu0 0
  %2327 = vmatmul.mubr.bf16.gmra.mrb[0].mxu0 %v2131
  %v2328 = vpop.f32.mrb[0].mxu0
  %v2329 = vadd.f32 0.0, %v2328
  %v2330 = vpop.f32.mrb[0].mxu0
  %v2331 = vpop.f32.mrb[0].mxu0
  %v2332 = vadd.f32 0.0, %v2331
  %v2333 = vpop.f32.mrb[0].mxu0
  %2334 = vmatprep.mubr.bf16.mxu0 0
  %2335 = vmatmul.mubr.bf16.gmra.mrb[0].mxu0 %v2134
  %v2336 = vpop.f32.mrb[0].mxu0
  %v2337 = vadd.f32 0.0, %v2336
  %v2338 = vpop.f32.mrb[0].mxu0
  %v2339 = vpop.f32.mrb[0].mxu0
  %v2340 = vadd.f32 0.0, %v2339
  %v2341 = vpop.f32.mrb[0].mxu0
  %2342 = vmatprep.mubr.bf16.mxu0 0
  %2343 = vmatmul.mubr.bf16.gmra.mrb[0].mxu0 %v2137
  %v2344 = vpop.f32.mrb[0].mxu0
  %v2345 = vadd.f32 0.0, %v2344
  %v2346 = vpop.f32.mrb[0].mxu0
  %v2347 = vpop.f32.mrb[0].mxu0
  %v2348 = vadd.f32 0.0, %v2347
  %v2349 = vpop.f32.mrb[0].mxu0
  %2350 = vmatprep.mubr.bf16.mxu0 0
  %2351 = vmatmul.mubr.bf16.gmra.mrb[0].mxu0 %v2140
  %v2352 = vpop.f32.mrb[0].mxu0
  %v2353 = vadd.f32 0.0, %v2352
  %v2354 = vpop.f32.mrb[0].mxu0
  %v2355 = vpop.f32.mrb[0].mxu0
  %v2356 = vadd.f32 0.0, %v2355
  %v2357 = vpop.f32.mrb[0].mxu0
  %2358 = vmatprep.mubr.bf16.mxu0 0
  %2359 = vmatmul.mubr.bf16.gmra.mrb[0].mxu0 %v2143
  %v2360 = vpop.f32.mrb[0].mxu0
  %v2361 = vadd.f32 0.0, %v2360
  %v2362 = vpop.f32.mrb[0].mxu0
  %v2363 = vpop.f32.mrb[0].mxu0
  %v2364 = vadd.f32 0.0, %v2363
  %v2365 = vpop.f32.mrb[0].mxu0
  %2366 = vmatprep.mubr.bf16.mxu0 0
  %2367 = vmatmul.mubr.bf16.gmra.mrb[0].mxu0 %v2146
  %v2368 = vpop.f32.mrb[0].mxu0
  %v2369 = vadd.f32 0.0, %v2368
  %v2370 = vpop.f32.mrb[0].mxu0
  %v2371 = vpop.f32.mrb[0].mxu0
  %v2372 = vadd.f32 0.0, %v2371
  %v2373 = vpop.f32.mrb[0].mxu0
  %2374 = vmatprep.mubr.bf16.mxu0 0
  %2375 = vmatmul.mubr.bf16.gmra.mrb[0].mxu0 %v2149
  %v2376 = vpop.f32.mrb[0].mxu0
  %v2377 = vadd.f32 0.0, %v2376
  %v2378 = vpop.f32.mrb[0].mxu0
  %v2379 = vpop.f32.mrb[0].mxu0
  %v2380 = vadd.f32 0.0, %v2379
  %v2381 = vpop.f32.mrb[0].mxu0
  %2382 = vmatprep.mubr.bf16.mxu0 0
  %2383 = vmatmul.mubr.bf16.gmra.mrb[0].mxu0 %v2152
  %v2384 = vpop.f32.mrb[0].mxu0
  %v2385 = vadd.f32 0.0, %v2384
  %v2386 = vpop.f32.mrb[0].mxu0
  %v2387 = vpop.f32.mrb[0].mxu0
  %v2388 = vadd.f32 0.0, %v2387
  %v2389 = vpop.f32.mrb[0].mxu0
  %2390 = vmatprep.mubr.bf16.mxu0 0
  %2391 = vmatmul.mubr.bf16.gmra.mrb[0].mxu0 %v2155
  %v2392 = vpop.f32.mrb[0].mxu0
  %v2393 = vadd.f32 0.0, %v2392
  %v2394 = vpop.f32.mrb[0].mxu0
  %v2395 = vpop.f32.mrb[0].mxu0
  %v2396 = vadd.f32 0.0, %v2395
  %v2397 = vpop.f32.mrb[0].mxu0
  %2398 = vmatprep.mubr.bf16.mxu0 0
  %2399 = vmatmul.mubr.bf16.gmra.mrb[0].mxu0 %v2158
  %v2400 = vpop.f32.mrb[0].mxu0
  %v2401 = vadd.f32 0.0, %v2400
  %v2402 = vpop.f32.mrb[0].mxu0
  %v2403 = vpop.f32.mrb[0].mxu0
  %v2404 = vadd.f32 0.0, %v2403
  %v2405 = vpop.f32.mrb[0].mxu0
  %2406 = vmatprep.mubr.bf16.mxu0 0
  %2407 = vmatmul.mubr.bf16.gmra.mrb[0].mxu0 %v2161
  %v2408 = vpop.f32.mrb[0].mxu0
  %v2409 = vadd.f32 0.0, %v2408
  %v2410 = vpop.f32.mrb[0].mxu0
  %v2411 = vpop.f32.mrb[0].mxu0
  %v2412 = vadd.f32 0.0, %v2411
  %v2413 = vpop.f32.mrb[0].mxu0
  %2414 = vmatprep.mubr.bf16.mxu0 0
  %2415 = vmatmul.mubr.bf16.gmra.mrb[0].mxu0 %v2164
  %v2416 = vpop.f32.mrb[0].mxu0
  %v2417 = vadd.f32 0.0, %v2416
  %v2418 = vpop.f32.mrb[0].mxu0
  %v2419 = vpop.f32.mrb[0].mxu0
  %v2420 = vadd.f32 0.0, %v2419
  %v2421 = vpop.f32.mrb[0].mxu0
  %2422 = vmatprep.mubr.bf16.mxu0 0
  %2423 = vmatmul.mubr.bf16.gmra.mrb[0].mxu0 %v2167
  %v2424 = vpop.f32.mrb[0].mxu0
  %v2425 = vadd.f32 0.0, %v2424
  %v2426 = vpop.f32.mrb[0].mxu0
  %v2427 = vpop.f32.mrb[0].mxu0
  %v2428 = vadd.f32 0.0, %v2427
  %v2429 = vpop.f32.mrb[0].mxu0
  %2430 = vmatprep.mubr.bf16.mxu0 0
  %2431 = vmatmul.mubr.bf16.gmra.mrb[0].mxu0 %v2170
  %v2432 = vpop.f32.mrb[0].mxu0
  %v2433 = vadd.f32 0.0, %v2432
  %v2434 = vpop.f32.mrb[0].mxu0
  %v2435 = vpop.f32.mrb[0].mxu0
  %v2436 = vadd.f32 0.0, %v2435
  %v2437 = vpop.f32.mrb[0].mxu0
  %2438 = vmatprep.mubr.bf16.mxu0 0
  %2439 = vmatmul.mubr.bf16.gmra.mrb[0].mxu0 %v2173
  %v2440 = vpop.f32.mrb[0].mxu0
  %v2441 = vadd.f32 0.0, %v2440
  %v2442 = vpop.f32.mrb[0].mxu0
  %v2443 = vpop.f32.mrb[0].mxu0
  %v2444 = vadd.f32 0.0, %v2443
  %v2445 = vpop.f32.mrb[0].mxu0
  %2446 = vmatprep.mubr.bf16.mxu0 0
  %2447 = vmatmul.mubr.bf16.gmra.mrb[0].mxu0 %v2176
  %v2448 = vpop.f32.mrb[0].mxu0
  %v2449 = vadd.f32 0.0, %v2448
  %v2450 = vpop.f32.mrb[0].mxu0
  %v2451 = vpop.f32.mrb[0].mxu0
  %v2452 = vadd.f32 0.0, %v2451
  %v2453 = vpop.f32.mrb[0].mxu0
  %2454 = vmatprep.mubr.bf16.mxu0 0
  %2455 = vmatmul.mubr.bf16.gmra.mrb[0].mxu0 %v2179
  %v2456 = vpop.f32.mrb[0].mxu0
  %v2457 = vadd.f32 0.0, %v2456
  %v2458 = vpop.f32.mrb[0].mxu0
  %v2459 = vpop.f32.mrb[0].mxu0
  %v2460 = vadd.f32 0.0, %v2459
  %v2461 = vpop.f32.mrb[0].mxu0
  %2462 = vmatprep.mubr.bf16.mxu0 0
  %2463 = vmatmul.mubr.bf16.gmra.mrb[0].mxu0 %v2182
  %v2464 = vpop.f32.mrb[0].mxu0
  %v2465 = vadd.f32 0.0, %v2464
  %v2466 = vpop.f32.mrb[0].mxu0
  %v2467 = vpop.f32.mrb[0].mxu0
  %v2468 = vadd.f32 0.0, %v2467
  %v2469 = vpop.f32.mrb[0].mxu0
  %2470 = vmatprep.mubr.bf16.mxu0 0
  %2471 = vmatmul.mubr.bf16.gmra.mrb[0].mxu0 %v2185
  %v2472 = vpop.f32.mrb[0].mxu0
  %v2473 = vadd.f32 0.0, %v2472
  %v2474 = vpop.f32.mrb[0].mxu0
  %v2475 = vpop.f32.mrb[0].mxu0
  %v2476 = vadd.f32 0.0, %v2475
  %v2477 = vpop.f32.mrb[0].mxu0
  %2478 = vdwg.mxu0
  %v2479 = vadd.f32 %v1601, %v2225
  %v2480 = vadd.f32 %v1604, %v2228
  %v2481 = vadd.f32 %v1609, %v2233
  %v2482 = vadd.f32 %v1612, %v2236
  %v2483 = vadd.f32 %v1617, %v2241
  %v2484 = vadd.f32 %v1620, %v2244
  %v2485 = vadd.f32 %v1625, %v2249
  %v2486 = vadd.f32 %v1628, %v2252
  %v2487 = vadd.f32 %v1633, %v2257
  %v2488 = vadd.f32 %v1636, %v2260
  %v2489 = vadd.f32 %v1641, %v2265
  %v2490 = vadd.f32 %v1644, %v2268
  %v2491 = vadd.f32 %v1649, %v2273
  %v2492 = vadd.f32 %v1652, %v2276
  %v2493 = vadd.f32 %v1657, %v2281
  %v2494 = vadd.f32 %v1660, %v2284
  %v2495 = vadd.f32 %v1665, %v2289
  %v2496 = vadd.f32 %v1668, %v2292
  %v2497 = vadd.f32 %v1673, %v2297
  %v2498 = vadd.f32 %v1676, %v2300
  %v2499 = vadd.f32 %v1681, %v2305
  %v2500 = vadd.f32 %v1684, %v2308
  %v2501 = vadd.f32 %v1689, %v2313
  %v2502 = vadd.f32 %v1692, %v2316
  %v2503 = vadd.f32 %v1697, %v2321
  %v2504 = vadd.f32 %v1700, %v2324
  %v2505 = vadd.f32 %v1705, %v2329
  %v2506 = vadd.f32 %v1708, %v2332
  %v2507 = vadd.f32 %v1713, %v2337
  %v2508 = vadd.f32 %v1716, %v2340
  %v2509 = vadd.f32 %v1721, %v2345
  %v2510 = vadd.f32 %v1724, %v2348
  %v2511 = vadd.f32 %v1729, %v2353
  %v2512 = vadd.f32 %v1732, %v2356
  %v2513 = vadd.f32 %v1737, %v2361
  %v2514 = vadd.f32 %v1740, %v2364
  %v2515 = vadd.f32 %v1745, %v2369
  %v2516 = vadd.f32 %v1748, %v2372
  %v2517 = vadd.f32 %v1753, %v2377
  %v2518 = vadd.f32 %v1756, %v2380
  %v2519 = vadd.f32 %v1761, %v2385
  %v2520 = vadd.f32 %v1764, %v2388
  %v2521 = vadd.f32 %v1769, %v2393
  %v2522 = vadd.f32 %v1772, %v2396
  %v2523 = vadd.f32 %v1777, %v2401
  %v2524 = vadd.f32 %v1780, %v2404
  %v2525 = vadd.f32 %v1785, %v2409
  %v2526 = vadd.f32 %v1788, %v2412
  %v2527 = vadd.f32 %v1793, %v2417
  %v2528 = vadd.f32 %v1796, %v2420
  %v2529 = vadd.f32 %v1801, %v2425
  %v2530 = vadd.f32 %v1804, %v2428
  %v2531 = vadd.f32 %v1809, %v2433
  %v2532 = vadd.f32 %v1812, %v2436
  %v2533 = vadd.f32 %v1817, %v2441
  %v2534 = vadd.f32 %v1820, %v2444
  %v2535 = vadd.f32 %v1825, %v2449
  %v2536 = vadd.f32 %v1828, %v2452
  %v2537 = vadd.f32 %v1833, %v2457
  %v2538 = vadd.f32 %v1836, %v2460
  %v2539 = vadd.f32 %v1841, %v2465
  %v2540 = vadd.f32 %v1844, %v2468
  %v2541 = vadd.f32 %v1849, %v2473
  %v2542 = vadd.f32 %v1852, %v2476
  %v2543 = vld [vmem:[%s1858] sm:$0xf]
  %v2544 = vld [vmem:[%s1858 + $0x4] sm:$0xf]
  %v2545 = vld [vmem:[%s1858 + $0x8] sm:$0xf]
  %v2546 = vld [vmem:[%s1858 + $0xc] sm:$0xf]
  %v2547 = vld [vmem:[%s1858 + $0x10] sm:$0x1]
  %v2548 = vld [vmem:[%s1858 + $0x14] sm:$0xf]
  %v2549 = vld [vmem:[%s1858 + $0x18] sm:$0xf]
  %v2550 = vld [vmem:[%s1858 + $0x1c] sm:$0xf]
  %v2551 = vld [vmem:[%s1858 + $0x20] sm:$0xf]
  %v2552 = vld [vmem:[%s1858 + $0x24] sm:$0x1]
  %v2553 = vld [vmem:[%s1858 + $0x28] sm:$0xf]
  %v2554 = vld [vmem:[%s1858 + $0x2c] sm:$0xf]
  %v2555 = vld [vmem:[%s1858 + $0x30] sm:$0xf]
  %v2556 = vld [vmem:[%s1858 + $0x34] sm:$0xf]
  %v2557 = vld [vmem:[%s1858 + $0x38] sm:$0x1]
  %v2558 = vld [vmem:[%s1858 + $0x3c] sm:$0xf]
  %v2559 = vld [vmem:[%s1858 + $0x40] sm:$0xf]
  %v2560 = vld [vmem:[%s1858 + $0x44] sm:$0xf]
  %v2561 = vld [vmem:[%s1858 + $0x48] sm:$0xf]
  %v2562 = vld [vmem:[%s1858 + $0x4c] sm:$0x1]
  %v2563 = vld [vmem:[%s1858 + $0x50] sm:$0xf]
  %v2564 = vld [vmem:[%s1858 + $0x54] sm:$0xf]
  %v2565 = vld [vmem:[%s1858 + $0x58] sm:$0xf]
  %v2566 = vld [vmem:[%s1858 + $0x5c] sm:$0xf]
  %v2567 = vld [vmem:[%s1858 + $0x60] sm:$0x1]
  %v2568 = vld [vmem:[%s1858 + $0x64] sm:$0xf]
  %v2569 = vld [vmem:[%s1858 + $0x68] sm:$0xf]
  %v2570 = vld [vmem:[%s1858 + $0x6c] sm:$0xf]
  %v2571 = vld [vmem:[%s1858 + $0x70] sm:$0xf]
  %v2572 = vld [vmem:[%s1858 + $0x74] sm:$0x1]
  %v2573 = vld [vmem:[%s1858 + $0x78] sm:$0xf]
  %v2574 = vld [vmem:[%s1858 + $0x7c] sm:$0xf]
  %v2575 = vld [vmem:[%s1858 + $0x80] sm:$0xf]
  %v2576 = vld [vmem:[%s1858 + $0x84] sm:$0xf]
  %v2577 = vld [vmem:[%s1858 + $0x88] sm:$0x1]
  %v2578 = vld [vmem:[%s1858 + $0x8c] sm:$0xf]
  %v2579 = vld [vmem:[%s1858 + $0x90] sm:$0xf]
  %v2580 = vld [vmem:[%s1858 + $0x94] sm:$0xf]
  %v2581 = vld [vmem:[%s1858 + $0x98] sm:$0xf]
  %v2582 = vld [vmem:[%s1858 + $0x9c] sm:$0x1]
  %v2583 = vld [vmem:[%s1858 + $0xa0] sm:$0xf]
  %v2584 = vld [vmem:[%s1858 + $0xa4] sm:$0xf]
  %v2585 = vld [vmem:[%s1858 + $0xa8] sm:$0xf]
  %v2586 = vld [vmem:[%s1858 + $0xac] sm:$0xf]
  %v2587 = vld [vmem:[%s1858 + $0xb0] sm:$0x1]
  %v2588 = vld [vmem:[%s1858 + $0xb4] sm:$0xf]
  %v2589 = vld [vmem:[%s1858 + $0xb8] sm:$0xf]
  %v2590 = vld [vmem:[%s1858 + $0xbc] sm:$0xf]
  %v2591 = vld [vmem:[%s1858 + $0xc0] sm:$0xf]
  %v2592 = vld [vmem:[%s1858 + $0xc4] sm:$0x1]
  %v2593 = vld [vmem:[%s1858 + $0xc8] sm:$0xf]
  %v2594 = vld [vmem:[%s1858 + $0xcc] sm:$0xf]
  %v2595 = vld [vmem:[%s1858 + $0xd0] sm:$0xf]
  %v2596 = vld [vmem:[%s1858 + $0xd4] sm:$0xf]
  %v2597 = vld [vmem:[%s1858 + $0xd8] sm:$0x1]
  %v2598 = vld [vmem:[%s1858 + $0xdc] sm:$0xf]
  %v2599 = vld [vmem:[%s1858 + $0xe0] sm:$0xf]
  %v2600 = vld [vmem:[%s1858 + $0xe4] sm:$0xf]
  %v2601 = vld [vmem:[%s1858 + $0xe8] sm:$0xf]
  %v2602 = vld [vmem:[%s1858 + $0xec] sm:$0x1]
  %v2603 = vld [vmem:[%s1858 + $0xf0] sm:$0xf]
  %v2604 = vld [vmem:[%s1858 + $0xf4] sm:$0xf]
  %v2605 = vld [vmem:[%s1858 + $0xf8] sm:$0xf]
  %v2606 = vld [vmem:[%s1858 + $0xfc] sm:$0xf]
  %v2607 = vld [vmem:[%s1858 + $0x100] sm:$0x1]
  %v2608 = vld [vmem:[%s1858 + $0x104] sm:$0xf]
  %v2609 = vld [vmem:[%s1858 + $0x108] sm:$0xf]
  %v2610 = vld [vmem:[%s1858 + $0x10c] sm:$0xf]
  %v2611 = vld [vmem:[%s1858 + $0x110] sm:$0xf]
  %v2612 = vld [vmem:[%s1858 + $0x114] sm:$0x1]
  %v2613 = vld [vmem:[%s1858 + $0x118] sm:$0xf]
  %v2614 = vld [vmem:[%s1858 + $0x11c] sm:$0xf]
  %v2615 = vld [vmem:[%s1858 + $0x120] sm:$0xf]
  %v2616 = vld [vmem:[%s1858 + $0x124] sm:$0xf]
  %v2617 = vld [vmem:[%s1858 + $0x128] sm:$0x1]
  %v2618 = vld [vmem:[%s1858 + $0x12c] sm:$0xf]
  %v2619 = vld [vmem:[%s1858 + $0x130] sm:$0xf]
  %v2620 = vld [vmem:[%s1858 + $0x134] sm:$0xf]
  %v2621 = vld [vmem:[%s1858 + $0x138] sm:$0xf]
  %v2622 = vld [vmem:[%s1858 + $0x13c] sm:$0x1]
  %v2624 = vshrl.u32 %v2543, 16
  %v2626 = vrot.slane %v2624, 4
  %v2627 = vshll.u32 %v2543, 16
  %v2629 = vrot.slane %v2627, 5
  %v2630 = vor.u32 %v2626, %v2629
  %v2631 = vrot.slane %v2630, 4
  %v2633 = vshll.u32 %v2544, 16
  %v2635 = vrot.slane %v2633, 5
  %v2636 = vsel %vm103, %v2631, %v2635
  %v2637 = vshrl.u32 %v2544, 16
  %v2639 = vrot.slane %v2637, 4
  %v2640 = vor.u32 %v2639, %v2635
  %v2641 = vrot.slane %v2640, 4
  %v2643 = vshll.u32 %v2545, 16
  %v2645 = vrot.slane %v2643, 5
  %v2646 = vsel %vm103, %v2641, %v2645
  %v2647 = vshrl.u32 %v2545, 16
  %v2649 = vrot.slane %v2647, 4
  %v2650 = vor.u32 %v2649, %v2645
  %v2651 = vrot.slane %v2650, 4
  %v2653 = vshll.u32 %v2546, 16
  %v2655 = vrot.slane %v2653, 5
  %v2656 = vsel %vm103, %v2651, %v2655
  %v2657 = vshrl.u32 %v2546, 16
  %v2659 = vrot.slane %v2657, 4
  %v2660 = vor.u32 %v2659, %v2655
  %v2661 = vrot.slane %v2660, 4
  %v2663 = vshll.u32 %v2547, 16
  %v2665 = vrot.slane %v2663, 5
  %v2666 = vsel %vm103, %v2661, %v2665
  %v2668 = vshrl.u32 %v2548, 16
  %v2670 = vrot.slane %v2668, 4
  %v2671 = vshll.u32 %v2548, 16
  %v2673 = vrot.slane %v2671, 5
  %v2674 = vor.u32 %v2670, %v2673
  %v2675 = vrot.slane %v2674, 4
  %v2677 = vshll.u32 %v2549, 16
  %v2679 = vrot.slane %v2677, 5
  %v2680 = vsel %vm103, %v2675, %v2679
  %v2681 = vshrl.u32 %v2549, 16
  %v2683 = vrot.slane %v2681, 4
  %v2684 = vor.u32 %v2683, %v2679
  %v2685 = vrot.slane %v2684, 4
  %v2687 = vshll.u32 %v2550, 16
  %v2689 = vrot.slane %v2687, 5
  %v2690 = vsel %vm103, %v2685, %v2689
  %v2691 = vshrl.u32 %v2550, 16
  %v2693 = vrot.slane %v2691, 4
  %v2694 = vor.u32 %v2693, %v2689
  %v2695 = vrot.slane %v2694, 4
  %v2697 = vshll.u32 %v2551, 16
  %v2699 = vrot.slane %v2697, 5
  %v2700 = vsel %vm103, %v2695, %v2699
  %v2701 = vshrl.u32 %v2551, 16
  %v2703 = vrot.slane %v2701, 4
  %v2704 = vor.u32 %v2703, %v2699
  %v2705 = vrot.slane %v2704, 4
  %v2707 = vshll.u32 %v2552, 16
  %v2709 = vrot.slane %v2707, 5
  %v2710 = vsel %vm103, %v2705, %v2709
  %v2712 = vshrl.u32 %v2553, 16
  %v2714 = vrot.slane %v2712, 4
  %v2715 = vshll.u32 %v2553, 16
  %v2717 = vrot.slane %v2715, 5
  %v2718 = vor.u32 %v2714, %v2717
  %v2719 = vrot.slane %v2718, 4
  %v2721 = vshll.u32 %v2554, 16
  %v2723 = vrot.slane %v2721, 5
  %v2724 = vsel %vm103, %v2719, %v2723
  %v2725 = vshrl.u32 %v2554, 16
  %v2727 = vrot.slane %v2725, 4
  %v2728 = vor.u32 %v2727, %v2723
  %v2729 = vrot.slane %v2728, 4
  %v2731 = vshll.u32 %v2555, 16
  %v2733 = vrot.slane %v2731, 5
  %v2734 = vsel %vm103, %v2729, %v2733
  %v2735 = vshrl.u32 %v2555, 16
  %v2737 = vrot.slane %v2735, 4
  %v2738 = vor.u32 %v2737, %v2733
  %v2739 = vrot.slane %v2738, 4
  %v2741 = vshll.u32 %v2556, 16
  %v2743 = vrot.slane %v2741, 5
  %v2744 = vsel %vm103, %v2739, %v2743
  %v2745 = vshrl.u32 %v2556, 16
  %v2747 = vrot.slane %v2745, 4
  %v2748 = vor.u32 %v2747, %v2743
  %v2749 = vrot.slane %v2748, 4
  %v2751 = vshll.u32 %v2557, 16
  %v2753 = vrot.slane %v2751, 5
  %v2754 = vsel %vm103, %v2749, %v2753
  %v2756 = vshrl.u32 %v2558, 16
  %v2758 = vrot.slane %v2756, 4
  %v2759 = vshll.u32 %v2558, 16
  %v2761 = vrot.slane %v2759, 5
  %v2762 = vor.u32 %v2758, %v2761
  %v2763 = vrot.slane %v2762, 4
  %v2765 = vshll.u32 %v2559, 16
  %v2767 = vrot.slane %v2765, 5
  %v2768 = vsel %vm103, %v2763, %v2767
  %v2769 = vshrl.u32 %v2559, 16
  %v2771 = vrot.slane %v2769, 4
  %v2772 = vor.u32 %v2771, %v2767
  %v2773 = vrot.slane %v2772, 4
  %v2775 = vshll.u32 %v2560, 16
  %v2777 = vrot.slane %v2775, 5
  %v2778 = vsel %vm103, %v2773, %v2777
  %v2779 = vshrl.u32 %v2560, 16
  %v2781 = vrot.slane %v2779, 4
  %v2782 = vor.u32 %v2781, %v2777
  %v2783 = vrot.slane %v2782, 4
  %v2785 = vshll.u32 %v2561, 16
  %v2787 = vrot.slane %v2785, 5
  %v2788 = vsel %vm103, %v2783, %v2787
  %v2789 = vshrl.u32 %v2561, 16
  %v2791 = vrot.slane %v2789, 4
  %v2792 = vor.u32 %v2791, %v2787
  %v2793 = vrot.slane %v2792, 4
  %v2795 = vshll.u32 %v2562, 16
  %v2797 = vrot.slane %v2795, 5
  %v2798 = vsel %vm103, %v2793, %v2797
  %v2800 = vshrl.u32 %v2563, 16
  %v2802 = vrot.slane %v2800, 4
  %v2803 = vshll.u32 %v2563, 16
  %v2805 = vrot.slane %v2803, 5
  %v2806 = vor.u32 %v2802, %v2805
  %v2807 = vrot.slane %v2806, 4
  %v2809 = vshll.u32 %v2564, 16
  %v2811 = vrot.slane %v2809, 5
  %v2812 = vsel %vm103, %v2807, %v2811
  %v2813 = vshrl.u32 %v2564, 16
  %v2815 = vrot.slane %v2813, 4
  %v2816 = vor.u32 %v2815, %v2811
  %v2817 = vrot.slane %v2816, 4
  %v2819 = vshll.u32 %v2565, 16
  %v2821 = vrot.slane %v2819, 5
  %v2822 = vsel %vm103, %v2817, %v2821
  %v2823 = vshrl.u32 %v2565, 16
  %v2825 = vrot.slane %v2823, 4
  %v2826 = vor.u32 %v2825, %v2821
  %v2827 = vrot.slane %v2826, 4
  %v2829 = vshll.u32 %v2566, 16
  %v2831 = vrot.slane %v2829, 5
  %v2832 = vsel %vm103, %v2827, %v2831
  %v2833 = vshrl.u32 %v2566, 16
  %v2835 = vrot.slane %v2833, 4
  %v2836 = vor.u32 %v2835, %v2831
  %v2837 = vrot.slane %v2836, 4
  %v2839 = vshll.u32 %v2567, 16
  %v2841 = vrot.slane %v2839, 5
  %v2842 = vsel %vm103, %v2837, %v2841
  %v2844 = vshrl.u32 %v2568, 16
  %v2846 = vrot.slane %v2844, 4
  %v2847 = vshll.u32 %v2568, 16
  %v2849 = vrot.slane %v2847, 5
  %v2850 = vor.u32 %v2846, %v2849
  %v2851 = vrot.slane %v2850, 4
  %v2853 = vshll.u32 %v2569, 16
  %v2855 = vrot.slane %v2853, 5
  %v2856 = vsel %vm103, %v2851, %v2855
  %v2857 = vshrl.u32 %v2569, 16
  %v2859 = vrot.slane %v2857, 4
  %v2860 = vor.u32 %v2859, %v2855
  %v2861 = vrot.slane %v2860, 4
  %v2863 = vshll.u32 %v2570, 16
  %v2865 = vrot.slane %v2863, 5
  %v2866 = vsel %vm103, %v2861, %v2865
  %v2867 = vshrl.u32 %v2570, 16
  %v2869 = vrot.slane %v2867, 4
  %v2870 = vor.u32 %v2869, %v2865
  %v2871 = vrot.slane %v2870, 4
  %v2873 = vshll.u32 %v2571, 16
  %v2875 = vrot.slane %v2873, 5
  %v2876 = vsel %vm103, %v2871, %v2875
  %v2877 = vshrl.u32 %v2571, 16
  %v2879 = vrot.slane %v2877, 4
  %v2880 = vor.u32 %v2879, %v2875
  %v2881 = vrot.slane %v2880, 4
  %v2883 = vshll.u32 %v2572, 16
  %v2885 = vrot.slane %v2883, 5
  %v2886 = vsel %vm103, %v2881, %v2885
  %v2888 = vshrl.u32 %v2573, 16
  %v2890 = vrot.slane %v2888, 4
  %v2891 = vshll.u32 %v2573, 16
  %v2893 = vrot.slane %v2891, 5
  %v2894 = vor.u32 %v2890, %v2893
  %v2895 = vrot.slane %v2894, 4
  %v2897 = vshll.u32 %v2574, 16
  %v2899 = vrot.slane %v2897, 5
  %v2900 = vsel %vm103, %v2895, %v2899
  %v2901 = vshrl.u32 %v2574, 16
  %v2903 = vrot.slane %v2901, 4
  %v2904 = vor.u32 %v2903, %v2899
  %v2905 = vrot.slane %v2904, 4
  %v2907 = vshll.u32 %v2575, 16
  %v2909 = vrot.slane %v2907, 5
  %v2910 = vsel %vm103, %v2905, %v2909
  %v2911 = vshrl.u32 %v2575, 16
  %v2913 = vrot.slane %v2911, 4
  %v2914 = vor.u32 %v2913, %v2909
  %v2915 = vrot.slane %v2914, 4
  %v2917 = vshll.u32 %v2576, 16
  %v2919 = vrot.slane %v2917, 5
  %v2920 = vsel %vm103, %v2915, %v2919
  %v2921 = vshrl.u32 %v2576, 16
  %v2923 = vrot.slane %v2921, 4
  %v2924 = vor.u32 %v2923, %v2919
  %v2925 = vrot.slane %v2924, 4
  %v2927 = vshll.u32 %v2577, 16
  %v2929 = vrot.slane %v2927, 5
  %v2930 = vsel %vm103, %v2925, %v2929
  %v2932 = vshrl.u32 %v2578, 16
  %v2934 = vrot.slane %v2932, 4
  %v2935 = vshll.u32 %v2578, 16
  %v2937 = vrot.slane %v2935, 5
  %v2938 = vor.u32 %v2934, %v2937
  %v2939 = vrot.slane %v2938, 4
  %v2941 = vshll.u32 %v2579, 16
  %v2943 = vrot.slane %v2941, 5
  %v2944 = vsel %vm103, %v2939, %v2943
  %v2945 = vshrl.u32 %v2579, 16
  %v2947 = vrot.slane %v2945, 4
  %v2948 = vor.u32 %v2947, %v2943
  %v2949 = vrot.slane %v2948, 4
  %v2951 = vshll.u32 %v2580, 16
  %v2953 = vrot.slane %v2951, 5
  %v2954 = vsel %vm103, %v2949, %v2953
  %v2955 = vshrl.u32 %v2580, 16
  %v2957 = vrot.slane %v2955, 4
  %v2958 = vor.u32 %v2957, %v2953
  %v2959 = vrot.slane %v2958, 4
  %v2961 = vshll.u32 %v2581, 16
  %v2963 = vrot.slane %v2961, 5
  %v2964 = vsel %vm103, %v2959, %v2963
  %v2965 = vshrl.u32 %v2581, 16
  %v2967 = vrot.slane %v2965, 4
  %v2968 = vor.u32 %v2967, %v2963
  %v2969 = vrot.slane %v2968, 4
  %v2971 = vshll.u32 %v2582, 16
  %v2973 = vrot.slane %v2971, 5
  %v2974 = vsel %vm103, %v2969, %v2973
  %v2976 = vshrl.u32 %v2583, 16
  %v2978 = vrot.slane %v2976, 4
  %v2979 = vshll.u32 %v2583, 16
  %v2981 = vrot.slane %v2979, 5
  %v2982 = vor.u32 %v2978, %v2981
  %v2983 = vrot.slane %v2982, 4
  %v2985 = vshll.u32 %v2584, 16
  %v2987 = vrot.slane %v2985, 5
  %v2988 = vsel %vm103, %v2983, %v2987
  %v2989 = vshrl.u32 %v2584, 16
  %v2991 = vrot.slane %v2989, 4
  %v2992 = vor.u32 %v2991, %v2987
  %v2993 = vrot.slane %v2992, 4
  %v2995 = vshll.u32 %v2585, 16
  %v2997 = vrot.slane %v2995, 5
  %v2998 = vsel %vm103, %v2993, %v2997
  %v2999 = vshrl.u32 %v2585, 16
  %v3001 = vrot.slane %v2999, 4
  %v3002 = vor.u32 %v3001, %v2997
  %v3003 = vrot.slane %v3002, 4
  %v3005 = vshll.u32 %v2586, 16
  %v3007 = vrot.slane %v3005, 5
  %v3008 = vsel %vm103, %v3003, %v3007
  %v3009 = vshrl.u32 %v2586, 16
  %v3011 = vrot.slane %v3009, 4
  %v3012 = vor.u32 %v3011, %v3007
  %v3013 = vrot.slane %v3012, 4
  %v3015 = vshll.u32 %v2587, 16
  %v3017 = vrot.slane %v3015, 5
  %v3018 = vsel %vm103, %v3013, %v3017
  %v3020 = vshrl.u32 %v2588, 16
  %v3022 = vrot.slane %v3020, 4
  %v3023 = vshll.u32 %v2588, 16
  %v3025 = vrot.slane %v3023, 5
  %v3026 = vor.u32 %v3022, %v3025
  %v3027 = vrot.slane %v3026, 4
  %v3029 = vshll.u32 %v2589, 16
  %v3031 = vrot.slane %v3029, 5
  %v3032 = vsel %vm103, %v3027, %v3031
  %v3033 = vshrl.u32 %v2589, 16
  %v3035 = vrot.slane %v3033, 4
  %v3036 = vor.u32 %v3035, %v3031
  %v3037 = vrot.slane %v3036, 4
  %v3039 = vshll.u32 %v2590, 16
  %v3041 = vrot.slane %v3039, 5
  %v3042 = vsel %vm103, %v3037, %v3041
  %v3043 = vshrl.u32 %v2590, 16
  %v3045 = vrot.slane %v3043, 4
  %v3046 = vor.u32 %v3045, %v3041
  %v3047 = vrot.slane %v3046, 4
  %v3049 = vshll.u32 %v2591, 16
  %v3051 = vrot.slane %v3049, 5
  %v3052 = vsel %vm103, %v3047, %v3051
  %v3053 = vshrl.u32 %v2591, 16
  %v3055 = vrot.slane %v3053, 4
  %v3056 = vor.u32 %v3055, %v3051
  %v3057 = vrot.slane %v3056, 4
  %v3059 = vshll.u32 %v2592, 16
  %v3061 = vrot.slane %v3059, 5
  %v3062 = vsel %vm103, %v3057, %v3061
  %v3064 = vshrl.u32 %v2593, 16
  %v3066 = vrot.slane %v3064, 4
  %v3067 = vshll.u32 %v2593, 16
  %v3069 = vrot.slane %v3067, 5
  %v3070 = vor.u32 %v3066, %v3069
  %v3071 = vrot.slane %v3070, 4
  %v3073 = vshll.u32 %v2594, 16
  %v3075 = vrot.slane %v3073, 5
  %v3076 = vsel %vm103, %v3071, %v3075
  %v3077 = vshrl.u32 %v2594, 16
  %v3079 = vrot.slane %v3077, 4
  %v3080 = vor.u32 %v3079, %v3075
  %v3081 = vrot.slane %v3080, 4
  %v3083 = vshll.u32 %v2595, 16
  %v3085 = vrot.slane %v3083, 5
  %v3086 = vsel %vm103, %v3081, %v3085
  %v3087 = vshrl.u32 %v2595, 16
  %v3089 = vrot.slane %v3087, 4
  %v3090 = vor.u32 %v3089, %v3085
  %v3091 = vrot.slane %v3090, 4
  %v3093 = vshll.u32 %v2596, 16
  %v3095 = vrot.slane %v3093, 5
  %v3096 = vsel %vm103, %v3091, %v3095
  %v3097 = vshrl.u32 %v2596, 16
  %v3099 = vrot.slane %v3097, 4
  %v3100 = vor.u32 %v3099, %v3095
  %v3101 = vrot.slane %v3100, 4
  %v3103 = vshll.u32 %v2597, 16
  %v3105 = vrot.slane %v3103, 5
  %v3106 = vsel %vm103, %v3101, %v3105
  %v3108 = vshrl.u32 %v2598, 16
  %v3110 = vrot.slane %v3108, 4
  %v3111 = vshll.u32 %v2598, 16
  %v3113 = vrot.slane %v3111, 5
  %v3114 = vor.u32 %v3110, %v3113
  %v3115 = vrot.slane %v3114, 4
  %v3117 = vshll.u32 %v2599, 16
  %v3119 = vrot.slane %v3117, 5
  %v3120 = vsel %vm103, %v3115, %v3119
  %v3121 = vshrl.u32 %v2599, 16
  %v3123 = vrot.slane %v3121, 4
  %v3124 = vor.u32 %v3123, %v3119
  %v3125 = vrot.slane %v3124, 4
  %v3127 = vshll.u32 %v2600, 16
  %v3129 = vrot.slane %v3127, 5
  %v3130 = vsel %vm103, %v3125, %v3129
  %v3131 = vshrl.u32 %v2600, 16
  %v3133 = vrot.slane %v3131, 4
  %v3134 = vor.u32 %v3133, %v3129
  %v3135 = vrot.slane %v3134, 4
  %v3137 = vshll.u32 %v2601, 16
  %v3139 = vrot.slane %v3137, 5
  %v3140 = vsel %vm103, %v3135, %v3139
  %v3141 = vshrl.u32 %v2601, 16
  %v3143 = vrot.slane %v3141, 4
  %v3144 = vor.u32 %v3143, %v3139
  %v3145 = vrot.slane %v3144, 4
  %v3147 = vshll.u32 %v2602, 16
  %v3149 = vrot.slane %v3147, 5
  %v3150 = vsel %vm103, %v3145, %v3149
  %v3152 = vshrl.u32 %v2603, 16
  %v3154 = vrot.slane %v3152, 4
  %v3155 = vshll.u32 %v2603, 16
  %v3157 = vrot.slane %v3155, 5
  %v3158 = vor.u32 %v3154, %v3157
  %v3159 = vrot.slane %v3158, 4
  %v3161 = vshll.u32 %v2604, 16
  %v3163 = vrot.slane %v3161, 5
  %v3164 = vsel %vm103, %v3159, %v3163
  %v3165 = vshrl.u32 %v2604, 16
  %v3167 = vrot.slane %v3165, 4
  %v3168 = vor.u32 %v3167, %v3163
  %v3169 = vrot.slane %v3168, 4
  %v3171 = vshll.u32 %v2605, 16
  %v3173 = vrot.slane %v3171, 5
  %v3174 = vsel %vm103, %v3169, %v3173
  %v3175 = vshrl.u32 %v2605, 16
  %v3177 = vrot.slane %v3175, 4
  %v3178 = vor.u32 %v3177, %v3173
  %v3179 = vrot.slane %v3178, 4
  %v3181 = vshll.u32 %v2606, 16
  %v3183 = vrot.slane %v3181, 5
  %v3184 = vsel %vm103, %v3179, %v3183
  %v3185 = vshrl.u32 %v2606, 16
  %v3187 = vrot.slane %v3185, 4
  %v3188 = vor.u32 %v3187, %v3183
  %v3189 = vrot.slane %v3188, 4
  %v3191 = vshll.u32 %v2607, 16
  %v3193 = vrot.slane %v3191, 5
  %v3194 = vsel %vm103, %v3189, %v3193
  %v3196 = vshrl.u32 %v2608, 16
  %v3198 = vrot.slane %v3196, 4
  %v3199 = vshll.u32 %v2608, 16
  %v3201 = vrot.slane %v3199, 5
  %v3202 = vor.u32 %v3198, %v3201
  %v3203 = vrot.slane %v3202, 4
  %v3205 = vshll.u32 %v2609, 16
  %v3207 = vrot.slane %v3205, 5
  %v3208 = vsel %vm103, %v3203, %v3207
  %v3209 = vshrl.u32 %v2609, 16
  %v3211 = vrot.slane %v3209, 4
  %v3212 = vor.u32 %v3211, %v3207
  %v3213 = vrot.slane %v3212, 4
  %v3215 = vshll.u32 %v2610, 16
  %v3217 = vrot.slane %v3215, 5
  %v3218 = vsel %vm103, %v3213, %v3217
  %v3219 = vshrl.u32 %v2610, 16
  %v3221 = vrot.slane %v3219, 4
  %v3222 = vor.u32 %v3221, %v3217
  %v3223 = vrot.slane %v3222, 4
  %v3225 = vshll.u32 %v2611, 16
  %v3227 = vrot.slane %v3225, 5
  %v3228 = vsel %vm103, %v3223, %v3227
  %v3229 = vshrl.u32 %v2611, 16
  %v3231 = vrot.slane %v3229, 4
  %v3232 = vor.u32 %v3231, %v3227
  %v3233 = vrot.slane %v3232, 4
  %v3235 = vshll.u32 %v2612, 16
  %v3237 = vrot.slane %v3235, 5
  %v3238 = vsel %vm103, %v3233, %v3237
  %v3240 = vshrl.u32 %v2613, 16
  %v3242 = vrot.slane %v3240, 4
  %v3243 = vshll.u32 %v2613, 16
  %v3245 = vrot.slane %v3243, 5
  %v3246 = vor.u32 %v3242, %v3245
  %v3247 = vrot.slane %v3246, 4
  %v3249 = vshll.u32 %v2614, 16
  %v3251 = vrot.slane %v3249, 5
  %v3252 = vsel %vm103, %v3247, %v3251
  %v3253 = vshrl.u32 %v2614, 16
  %v3255 = vrot.slane %v3253, 4
  %v3256 = vor.u32 %v3255, %v3251
  %v3257 = vrot.slane %v3256, 4
  %v3259 = vshll.u32 %v2615, 16
  %v3261 = vrot.slane %v3259, 5
  %v3262 = vsel %vm103, %v3257, %v3261
  %v3263 = vshrl.u32 %v2615, 16
  %v3265 = vrot.slane %v3263, 4
  %v3266 = vor.u32 %v3265, %v3261
  %v3267 = vrot.slane %v3266, 4
  %v3269 = vshll.u32 %v2616, 16
  %v3271 = vrot.slane %v3269, 5
  %v3272 = vsel %vm103, %v3267, %v3271
  %v3273 = vshrl.u32 %v2616, 16
  %v3275 = vrot.slane %v3273, 4
  %v3276 = vor.u32 %v3275, %v3271
  %v3277 = vrot.slane %v3276, 4
  %v3279 = vshll.u32 %v2617, 16
  %v3281 = vrot.slane %v3279, 5
  %v3282 = vsel %vm103, %v3277, %v3281
  %v3284 = vshrl.u32 %v2618, 16
  %v3286 = vrot.slane %v3284, 4
  %v3287 = vshll.u32 %v2618, 16
  %v3289 = vrot.slane %v3287, 5
  %v3290 = vor.u32 %v3286, %v3289
  %v3291 = vrot.slane %v3290, 4
  %v3293 = vshll.u32 %v2619, 16
  %v3295 = vrot.slane %v3293, 5
  %v3296 = vsel %vm103, %v3291, %v3295
  %v3297 = vshrl.u32 %v2619, 16
  %v3299 = vrot.slane %v3297, 4
  %v3300 = vor.u32 %v3299, %v3295
  %v3301 = vrot.slane %v3300, 4
  %v3303 = vshll.u32 %v2620, 16
  %v3305 = vrot.slane %v3303, 5
  %v3306 = vsel %vm103, %v3301, %v3305
  %v3307 = vshrl.u32 %v2620, 16
  %v3309 = vrot.slane %v3307, 4
  %v3310 = vor.u32 %v3309, %v3305
  %v3311 = vrot.slane %v3310, 4
  %v3313 = vshll.u32 %v2621, 16
  %v3315 = vrot.slane %v3313, 5
  %v3316 = vsel %vm103, %v3311, %v3315
  %v3317 = vshrl.u32 %v2621, 16
  %v3319 = vrot.slane %v3317, 4
  %v3320 = vor.u32 %v3319, %v3315
  %v3321 = vrot.slane %v3320, 4
  %v3323 = vshll.u32 %v2622, 16
  %v3325 = vrot.slane %v3323, 5
  %v3326 = vsel %vm103, %v3321, %v3325
  %s3327 = scalar_lea.vmem %s1, 24
  %v3328 = vld [vmem:[%s3327] sm:$0xf]
  %v3329 = vld [vmem:[%s3327 + $0x4] sm:$0x3]
  %v3330 = vunpack.c.l.b16 %v2636
  %v3331 = vunpack.c.l.b16 %v2646
  %v3332 = vunpack.c.l.b16 %v2656
  %v3333 = vunpack.c.l.b16 %v2666
  %v3334 = vunpack.c.l.b16 %v2680
  %v3335 = vunpack.c.l.b16 %v2690
  %v3336 = vunpack.c.l.b16 %v2700
  %v3337 = vunpack.c.l.b16 %v2710
  %v3338 = vunpack.c.l.b16 %v2724
  %v3339 = vunpack.c.l.b16 %v2734
  %v3340 = vunpack.c.l.b16 %v2744
  %v3341 = vunpack.c.l.b16 %v2754
  %v3342 = vunpack.c.l.b16 %v2768
  %v3343 = vunpack.c.l.b16 %v2778
  %v3344 = vunpack.c.l.b16 %v2788
  %v3345 = vunpack.c.l.b16 %v2798
  %v3346 = vunpack.c.l.b16 %v2812
  %v3347 = vunpack.c.l.b16 %v2822
  %v3348 = vunpack.c.l.b16 %v2832
  %v3349 = vunpack.c.l.b16 %v2842
  %v3350 = vunpack.c.l.b16 %v2856
  %v3351 = vunpack.c.l.b16 %v2866
  %v3352 = vunpack.c.l.b16 %v2876
  %v3353 = vunpack.c.l.b16 %v2886
  %v3354 = vunpack.c.l.b16 %v2900
  %v3355 = vunpack.c.l.b16 %v2910
  %v3356 = vunpack.c.l.b16 %v2920
  %v3357 = vunpack.c.l.b16 %v2930
  %v3358 = vunpack.c.l.b16 %v2944
  %v3359 = vunpack.c.l.b16 %v2954
  %v3360 = vunpack.c.l.b16 %v2964
  %v3361 = vunpack.c.l.b16 %v2974
  %v3362 = vunpack.c.l.b16 %v2988
  %v3363 = vunpack.c.l.b16 %v2998
  %v3364 = vunpack.c.l.b16 %v3008
  %v3365 = vunpack.c.l.b16 %v3018
  %v3366 = vunpack.c.l.b16 %v3032
  %v3367 = vunpack.c.l.b16 %v3042
  %v3368 = vunpack.c.l.b16 %v3052
  %v3369 = vunpack.c.l.b16 %v3062
  %v3370 = vunpack.c.l.b16 %v3076
  %v3371 = vunpack.c.l.b16 %v3086
  %v3372 = vunpack.c.l.b16 %v3096
  %v3373 = vunpack.c.l.b16 %v3106
  %v3374 = vunpack.c.l.b16 %v3120
  %v3375 = vunpack.c.l.b16 %v3130
  %v3376 = vunpack.c.l.b16 %v3140
  %v3377 = vunpack.c.l.b16 %v3150
  %v3378 = vunpack.c.l.b16 %v3164
  %v3379 = vunpack.c.l.b16 %v3174
  %v3380 = vunpack.c.l.b16 %v3184
  %v3381 = vunpack.c.l.b16 %v3194
  %v3382 = vunpack.c.l.b16 %v3208
  %v3383 = vunpack.c.l.b16 %v3218
  %v3384 = vunpack.c.l.b16 %v3228
  %v3385 = vunpack.c.l.b16 %v3238
  %v3386 = vunpack.c.l.b16 %v3252
  %v3387 = vunpack.c.l.b16 %v3262
  %v3388 = vunpack.c.l.b16 %v3272
  %v3389 = vunpack.c.l.b16 %v3282
  %v3390 = vunpack.c.l.b16 %v3296
  %v3391 = vunpack.c.l.b16 %v3306
  %v3392 = vunpack.c.l.b16 %v3316
  %v3393 = vunpack.c.l.b16 %v3326
  %v3394 = vpack.c.b16 %v3331, %v3330
  %v3395 = vpack.c.b16 %v3333, %v3332
  %v3396 = vpack.c.b16 %v3335, %v3334
  %v3397 = vpack.c.b16 %v3337, %v3336
  %v3398 = vpack.c.b16 %v3339, %v3338
  %v3399 = vpack.c.b16 %v3341, %v3340
  %v3400 = vpack.c.b16 %v3343, %v3342
  %v3401 = vpack.c.b16 %v3345, %v3344
  %v3402 = vpack.c.b16 %v3347, %v3346
  %v3403 = vpack.c.b16 %v3349, %v3348
  %v3404 = vpack.c.b16 %v3351, %v3350
  %v3405 = vpack.c.b16 %v3353, %v3352
  %v3406 = vpack.c.b16 %v3355, %v3354
  %v3407 = vpack.c.b16 %v3357, %v3356
  %v3408 = vpack.c.b16 %v3359, %v3358
  %v3409 = vpack.c.b16 %v3361, %v3360
  %v3410 = vpack.c.b16 %v3363, %v3362
  %v3411 = vpack.c.b16 %v3365, %v3364
  %v3412 = vpack.c.b16 %v3367, %v3366
  %v3413 = vpack.c.b16 %v3369, %v3368
  %v3414 = vpack.c.b16 %v3371, %v3370
  %v3415 = vpack.c.b16 %v3373, %v3372
  %v3416 = vpack.c.b16 %v3375, %v3374
  %v3417 = vpack.c.b16 %v3377, %v3376
  %v3418 = vpack.c.b16 %v3379, %v3378
  %v3419 = vpack.c.b16 %v3381, %v3380
  %v3420 = vpack.c.b16 %v3383, %v3382
  %v3421 = vpack.c.b16 %v3385, %v3384
  %v3422 = vpack.c.b16 %v3387, %v3386
  %v3423 = vpack.c.b16 %v3389, %v3388
  %v3424 = vpack.c.b16 %v3391, %v3390
  %v3425 = vpack.c.b16 %v3393, %v3392
  %v3428 = vunpack.c.l.b16 %v3328
  %v3429 = vunpack.c.l.b16 %v3329
  %v3430 = vpack.c.b16 %v3429, %v3428
  %v3432 = vsel %vm912, %v3394, 0
  %v3435 = vsel %vm912, %v3395, 0
  %v3438 = vsel %vm912, %v3396, 0
  %v3441 = vsel %vm912, %v3397, 0
  %v3444 = vsel %vm912, %v3398, 0
  %v3447 = vsel %vm912, %v3399, 0
  %v3450 = vsel %vm912, %v3400, 0
  %v3453 = vsel %vm912, %v3401, 0
  %v3456 = vsel %vm912, %v3402, 0
  %v3459 = vsel %vm912, %v3403, 0
  %v3462 = vsel %vm912, %v3404, 0
  %v3465 = vsel %vm912, %v3405, 0
  %v3468 = vsel %vm912, %v3406, 0
  %v3471 = vsel %vm912, %v3407, 0
  %v3474 = vsel %vm912, %v3408, 0
  %v3477 = vsel %vm912, %v3409, 0
  %v3480 = vsel %vm912, %v3410, 0
  %v3483 = vsel %vm912, %v3411, 0
  %v3486 = vsel %vm912, %v3412, 0
  %v3489 = vsel %vm912, %v3413, 0
  %v3492 = vsel %vm912, %v3414, 0
  %v3495 = vsel %vm912, %v3415, 0
  %v3498 = vsel %vm912, %v3416, 0
  %v3501 = vsel %vm912, %v3417, 0
  %v3504 = vsel %vm912, %v3418, 0
  %v3507 = vsel %vm912, %v3419, 0
  %v3510 = vsel %vm912, %v3420, 0
  %v3513 = vsel %vm912, %v3421, 0
  %v3516 = vsel %vm912, %v3422, 0
  %v3519 = vsel %vm912, %v3423, 0
  %v3522 = vsel %vm912, %v3424, 0
  %v3525 = vsel %vm912, %v3425, 0
  %v3528 = vsel %vm1009, %v3430, 0
  %3530 = vmatprep.subr.bf16.mxu0 0
  %3531 = vmatpush1.bf16.msra.mxu0 %v3528
  %3532 = vmatprep.subr.bf16.mxu0 0
  %3533 = vmatpush1.bf16.msra.mxu0 0
  %3534 = vmatprep.subr.bf16.mxu0 0
  %3535 = vmatpush1.bf16.msra.mxu0 0
  %3536 = vmatprep.subr.bf16.mxu0 0
  %3537 = vmatpush1.bf16.msra.mxu0 0
  %3538 = vmatprep.subr.bf16.mxu0 0
  %3539 = vmatpush1.bf16.msra.mxu0 0
  %3540 = vmatprep.subr.bf16.mxu0 0
  %3541 = vmatpush1.bf16.msra.mxu0 0
  %3542 = vmatprep.subr.bf16.mxu0 0
  %3543 = vmatpush1.bf16.msra.mxu0 0
  %3544 = vmatprep.subr.bf16.mxu0 0
  %3545 = vmatpush1.bf16.msra.mxu0 0
  %3546 = vmatprep.subr.bf16.mxu0 0
  %3547 = vmatpush1.bf16.msra.mxu0 0
  %3548 = vmatprep.subr.bf16.mxu0 0
  %3549 = vmatpush1.bf16.msra.mxu0 0
  %3550 = vmatprep.subr.bf16.mxu0 0
  %3551 = vmatpush1.bf16.msra.mxu0 0
  %3552 = vmatprep.subr.bf16.mxu0 0
  %3553 = vmatpush1.bf16.msra.mxu0 0
  %3554 = vmatprep.subr.bf16.mxu0 0
  %3555 = vmatpush1.bf16.msra.mxu0 0
  %3556 = vmatprep.subr.bf16.mxu0 0
  %3557 = vmatpush1.bf16.msra.mxu0 0
  %3558 = vmatprep.subr.bf16.mxu0 0
  %3559 = vmatpush1.bf16.msra.mxu0 0
  %3560 = vmatprep.subr.bf16.mxu0 0
  %3561 = vmatpush1.bf16.msra.mxu0 0
  %3562 = vmatprep.mubr.bf16.mxu0 0
  %3563 = vmatmul.mubr.bf16.gmra.mrb[0].mxu0 %v3432
  %v3564 = vpop.f32.mrb[0].mxu0
  %v3565 = vadd.f32 0.0, %v3564
  %v3566 = vpop.f32.mrb[0].mxu0
  %v3567 = vpop.f32.mrb[0].mxu0
  %v3568 = vadd.f32 0.0, %v3567
  %v3569 = vpop.f32.mrb[0].mxu0
  %3570 = vmatprep.mubr.bf16.mxu0 0
  %3571 = vmatmul.mubr.bf16.gmra.mrb[0].mxu0 %v3435
  %v3572 = vpop.f32.mrb[0].mxu0
  %v3573 = vadd.f32 0.0, %v3572
  %v3574 = vpop.f32.mrb[0].mxu0
  %v3575 = vpop.f32.mrb[0].mxu0
  %v3576 = vadd.f32 0.0, %v3575
  %v3577 = vpop.f32.mrb[0].mxu0
  %3578 = vmatprep.mubr.bf16.mxu0 0
  %3579 = vmatmul.mubr.bf16.gmra.mrb[0].mxu0 %v3438
  %v3580 = vpop.f32.mrb[0].mxu0
  %v3581 = vadd.f32 0.0, %v3580
  %v3582 = vpop.f32.mrb[0].mxu0
  %v3583 = vpop.f32.mrb[0].mxu0
  %v3584 = vadd.f32 0.0, %v3583
  %v3585 = vpop.f32.mrb[0].mxu0
  %3586 = vmatprep.mubr.bf16.mxu0 0
  %3587 = vmatmul.mubr.bf16.gmra.mrb[0].mxu0 %v3441
  %v3588 = vpop.f32.mrb[0].mxu0
  %v3589 = vadd.f32 0.0, %v3588
  %v3590 = vpop.f32.mrb[0].mxu0
  %v3591 = vpop.f32.mrb[0].mxu0
  %v3592 = vadd.f32 0.0, %v3591
  %v3593 = vpop.f32.mrb[0].mxu0
  %3594 = vmatprep.mubr.bf16.mxu0 0
  %3595 = vmatmul.mubr.bf16.gmra.mrb[0].mxu0 %v3444
  %v3596 = vpop.f32.mrb[0].mxu0
  %v3597 = vadd.f32 0.0, %v3596
  %v3598 = vpop.f32.mrb[0].mxu0
  %v3599 = vpop.f32.mrb[0].mxu0
  %v3600 = vadd.f32 0.0, %v3599
  %v3601 = vpop.f32.mrb[0].mxu0
  %3602 = vmatprep.mubr.bf16.mxu0 0
  %3603 = vmatmul.mubr.bf16.gmra.mrb[0].mxu0 %v3447
  %v3604 = vpop.f32.mrb[0].mxu0
  %v3605 = vadd.f32 0.0, %v3604
  %v3606 = vpop.f32.mrb[0].mxu0
  %v3607 = vpop.f32.mrb[0].mxu0
  %v3608 = vadd.f32 0.0, %v3607
  %v3609 = vpop.f32.mrb[0].mxu0
  %3610 = vmatprep.mubr.bf16.mxu0 0
  %3611 = vmatmul.mubr.bf16.gmra.mrb[0].mxu0 %v3450
  %v3612 = vpop.f32.mrb[0].mxu0
  %v3613 = vadd.f32 0.0, %v3612
  %v3614 = vpop.f32.mrb[0].mxu0
  %v3615 = vpop.f32.mrb[0].mxu0
  %v3616 = vadd.f32 0.0, %v3615
  %v3617 = vpop.f32.mrb[0].mxu0
  %3618 = vmatprep.mubr.bf16.mxu0 0
  %3619 = vmatmul.mubr.bf16.gmra.mrb[0].mxu0 %v3453
  %v3620 = vpop.f32.mrb[0].mxu0
  %v3621 = vadd.f32 0.0, %v3620
  %v3622 = vpop.f32.mrb[0].mxu0
  %v3623 = vpop.f32.mrb[0].mxu0
  %v3624 = vadd.f32 0.0, %v3623
  %v3625 = vpop.f32.mrb[0].mxu0
  %3626 = vmatprep.mubr.bf16.mxu0 0
  %3627 = vmatmul.mubr.bf16.gmra.mrb[0].mxu0 %v3456
  %v3628 = vpop.f32.mrb[0].mxu0
  %v3629 = vadd.f32 0.0, %v3628
  %v3630 = vpop.f32.mrb[0].mxu0
  %v3631 = vpop.f32.mrb[0].mxu0
  %v3632 = vadd.f32 0.0, %v3631
  %v3633 = vpop.f32.mrb[0].mxu0
  %3634 = vmatprep.mubr.bf16.mxu0 0
  %3635 = vmatmul.mubr.bf16.gmra.mrb[0].mxu0 %v3459
  %v3636 = vpop.f32.mrb[0].mxu0
  %v3637 = vadd.f32 0.0, %v3636
  %v3638 = vpop.f32.mrb[0].mxu0
  %v3639 = vpop.f32.mrb[0].mxu0
  %v3640 = vadd.f32 0.0, %v3639
  %v3641 = vpop.f32.mrb[0].mxu0
  %3642 = vmatprep.mubr.bf16.mxu0 0
  %3643 = vmatmul.mubr.bf16.gmra.mrb[0].mxu0 %v3462
  %v3644 = vpop.f32.mrb[0].mxu0
  %v3645 = vadd.f32 0.0, %v3644
  %v3646 = vpop.f32.mrb[0].mxu0
  %v3647 = vpop.f32.mrb[0].mxu0
  %v3648 = vadd.f32 0.0, %v3647
  %v3649 = vpop.f32.mrb[0].mxu0
  %3650 = vmatprep.mubr.bf16.mxu0 0
  %3651 = vmatmul.mubr.bf16.gmra.mrb[0].mxu0 %v3465
  %v3652 = vpop.f32.mrb[0].mxu0
  %v3653 = vadd.f32 0.0, %v3652
  %v3654 = vpop.f32.mrb[0].mxu0
  %v3655 = vpop.f32.mrb[0].mxu0
  %v3656 = vadd.f32 0.0, %v3655
  %v3657 = vpop.f32.mrb[0].mxu0
  %3658 = vmatprep.mubr.bf16.mxu0 0
  %3659 = vmatmul.mubr.bf16.gmra.mrb[0].mxu0 %v3468
  %v3660 = vpop.f32.mrb[0].mxu0
  %v3661 = vadd.f32 0.0, %v3660
  %v3662 = vpop.f32.mrb[0].mxu0
  %v3663 = vpop.f32.mrb[0].mxu0
  %v3664 = vadd.f32 0.0, %v3663
  %v3665 = vpop.f32.mrb[0].mxu0
  %3666 = vmatprep.mubr.bf16.mxu0 0
  %3667 = vmatmul.mubr.bf16.gmra.mrb[0].mxu0 %v3471
  %v3668 = vpop.f32.mrb[0].mxu0
  %v3669 = vadd.f32 0.0, %v3668
  %v3670 = vpop.f32.mrb[0].mxu0
  %v3671 = vpop.f32.mrb[0].mxu0
  %v3672 = vadd.f32 0.0, %v3671
  %v3673 = vpop.f32.mrb[0].mxu0
  %3674 = vmatprep.mubr.bf16.mxu0 0
  %3675 = vmatmul.mubr.bf16.gmra.mrb[0].mxu0 %v3474
  %v3676 = vpop.f32.mrb[0].mxu0
  %v3677 = vadd.f32 0.0, %v3676
  %v3678 = vpop.f32.mrb[0].mxu0
  %v3679 = vpop.f32.mrb[0].mxu0
  %v3680 = vadd.f32 0.0, %v3679
  %v3681 = vpop.f32.mrb[0].mxu0
  %3682 = vmatprep.mubr.bf16.mxu0 0
  %3683 = vmatmul.mubr.bf16.gmra.mrb[0].mxu0 %v3477
  %v3684 = vpop.f32.mrb[0].mxu0
  %v3685 = vadd.f32 0.0, %v3684
  %v3686 = vpop.f32.mrb[0].mxu0
  %v3687 = vpop.f32.mrb[0].mxu0
  %v3688 = vadd.f32 0.0, %v3687
  %v3689 = vpop.f32.mrb[0].mxu0
  %3690 = vmatprep.mubr.bf16.mxu0 0
  %3691 = vmatmul.mubr.bf16.gmra.mrb[0].mxu0 %v3480
  %v3692 = vpop.f32.mrb[0].mxu0
  %v3693 = vadd.f32 0.0, %v3692
  %v3694 = vpop.f32.mrb[0].mxu0
  %v3695 = vpop.f32.mrb[0].mxu0
  %v3696 = vadd.f32 0.0, %v3695
  %v3697 = vpop.f32.mrb[0].mxu0
  %3698 = vmatprep.mubr.bf16.mxu0 0
  %3699 = vmatmul.mubr.bf16.gmra.mrb[0].mxu0 %v3483
  %v3700 = vpop.f32.mrb[0].mxu0
  %v3701 = vadd.f32 0.0, %v3700
  %v3702 = vpop.f32.mrb[0].mxu0
  %v3703 = vpop.f32.mrb[0].mxu0
  %v3704 = vadd.f32 0.0, %v3703
  %v3705 = vpop.f32.mrb[0].mxu0
  %3706 = vmatprep.mubr.bf16.mxu0 0
  %3707 = vmatmul.mubr.bf16.gmra.mrb[0].mxu0 %v3486
  %v3708 = vpop.f32.mrb[0].mxu0
  %v3709 = vadd.f32 0.0, %v3708
  %v3710 = vpop.f32.mrb[0].mxu0
  %v3711 = vpop.f32.mrb[0].mxu0
  %v3712 = vadd.f32 0.0, %v3711
  %v3713 = vpop.f32.mrb[0].mxu0
  %3714 = vmatprep.mubr.bf16.mxu0 0
  %3715 = vmatmul.mubr.bf16.gmra.mrb[0].mxu0 %v3489
  %v3716 = vpop.f32.mrb[0].mxu0
  %v3717 = vadd.f32 0.0, %v3716
  %v3718 = vpop.f32.mrb[0].mxu0
  %v3719 = vpop.f32.mrb[0].mxu0
  %v3720 = vadd.f32 0.0, %v3719
  %v3721 = vpop.f32.mrb[0].mxu0
  %3722 = vmatprep.mubr.bf16.mxu0 0
  %3723 = vmatmul.mubr.bf16.gmra.mrb[0].mxu0 %v3492
  %v3724 = vpop.f32.mrb[0].mxu0
  %v3725 = vadd.f32 0.0, %v3724
  %v3726 = vpop.f32.mrb[0].mxu0
  %v3727 = vpop.f32.mrb[0].mxu0
  %v3728 = vadd.f32 0.0, %v3727
  %v3729 = vpop.f32.mrb[0].mxu0
  %3730 = vmatprep.mubr.bf16.mxu0 0
  %3731 = vmatmul.mubr.bf16.gmra.mrb[0].mxu0 %v3495
  %v3732 = vpop.f32.mrb[0].mxu0
  %v3733 = vadd.f32 0.0, %v3732
  %v3734 = vpop.f32.mrb[0].mxu0
  %v3735 = vpop.f32.mrb[0].mxu0
  %v3736 = vadd.f32 0.0, %v3735
  %v3737 = vpop.f32.mrb[0].mxu0
  %3738 = vmatprep.mubr.bf16.mxu0 0
  %3739 = vmatmul.mubr.bf16.gmra.mrb[0].mxu0 %v3498
  %v3740 = vpop.f32.mrb[0].mxu0
  %v3741 = vadd.f32 0.0, %v3740
  %v3742 = vpop.f32.mrb[0].mxu0
  %v3743 = vpop.f32.mrb[0].mxu0
  %v3744 = vadd.f32 0.0, %v3743
  %v3745 = vpop.f32.mrb[0].mxu0
  %3746 = vmatprep.mubr.bf16.mxu0 0
  %3747 = vmatmul.mubr.bf16.gmra.mrb[0].mxu0 %v3501
  %v3748 = vpop.f32.mrb[0].mxu0
  %v3749 = vadd.f32 0.0, %v3748
  %v3750 = vpop.f32.mrb[0].mxu0
  %v3751 = vpop.f32.mrb[0].mxu0
  %v3752 = vadd.f32 0.0, %v3751
  %v3753 = vpop.f32.mrb[0].mxu0
  %3754 = vmatprep.mubr.bf16.mxu0 0
  %3755 = vmatmul.mubr.bf16.gmra.mrb[0].mxu0 %v3504
  %v3756 = vpop.f32.mrb[0].mxu0
  %v3757 = vadd.f32 0.0, %v3756
  %v3758 = vpop.f32.mrb[0].mxu0
  %v3759 = vpop.f32.mrb[0].mxu0
  %v3760 = vadd.f32 0.0, %v3759
  %v3761 = vpop.f32.mrb[0].mxu0
  %3762 = vmatprep.mubr.bf16.mxu0 0
  %3763 = vmatmul.mubr.bf16.gmra.mrb[0].mxu0 %v3507
  %v3764 = vpop.f32.mrb[0].mxu0
  %v3765 = vadd.f32 0.0, %v3764
  %v3766 = vpop.f32.mrb[0].mxu0
  %v3767 = vpop.f32.mrb[0].mxu0
  %v3768 = vadd.f32 0.0, %v3767
  %v3769 = vpop.f32.mrb[0].mxu0
  %3770 = vmatprep.mubr.bf16.mxu0 0
  %3771 = vmatmul.mubr.bf16.gmra.mrb[0].mxu0 %v3510
  %v3772 = vpop.f32.mrb[0].mxu0
  %v3773 = vadd.f32 0.0, %v3772
  %v3774 = vpop.f32.mrb[0].mxu0
  %v3775 = vpop.f32.mrb[0].mxu0
  %v3776 = vadd.f32 0.0, %v3775
  %v3777 = vpop.f32.mrb[0].mxu0
  %3778 = vmatprep.mubr.bf16.mxu0 0
  %3779 = vmatmul.mubr.bf16.gmra.mrb[0].mxu0 %v3513
  %v3780 = vpop.f32.mrb[0].mxu0
  %v3781 = vadd.f32 0.0, %v3780
  %v3782 = vpop.f32.mrb[0].mxu0
  %v3783 = vpop.f32.mrb[0].mxu0
  %v3784 = vadd.f32 0.0, %v3783
  %v3785 = vpop.f32.mrb[0].mxu0
  %3786 = vmatprep.mubr.bf16.mxu0 0
  %3787 = vmatmul.mubr.bf16.gmra.mrb[0].mxu0 %v3516
  %v3788 = vpop.f32.mrb[0].mxu0
  %v3789 = vadd.f32 0.0, %v3788
  %v3790 = vpop.f32.mrb[0].mxu0
  %v3791 = vpop.f32.mrb[0].mxu0
  %v3792 = vadd.f32 0.0, %v3791
  %v3793 = vpop.f32.mrb[0].mxu0
  %3794 = vmatprep.mubr.bf16.mxu0 0
  %3795 = vmatmul.mubr.bf16.gmra.mrb[0].mxu0 %v3519
  %v3796 = vpop.f32.mrb[0].mxu0
  %v3797 = vadd.f32 0.0, %v3796
  %v3798 = vpop.f32.mrb[0].mxu0
  %v3799 = vpop.f32.mrb[0].mxu0
  %v3800 = vadd.f32 0.0, %v3799
  %v3801 = vpop.f32.mrb[0].mxu0
  %3802 = vmatprep.mubr.bf16.mxu0 0
  %3803 = vmatmul.mubr.bf16.gmra.mrb[0].mxu0 %v3522
  %v3804 = vpop.f32.mrb[0].mxu0
  %v3805 = vadd.f32 0.0, %v3804
  %v3806 = vpop.f32.mrb[0].mxu0
  %v3807 = vpop.f32.mrb[0].mxu0
  %v3808 = vadd.f32 0.0, %v3807
  %v3809 = vpop.f32.mrb[0].mxu0
  %3810 = vmatprep.mubr.bf16.mxu0 0
  %3811 = vmatmul.mubr.bf16.gmra.mrb[0].mxu0 %v3525
  %v3812 = vpop.f32.mrb[0].mxu0
  %v3813 = vadd.f32 0.0, %v3812
  %v3814 = vpop.f32.mrb[0].mxu0
  %v3815 = vpop.f32.mrb[0].mxu0
  %v3816 = vadd.f32 0.0, %v3815
  %v3817 = vpop.f32.mrb[0].mxu0
  %3818 = vdwg.mxu0
  %v3819 = vadd.f32 %v2479, %v3565
  %v3820 = vadd.f32 %v2480, %v3568
  %v3821 = vadd.f32 %v2481, %v3573
  %v3822 = vadd.f32 %v2482, %v3576
  %v3823 = vadd.f32 %v2483, %v3581
  %v3824 = vadd.f32 %v2484, %v3584
  %v3825 = vadd.f32 %v2485, %v3589
  %v3826 = vadd.f32 %v2486, %v3592
  %v3827 = vadd.f32 %v2487, %v3597
  %v3828 = vadd.f32 %v2488, %v3600
  %v3829 = vadd.f32 %v2489, %v3605
  %v3830 = vadd.f32 %v2490, %v3608
  %v3831 = vadd.f32 %v2491, %v3613
  %v3832 = vadd.f32 %v2492, %v3616
  %v3833 = vadd.f32 %v2493, %v3621
  %v3834 = vadd.f32 %v2494, %v3624
  %v3835 = vadd.f32 %v2495, %v3629
  %v3836 = vadd.f32 %v2496, %v3632
  %v3837 = vadd.f32 %v2497, %v3637
  %v3838 = vadd.f32 %v2498, %v3640
  %v3839 = vadd.f32 %v2499, %v3645
  %v3840 = vadd.f32 %v2500, %v3648
  %v3841 = vadd.f32 %v2501, %v3653
  %v3842 = vadd.f32 %v2502, %v3656
  %v3843 = vadd.f32 %v2503, %v3661
  %v3844 = vadd.f32 %v2504, %v3664
  %v3845 = vadd.f32 %v2505, %v3669
  %v3846 = vadd.f32 %v2506, %v3672
  %v3847 = vadd.f32 %v2507, %v3677
  %v3848 = vadd.f32 %v2508, %v3680
  %v3849 = vadd.f32 %v2509, %v3685
  %v3850 = vadd.f32 %v2510, %v3688
  %v3851 = vadd.f32 %v2511, %v3693
  %v3852 = vadd.f32 %v2512, %v3696
  %v3853 = vadd.f32 %v2513, %v3701
  %v3854 = vadd.f32 %v2514, %v3704
  %v3855 = vadd.f32 %v2515, %v3709
  %v3856 = vadd.f32 %v2516, %v3712
  %v3857 = vadd.f32 %v2517, %v3717
  %v3858 = vadd.f32 %v2518, %v3720
  %v3859 = vadd.f32 %v2519, %v3725
  %v3860 = vadd.f32 %v2520, %v3728
  %v3861 = vadd.f32 %v2521, %v3733
  %v3862 = vadd.f32 %v2522, %v3736
  %v3863 = vadd.f32 %v2523, %v3741
  %v3864 = vadd.f32 %v2524, %v3744
  %v3865 = vadd.f32 %v2525, %v3749
  %v3866 = vadd.f32 %v2526, %v3752
  %v3867 = vadd.f32 %v2527, %v3757
  %v3868 = vadd.f32 %v2528, %v3760
  %v3869 = vadd.f32 %v2529, %v3765
  %v3870 = vadd.f32 %v2530, %v3768
  %v3871 = vadd.f32 %v2531, %v3773
  %v3872 = vadd.f32 %v2532, %v3776
  %v3873 = vadd.f32 %v2533, %v3781
  %v3874 = vadd.f32 %v2534, %v3784
  %v3875 = vadd.f32 %v2535, %v3789
  %v3876 = vadd.f32 %v2536, %v3792
  %v3877 = vadd.f32 %v2537, %v3797
  %v3878 = vadd.f32 %v2538, %v3800
  %v3879 = vadd.f32 %v2539, %v3805
  %v3880 = vadd.f32 %v2540, %v3808
  %v3881 = vadd.f32 %v2541, %v3813
  %v3882 = vadd.f32 %v2542, %v3816
  %v3883 = vld [vmem:[%s2] sm:$0x1]
  %v3885 = vlaneseq
  %v3886 = vshrl.u32 %v3885, 7
  %v3887 = vsub.s32 0, %v3886
  %v3888 = vrot.slane %v3883, %v3887
  %v3890 = vadd.f32 %v3819, %v3888
  %v3891 = vadd.f32 %v3820, %v3888
  %v3892 = vadd.f32 %v3821, %v3888
  %v3893 = vadd.f32 %v3822, %v3888
  %v3894 = vadd.f32 %v3823, %v3888
  %v3895 = vadd.f32 %v3824, %v3888
  %v3896 = vadd.f32 %v3825, %v3888
  %v3897 = vadd.f32 %v3826, %v3888
  %v3898 = vadd.f32 %v3827, %v3888
  %v3899 = vadd.f32 %v3828, %v3888
  %v3900 = vadd.f32 %v3829, %v3888
  %v3901 = vadd.f32 %v3830, %v3888
  %v3902 = vadd.f32 %v3831, %v3888
  %v3903 = vadd.f32 %v3832, %v3888
  %v3904 = vadd.f32 %v3833, %v3888
  %v3905 = vadd.f32 %v3834, %v3888
  %v3906 = vadd.f32 %v3835, %v3888
  %v3907 = vadd.f32 %v3836, %v3888
  %v3908 = vadd.f32 %v3837, %v3888
  %v3909 = vadd.f32 %v3838, %v3888
  %v3910 = vadd.f32 %v3839, %v3888
  %v3911 = vadd.f32 %v3840, %v3888
  %v3912 = vadd.f32 %v3841, %v3888
  %v3913 = vadd.f32 %v3842, %v3888
  %v3914 = vadd.f32 %v3843, %v3888
  %v3915 = vadd.f32 %v3844, %v3888
  %v3916 = vadd.f32 %v3845, %v3888
  %v3917 = vadd.f32 %v3846, %v3888
  %v3918 = vadd.f32 %v3847, %v3888
  %v3919 = vadd.f32 %v3848, %v3888
  %v3920 = vadd.f32 %v3849, %v3888
  %v3921 = vadd.f32 %v3850, %v3888
  %v3922 = vadd.f32 %v3851, %v3888
  %v3923 = vadd.f32 %v3852, %v3888
  %v3924 = vadd.f32 %v3853, %v3888
  %v3925 = vadd.f32 %v3854, %v3888
  %v3926 = vadd.f32 %v3855, %v3888
  %v3927 = vadd.f32 %v3856, %v3888
  %v3928 = vadd.f32 %v3857, %v3888
  %v3929 = vadd.f32 %v3858, %v3888
  %v3930 = vadd.f32 %v3859, %v3888
  %v3931 = vadd.f32 %v3860, %v3888
  %v3932 = vadd.f32 %v3861, %v3888
  %v3933 = vadd.f32 %v3862, %v3888
  %v3934 = vadd.f32 %v3863, %v3888
  %v3935 = vadd.f32 %v3864, %v3888
  %v3936 = vadd.f32 %v3865, %v3888
  %v3937 = vadd.f32 %v3866, %v3888
  %v3938 = vadd.f32 %v3867, %v3888
  %v3939 = vadd.f32 %v3868, %v3888
  %v3940 = vadd.f32 %v3869, %v3888
  %v3941 = vadd.f32 %v3870, %v3888
  %v3942 = vadd.f32 %v3871, %v3888
  %v3943 = vadd.f32 %v3872, %v3888
  %v3944 = vadd.f32 %v3873, %v3888
  %v3945 = vadd.f32 %v3874, %v3888
  %v3946 = vadd.f32 %v3875, %v3888
  %v3947 = vadd.f32 %v3876, %v3888
  %v3948 = vadd.f32 %v3877, %v3888
  %v3949 = vadd.f32 %v3878, %v3888
  %v3950 = vadd.f32 %v3879, %v3888
  %v3951 = vadd.f32 %v3880, %v3888
  %v3952 = vadd.f32 %v3881, %v3888
  %v3953 = vadd.f32 %v3882, %v3888
  %v3954 = vmax.f32 %v3890, 0.0
  %v3955 = vmax.f32 %v3891, 0.0
  %v3956 = vmax.f32 %v3892, 0.0
  %v3957 = vmax.f32 %v3893, 0.0
  %v3958 = vmax.f32 %v3894, 0.0
  %v3959 = vmax.f32 %v3895, 0.0
  %v3960 = vmax.f32 %v3896, 0.0
  %v3961 = vmax.f32 %v3897, 0.0
  %v3962 = vmax.f32 %v3898, 0.0
  %v3963 = vmax.f32 %v3899, 0.0
  %v3964 = vmax.f32 %v3900, 0.0
  %v3965 = vmax.f32 %v3901, 0.0
  %v3966 = vmax.f32 %v3902, 0.0
  %v3967 = vmax.f32 %v3903, 0.0
  %v3968 = vmax.f32 %v3904, 0.0
  %v3969 = vmax.f32 %v3905, 0.0
  %v3970 = vmax.f32 %v3906, 0.0
  %v3971 = vmax.f32 %v3907, 0.0
  %v3972 = vmax.f32 %v3908, 0.0
  %v3973 = vmax.f32 %v3909, 0.0
  %v3974 = vmax.f32 %v3910, 0.0
  %v3975 = vmax.f32 %v3911, 0.0
  %v3976 = vmax.f32 %v3912, 0.0
  %v3977 = vmax.f32 %v3913, 0.0
  %v3978 = vmax.f32 %v3914, 0.0
  %v3979 = vmax.f32 %v3915, 0.0
  %v3980 = vmax.f32 %v3916, 0.0
  %v3981 = vmax.f32 %v3917, 0.0
  %v3982 = vmax.f32 %v3918, 0.0
  %v3983 = vmax.f32 %v3919, 0.0
  %v3984 = vmax.f32 %v3920, 0.0
  %v3985 = vmax.f32 %v3921, 0.0
  %v3986 = vmax.f32 %v3922, 0.0
  %v3987 = vmax.f32 %v3923, 0.0
  %v3988 = vmax.f32 %v3924, 0.0
  %v3989 = vmax.f32 %v3925, 0.0
  %v3990 = vmax.f32 %v3926, 0.0
  %v3991 = vmax.f32 %v3927, 0.0
  %v3992 = vmax.f32 %v3928, 0.0
  %v3993 = vmax.f32 %v3929, 0.0
  %v3994 = vmax.f32 %v3930, 0.0
  %v3995 = vmax.f32 %v3931, 0.0
  %v3996 = vmax.f32 %v3932, 0.0
  %v3997 = vmax.f32 %v3933, 0.0
  %v3998 = vmax.f32 %v3934, 0.0
  %v3999 = vmax.f32 %v3935, 0.0
  %v4000 = vmax.f32 %v3936, 0.0
  %v4001 = vmax.f32 %v3937, 0.0
  %v4002 = vmax.f32 %v3938, 0.0
  %v4003 = vmax.f32 %v3939, 0.0
  %v4004 = vmax.f32 %v3940, 0.0
  %v4005 = vmax.f32 %v3941, 0.0
  %v4006 = vmax.f32 %v3942, 0.0
  %v4007 = vmax.f32 %v3943, 0.0
  %v4008 = vmax.f32 %v3944, 0.0
  %v4009 = vmax.f32 %v3945, 0.0
  %v4010 = vmax.f32 %v3946, 0.0
  %v4011 = vmax.f32 %v3947, 0.0
  %v4012 = vmax.f32 %v3948, 0.0
  %v4013 = vmax.f32 %v3949, 0.0
  %v4014 = vmax.f32 %v3950, 0.0
  %v4015 = vmax.f32 %v3951, 0.0
  %v4016 = vmax.f32 %v3952, 0.0
  %v4017 = vmax.f32 %v3953, 0.0
  %v4018 = vpack.c.bf16 %v3955, %v3954
  %v4019 = vpack.c.bf16 %v3957, %v3956
  %v4020 = vpack.c.bf16 %v3959, %v3958
  %v4021 = vpack.c.bf16 %v3961, %v3960
  %v4022 = vpack.c.bf16 %v3963, %v3962
  %v4023 = vpack.c.bf16 %v3965, %v3964
  %v4024 = vpack.c.bf16 %v3967, %v3966
  %v4025 = vpack.c.bf16 %v3969, %v3968
  %v4026 = vpack.c.bf16 %v3971, %v3970
  %v4027 = vpack.c.bf16 %v3973, %v3972
  %v4028 = vpack.c.bf16 %v3975, %v3974
  %v4029 = vpack.c.bf16 %v3977, %v3976
  %v4030 = vpack.c.bf16 %v3979, %v3978
  %v4031 = vpack.c.bf16 %v3981, %v3980
  %v4032 = vpack.c.bf16 %v3983, %v3982
  %v4033 = vpack.c.bf16 %v3985, %v3984
  %v4034 = vpack.c.bf16 %v3987, %v3986
  %v4035 = vpack.c.bf16 %v3989, %v3988
  %v4036 = vpack.c.bf16 %v3991, %v3990
  %v4037 = vpack.c.bf16 %v3993, %v3992
  %v4038 = vpack.c.bf16 %v3995, %v3994
  %v4039 = vpack.c.bf16 %v3997, %v3996
  %v4040 = vpack.c.bf16 %v3999, %v3998
  %v4041 = vpack.c.bf16 %v4001, %v4000
  %v4042 = vpack.c.bf16 %v4003, %v4002
  %v4043 = vpack.c.bf16 %v4005, %v4004
  %v4044 = vpack.c.bf16 %v4007, %v4006
  %v4045 = vpack.c.bf16 %v4009, %v4008
  %v4046 = vpack.c.bf16 %v4011, %v4010
  %v4047 = vpack.c.bf16 %v4013, %v4012
  %v4048 = vpack.c.bf16 %v4015, %v4014
  %v4049 = vpack.c.bf16 %v4017, %v4016
  %v4082 = vunpack.c.l.b16 %v4018
  %v4083 = vunpack.c.h.b16 %v4018
  %v4084 = vunpack.c.l.b16 %v4019
  %v4085 = vunpack.c.h.b16 %v4019
  %v4086 = vunpack.c.l.b16 %v4020
  %v4087 = vunpack.c.h.b16 %v4020
  %v4088 = vunpack.c.l.b16 %v4021
  %v4089 = vunpack.c.h.b16 %v4021
  %v4090 = vunpack.c.l.b16 %v4022
  %v4091 = vunpack.c.h.b16 %v4022
  %v4092 = vunpack.c.l.b16 %v4023
  %v4093 = vunpack.c.h.b16 %v4023
  %v4094 = vunpack.c.l.b16 %v4024
  %v4095 = vunpack.c.h.b16 %v4024
  %v4096 = vunpack.c.l.b16 %v4025
  %v4097 = vunpack.c.h.b16 %v4025
  %v4098 = vunpack.c.l.b16 %v4026
  %v4099 = vunpack.c.h.b16 %v4026
  %v4100 = vunpack.c.l.b16 %v4027
  %v4101 = vunpack.c.h.b16 %v4027
  %v4102 = vunpack.c.l.b16 %v4028
  %v4103 = vunpack.c.h.b16 %v4028
  %v4104 = vunpack.c.l.b16 %v4029
  %v4105 = vunpack.c.h.b16 %v4029
  %v4106 = vunpack.c.l.b16 %v4030
  %v4107 = vunpack.c.h.b16 %v4030
  %v4108 = vunpack.c.l.b16 %v4031
  %v4109 = vunpack.c.h.b16 %v4031
  %v4110 = vunpack.c.l.b16 %v4032
  %v4111 = vunpack.c.h.b16 %v4032
  %v4112 = vunpack.c.l.b16 %v4033
  %v4113 = vunpack.c.h.b16 %v4033
  %v4114 = vunpack.c.l.b16 %v4034
  %v4115 = vunpack.c.h.b16 %v4034
  %v4116 = vunpack.c.l.b16 %v4035
  %v4117 = vunpack.c.h.b16 %v4035
  %v4118 = vunpack.c.l.b16 %v4036
  %v4119 = vunpack.c.h.b16 %v4036
  %v4120 = vunpack.c.l.b16 %v4037
  %v4121 = vunpack.c.h.b16 %v4037
  %v4122 = vunpack.c.l.b16 %v4038
  %v4123 = vunpack.c.h.b16 %v4038
  %v4124 = vunpack.c.l.b16 %v4039
  %v4125 = vunpack.c.h.b16 %v4039
  %v4126 = vunpack.c.l.b16 %v4040
  %v4127 = vunpack.c.h.b16 %v4040
  %v4128 = vunpack.c.l.b16 %v4041
  %v4129 = vunpack.c.h.b16 %v4041
  %v4130 = vunpack.c.l.b16 %v4042
  %v4131 = vunpack.c.h.b16 %v4042
  %v4132 = vunpack.c.l.b16 %v4043
  %v4133 = vunpack.c.h.b16 %v4043
  %v4134 = vunpack.c.l.b16 %v4044
  %v4135 = vunpack.c.h.b16 %v4044
  %v4136 = vunpack.c.l.b16 %v4045
  %v4137 = vunpack.c.h.b16 %v4045
  %v4138 = vunpack.c.l.b16 %v4046
  %v4139 = vunpack.c.h.b16 %v4046
  %v4140 = vunpack.c.l.b16 %v4047
  %v4141 = vunpack.c.h.b16 %v4047
  %v4142 = vunpack.c.l.b16 %v4048
  %v4143 = vunpack.c.h.b16 %v4048
  %v4144 = vunpack.c.l.b16 %v4049
  %v4145 = vunpack.c.h.b16 %v4049
  %v4146 = vpack.c.b16 %v4082, %v4082
  %v4147 = vpack.c.b16 %v4083, %v4083
  %v4148 = vpack.c.b16 %v4084, %v4084
  %v4149 = vpack.c.b16 %v4085, %v4085
  %v4150 = vpack.c.b16 %v4086, %v4086
  %v4151 = vpack.c.b16 %v4087, %v4087
  %v4152 = vpack.c.b16 %v4088, %v4088
  %v4153 = vpack.c.b16 %v4089, %v4089
  %v4154 = vpack.c.b16 %v4090, %v4090
  %v4155 = vpack.c.b16 %v4091, %v4091
  %v4156 = vpack.c.b16 %v4092, %v4092
  %v4157 = vpack.c.b16 %v4093, %v4093
  %v4158 = vpack.c.b16 %v4094, %v4094
  %v4159 = vpack.c.b16 %v4095, %v4095
  %v4160 = vpack.c.b16 %v4096, %v4096
  %v4161 = vpack.c.b16 %v4097, %v4097
  %v4162 = vpack.c.b16 %v4098, %v4098
  %v4163 = vpack.c.b16 %v4099, %v4099
  %v4164 = vpack.c.b16 %v4100, %v4100
  %v4165 = vpack.c.b16 %v4101, %v4101
  %v4166 = vpack.c.b16 %v4102, %v4102
  %v4167 = vpack.c.b16 %v4103, %v4103
  %v4168 = vpack.c.b16 %v4104, %v4104
  %v4169 = vpack.c.b16 %v4105, %v4105
  %v4170 = vpack.c.b16 %v4106, %v4106
  %v4171 = vpack.c.b16 %v4107, %v4107
  %v4172 = vpack.c.b16 %v4108, %v4108
  %v4173 = vpack.c.b16 %v4109, %v4109
  %v4174 = vpack.c.b16 %v4110, %v4110
  %v4175 = vpack.c.b16 %v4111, %v4111
  %v4176 = vpack.c.b16 %v4112, %v4112
  %v4177 = vpack.c.b16 %v4113, %v4113
  %v4178 = vpack.c.b16 %v4114, %v4114
  %v4179 = vpack.c.b16 %v4115, %v4115
  %v4180 = vpack.c.b16 %v4116, %v4116
  %v4181 = vpack.c.b16 %v4117, %v4117
  %v4182 = vpack.c.b16 %v4118, %v4118
  %v4183 = vpack.c.b16 %v4119, %v4119
  %v4184 = vpack.c.b16 %v4120, %v4120
  %v4185 = vpack.c.b16 %v4121, %v4121
  %v4186 = vpack.c.b16 %v4122, %v4122
  %v4187 = vpack.c.b16 %v4123, %v4123
  %v4188 = vpack.c.b16 %v4124, %v4124
  %v4189 = vpack.c.b16 %v4125, %v4125
  %v4190 = vpack.c.b16 %v4126, %v4126
  %v4191 = vpack.c.b16 %v4127, %v4127
  %v4192 = vpack.c.b16 %v4128, %v4128
  %v4193 = vpack.c.b16 %v4129, %v4129
  %v4194 = vpack.c.b16 %v4130, %v4130
  %v4195 = vpack.c.b16 %v4131, %v4131
  %v4196 = vpack.c.b16 %v4132, %v4132
  %v4197 = vpack.c.b16 %v4133, %v4133
  %v4198 = vpack.c.b16 %v4134, %v4134
  %v4199 = vpack.c.b16 %v4135, %v4135
  %v4200 = vpack.c.b16 %v4136, %v4136
  %v4201 = vpack.c.b16 %v4137, %v4137
  %v4202 = vpack.c.b16 %v4138, %v4138
  %v4203 = vpack.c.b16 %v4139, %v4139
  %v4204 = vpack.c.b16 %v4140, %v4140
  %v4205 = vpack.c.b16 %v4141, %v4141
  %v4206 = vpack.c.b16 %v4142, %v4142
  %v4207 = vpack.c.b16 %v4143, %v4143
  %v4208 = vpack.c.b16 %v4144, %v4144
  %v4209 = vpack.c.b16 %v4145, %v4145
  %vm4274 = vcmask 125952
  %4275 = vst.msk [vmem:[%s3] sm:$0xf] %vm4274, %v4146
  %4276 = vst.msk [vmem:[%s3 + $0x4] sm:$0xf] %vm4274, %v4147
  %4277 = vst.msk [vmem:[%s3 + $0x8] sm:$0xf] %vm4274, %v4148
  %4278 = vst.msk [vmem:[%s3 + $0xc] sm:$0xf] %vm4274, %v4149
  %4279 = vst.msk [vmem:[%s3 + $0x10] sm:$0xf] %vm4274, %v4150
  %4280 = vst.msk [vmem:[%s3 + $0x14] sm:$0xf] %vm4274, %v4151
  %4281 = vst.msk [vmem:[%s3 + $0x18] sm:$0xf] %vm4274, %v4152
  %4282 = vst.msk [vmem:[%s3 + $0x1c] sm:$0xf] %vm4274, %v4153
  %4283 = vst.msk [vmem:[%s3 + $0x20] sm:$0xf] %vm4274, %v4154
  %4284 = vst.msk [vmem:[%s3 + $0x24] sm:$0xf] %vm4274, %v4155
  %4285 = vst.msk [vmem:[%s3 + $0x28] sm:$0xf] %vm4274, %v4156
  %4286 = vst.msk [vmem:[%s3 + $0x2c] sm:$0xf] %vm4274, %v4157
  %4287 = vst.msk [vmem:[%s3 + $0x30] sm:$0xf] %vm4274, %v4158
  %4288 = vst.msk [vmem:[%s3 + $0x34] sm:$0xf] %vm4274, %v4159
  %4289 = vst.msk [vmem:[%s3 + $0x38] sm:$0xf] %vm4274, %v4160
  %4290 = vst.msk [vmem:[%s3 + $0x3c] sm:$0xf] %vm4274, %v4161
  %4291 = vst.msk [vmem:[%s3 + $0x40] sm:$0xf] %vm4274, %v4162
  %4292 = vst.msk [vmem:[%s3 + $0x44] sm:$0xf] %vm4274, %v4163
  %4293 = vst.msk [vmem:[%s3 + $0x48] sm:$0xf] %vm4274, %v4164
  %4294 = vst.msk [vmem:[%s3 + $0x4c] sm:$0xf] %vm4274, %v4165
  %4295 = vst.msk [vmem:[%s3 + $0x50] sm:$0xf] %vm4274, %v4166
  %4296 = vst.msk [vmem:[%s3 + $0x54] sm:$0xf] %vm4274, %v4167
  %4297 = vst.msk [vmem:[%s3 + $0x58] sm:$0xf] %vm4274, %v4168
  %4298 = vst.msk [vmem:[%s3 + $0x5c] sm:$0xf] %vm4274, %v4169
  %4299 = vst.msk [vmem:[%s3 + $0x60] sm:$0xf] %vm4274, %v4170
  %4300 = vst.msk [vmem:[%s3 + $0x64] sm:$0xf] %vm4274, %v4171
  %4301 = vst.msk [vmem:[%s3 + $0x68] sm:$0xf] %vm4274, %v4172
  %4302 = vst.msk [vmem:[%s3 + $0x6c] sm:$0xf] %vm4274, %v4173
  %4303 = vst.msk [vmem:[%s3 + $0x70] sm:$0xf] %vm4274, %v4174
  %4304 = vst.msk [vmem:[%s3 + $0x74] sm:$0xf] %vm4274, %v4175
  %4305 = vst.msk [vmem:[%s3 + $0x78] sm:$0xf] %vm4274, %v4176
  %4306 = vst.msk [vmem:[%s3 + $0x7c] sm:$0xf] %vm4274, %v4177
  %4307 = vst.msk [vmem:[%s3 + $0x80] sm:$0xf] %vm4274, %v4178
  %4308 = vst.msk [vmem:[%s3 + $0x84] sm:$0xf] %vm4274, %v4179
  %4309 = vst.msk [vmem:[%s3 + $0x88] sm:$0xf] %vm4274, %v4180
  %4310 = vst.msk [vmem:[%s3 + $0x8c] sm:$0xf] %vm4274, %v4181
  %4311 = vst.msk [vmem:[%s3 + $0x90] sm:$0xf] %vm4274, %v4182
  %4312 = vst.msk [vmem:[%s3 + $0x94] sm:$0xf] %vm4274, %v4183
  %4313 = vst.msk [vmem:[%s3 + $0x98] sm:$0xf] %vm4274, %v4184
  %4314 = vst.msk [vmem:[%s3 + $0x9c] sm:$0xf] %vm4274, %v4185
  %4315 = vst.msk [vmem:[%s3 + $0xa0] sm:$0xf] %vm4274, %v4186
  %4316 = vst.msk [vmem:[%s3 + $0xa4] sm:$0xf] %vm4274, %v4187
  %4317 = vst.msk [vmem:[%s3 + $0xa8] sm:$0xf] %vm4274, %v4188
  %4318 = vst.msk [vmem:[%s3 + $0xac] sm:$0xf] %vm4274, %v4189
  %4319 = vst.msk [vmem:[%s3 + $0xb0] sm:$0xf] %vm4274, %v4190
  %4320 = vst.msk [vmem:[%s3 + $0xb4] sm:$0xf] %vm4274, %v4191
  %4321 = vst.msk [vmem:[%s3 + $0xb8] sm:$0xf] %vm4274, %v4192
  %4322 = vst.msk [vmem:[%s3 + $0xbc] sm:$0xf] %vm4274, %v4193
  %4323 = vst.msk [vmem:[%s3 + $0xc0] sm:$0xf] %vm4274, %v4194
  %4324 = vst.msk [vmem:[%s3 + $0xc4] sm:$0xf] %vm4274, %v4195
  %4325 = vst.msk [vmem:[%s3 + $0xc8] sm:$0xf] %vm4274, %v4196
  %4326 = vst.msk [vmem:[%s3 + $0xcc] sm:$0xf] %vm4274, %v4197
  %4327 = vst.msk [vmem:[%s3 + $0xd0] sm:$0xf] %vm4274, %v4198
  %4328 = vst.msk [vmem:[%s3 + $0xd4] sm:$0xf] %vm4274, %v4199
  %4329 = vst.msk [vmem:[%s3 + $0xd8] sm:$0xf] %vm4274, %v4200
  %4330 = vst.msk [vmem:[%s3 + $0xdc] sm:$0xf] %vm4274, %v4201
  %4331 = vst.msk [vmem:[%s3 + $0xe0] sm:$0xf] %vm4274, %v4202
  %4332 = vst.msk [vmem:[%s3 + $0xe4] sm:$0xf] %vm4274, %v4203
  %4333 = vst.msk [vmem:[%s3 + $0xe8] sm:$0xf] %vm4274, %v4204
  %4334 = vst.msk [vmem:[%s3 + $0xec] sm:$0xf] %vm4274, %v4205
  %4335 = vst.msk [vmem:[%s3 + $0xf0] sm:$0xf] %vm4274, %v4206
  %4336 = vst.msk [vmem:[%s3 + $0xf4] sm:$0xf] %vm4274, %v4207
  %4337 = vst.msk [vmem:[%s3 + $0xf8] sm:$0xf] %vm4274, %v4208
  %4338 = vst.msk [vmem:[%s3 + $0xfc] sm:$0xf] %vm4274, %v4209
  // Predicated region
  $region14: #{tpu_custom_call.1} parent=0 // pred_check
    _
  $region15: #{tpu_custom_call.1} parent=0 // pred_check_branch
    %4340 = sbr.rel (0) target = $region17
  $region16: #{tpu_custom_call.1} parent=0 // pred_region
    _
  $region17: #{tpu_custom_call.1} parent=0 // pred_fallthru
    _
  // Predicated region
  $region18: #{tpu_custom_call.1} parent=0 // pred_check
    _
  $region19: #{tpu_custom_call.1} parent=0 // pred_check_branch
    %4342 = sbr.rel (0) target = $region21
  $region20: #{tpu_custom_call.1} parent=0 // pred_region
    _
  $region21: #{tpu_custom_call.1} parent=0 // pred_fallthru
    _

</llo_original>
